<compile_context>
chip_gen: v6e
topology: v6e:2x2x1
jax: 0.10.0
libtpu: 0.0.40
codegen_flags: <defaults>
</compile_context>

<pallas_src>
import jax
import jax.numpy as jnp
from jax import lax
from jax.experimental import pallas as pl
from jax.experimental.pallas import tpu as pltpu


# ------------------------------ small helpers ------------------------------ #

_LSTM_VMEM_LIMIT = 48 * 1024 * 1024     # < v7x 64 MiB physical; raises v5e's 16 MiB default
_LINEAR_VMEM_LIMIT = 48 * 1024 * 1024


def _round_up(x, m):
    return (x + m - 1) // m * m


def _pad_axis(x, axis, new_size):
    pad = new_size - x.shape[axis]
    if pad == 0:
        return x
    widths = [(0, 0)] * x.ndim
    widths[axis] = (0, pad)
    return jnp.pad(x, widths)


def _pad_gate_blocks(w_t, h, hp):
    """(..., 4h) -> (..., 4hp): zero-pad each of the i/f/g/o gate blocks to hp lanes."""
    if h == hp:
        return w_t
    lead = w_t.shape[:-1]
    w4 = w_t.reshape(lead + (4, h))
    w4 = _pad_axis(w4, w4.ndim - 1, hp)
    return w4.reshape(lead + (4 * hp,))


def _pick_tile(dim, candidates):
    for c in candidates:
        if dim % c == 0:
            return c
    return dim   # never triggers: rows are multiples of 16, vocab padded to 128


def _pick_seq_chunk(s, bp, hp, budget_bytes=8 << 20):
    """Largest divisor of s whose double-buffered chunk buffers fit the budget."""
    per_step = 2 * (bp * 4 * hp * 4) + 2 * (bp * hp * 2)   # xproj f32 + out bf16, x2 buffers
    max_chunk = max(1, budget_bytes // per_step)
    best = 1
    for d in range(1, s + 1):
        if s % d == 0 and d <= max_chunk:
            best = d
    return best


# ------------------------------ Pallas kernels ------------------------------ #

def _lstm2_kernel(xp_ref,      # (chunk*Bp, 4Hp) f32   fused x@W_ih0 + b0 gate pre-activations
                  w_hh0_ref,   # (Hp, 4Hp)       cdt   (resident)
                  w_ih1_ref,   # (Hp, 4Hp)       cdt   (resident)
                  w_hh1_ref,   # (Hp, 4Hp)       cdt   (resident)
                  b1_ref,      # (1, 4Hp)        f32   (b_ih1 + b_hh1)
                  h0_ref,      # (2, Bp, Hp)     f32   initial state (resident)
                  c0_ref,      # (2, Bp, Hp)     f32
                  out_ref,     # (chunk*Bp, Hp)  cdt
                  hn_ref,      # (2, Bp, Hp)     f32
                  cn_ref,      # (2, Bp, Hp)     f32
                  h_sc,        # scratch (2, Bp, Hp) f32 -- carried across grid steps
                  c_sc):       # scratch (2, Bp, Hp) f32
    bp = h0_ref.shape[1]
    hp = h0_ref.shape[2]
    chunk = xp_ref.shape[0] // bp
    cdt = out_ref.dtype

    @pl.when(pl.program_id(0) == 0)
    def _():
        h_sc[...] = h0_ref[...]
        c_sc[...] = c0_ref[...]

    # Weights / bias hoisted out of the time loop.
    w_hh0 = w_hh0_ref[...]
    w_ih1 = w_ih1_ref[...]
    w_hh1 = w_hh1_ref[...]
    b1 = jnp.broadcast_to(b1_ref[...], (bp, 4 * hp))

    def act(gates, c):
        # gate layout [i | f | g | o], each hp lanes wide; i|f sigmoid in one slab
        sig_if = jax.nn.sigmoid(gates[:, : 2 * hp])
        i = sig_if[:, :hp]
        f = sig_if[:, hp:]
        g = jnp.tanh(gates[:, 2 * hp: 3 * hp])
        o = jax.nn.sigmoid(gates[:, 3 * hp:])
        c_new = f * c + i * g
        return o * jnp.tanh(c_new), c_new

    def step(t, carry):
        h0, c0, h1, c1 = carry
        r = pl.multiple_of(t * bp, bp)
        # layer 0: streamed fused input projection + single recurrent matmul
        g0 = xp_ref[pl.ds(r, bp), :] + jnp.dot(
            h0.astype(cdt), w_hh0, preferred_element_type=jnp.float32)
        h0, c0 = act(g0, c0)
        # layer 1: two matmuls summed (no per-step concatenate)
        h0c = h0.astype(cdt)
        g1 = (jnp.dot(h0c, w_ih1, preferred_element_type=jnp.float32)
              + jnp.dot(h1.astype(cdt), w_hh1, preferred_element_type=jnp.float32)
              + b1)
        h1, c1 = act(g1, c1)
        out_ref[pl.ds(r, bp), :] = h1.astype(cdt)   # full-sublane bf16 store (Bp % 16 == 0)
        return h0, c0, h1, c1

    carry0 = (h_sc[0], c_sc[0], h_sc[1], c_sc[1])
    unroll = chunk if chunk <= 8 else 8
    h0, c0, h1, c1 = lax.fori_loop(0, chunk, step, carry0, unroll=unroll)

    # carry state to the next sequence chunk
    h_sc[0] = h0
    h_sc[1] = h1
    c_sc[0] = c0
    c_sc[1] = c1

    @pl.when(pl.program_id(0) == pl.num_programs(0) - 1)
    def _():
        hn_ref[0] = h0
        hn_ref[1] = h1
        cn_ref[0] = c0
        cn_ref[1] = c1


def _linear_kernel(x_ref,   # (TM, Hp)
                   w_ref,   # (Hp, TV)
                   b_ref,   # (1, TV)
                   o_ref):  # (TM, TV)
    o_ref[...] = (jnp.dot(x_ref[...], w_ref[...],
                          preferred_element_type=jnp.float32)
                  + b_ref[...]).astype(o_ref.dtype)


def _tiled_linear(x, w, b, out_dtype=jnp.float32):
    """Tiled (N,K)@(K,Vp)+b with a ("parallel","parallel") grid, lane-dense output."""
    n, k = x.shape
    _, v = w.shape                       # v is already padded to a multiple of 128
    tm = _pick_tile(n, (512, 256, 128, 64, 32, 16, 8))
    tv = _pick_tile(v, (512, 256, 128))
    grid = (n // tm, v // tv)
    cost = pl.CostEstimate(
        flops=2 * n * k * v,
        transcendentals=0,
        bytes_accessed=(n * k * x.dtype.itemsize + k * v * w.dtype.itemsize
                        + v * 4 + n * v * 4),
    )
    return pl.pallas_call(
        _linear_kernel,
        out_shape=jax.ShapeDtypeStruct((n, v), out_dtype),
        grid=grid,
        in_specs=[
            pl.BlockSpec((tm, k), lambda i, j: (i, 0)),
            pl.BlockSpec((k, tv), lambda i, j: (0, j)),
            pl.BlockSpec((1, tv), lambda i, j: (0, j)),
        ],
        out_specs=pl.BlockSpec((tm, tv), lambda i, j: (i, j)),
        compiler_params=pltpu.CompilerParams(
            dimension_semantics=("parallel", "parallel"),
            vmem_limit_bytes=_LINEAR_VMEM_LIMIT),
        cost_estimate=cost,
    )(x, w, b)


# --------------------------------- Wrapper ---------------------------------- #

class PoetryModelPallas:
    """Pallas/TPU re-implementation of PoetryModel.forward."""

    def __init__(self, vocab_size, embedding_dim, hidden_dim, num_layers, key,
                 compute_dtype=jnp.bfloat16):
        assert num_layers == 2, "PoetryModel.forward hard-codes 2 LSTM layers"
        self.vocab_size = vocab_size
        self.embedding_dim = embedding_dim
        self.hidden_dim = hidden_dim
        self.num_layers = num_layers
        self.compute_dtype = compute_dtype
        self.hidden_pad = _round_up(hidden_dim, 128)   # lane-aligned gate blocks
        self.vocab_pad = _round_up(vocab_size, 128)    # lane-dense logits stores

        keys = jax.random.split(key, 11)
        scale = 1.0 / jnp.sqrt(hidden_dim)

        def unif(rk, shape):
            return jax.random.uniform(rk, shape, jnp.float32, -scale, scale)

        h, hp, e = hidden_dim, self.hidden_pad, embedding_dim
        v, vp = vocab_size, self.vocab_pad

        # Embedding table (PyTorch nn.Embedding init: N(0,1)); f32.
        self.embedding = jax.random.normal(keys[0], (v, e), jnp.float32)

        # LSTM layer 0 -- fused with the embedding into a per-token gate table:
        #   xproj_table[tok] = embedding[tok] @ W_ih0^T + (b_ih0 + b_hh0), gate-padded.
        w_ih0 = unif(keys[1], (4 * h, e))
        w_hh0 = unif(keys[2], (4 * h, h))
        b_ih0 = unif(keys[3], (4 * h,))
        b_hh0 = unif(keys[4], (4 * h,))
        w_ih0_t = _pad_gate_blocks(w_ih0.T, h, hp)                         # (E, 4Hp) f32
        b0 = _pad_gate_blocks((b_ih0 + b_hh0)[None, :], h, hp)             # (1, 4Hp) f32
        self.xproj_table = self.embedding @ w_ih0_t + b0                   # (V, 4Hp) f32
        self.w_hh0_t = _pad_axis(_pad_gate_blocks(w_hh0.T, h, hp), 0, hp
                                 ).astype(compute_dtype)                   # (Hp, 4Hp)

        # LSTM layer 1 -- two separate (Hp,4Hp) weights (no per-step concat needed).
        w_ih1 = unif(keys[5], (4 * h, h))
        w_hh1 = unif(keys[6], (4 * h, h))
        b_ih1 = unif(keys[7], (4 * h,))
        b_hh1 = unif(keys[8], (4 * h,))
        self.w_ih1_t = _pad_axis(_pad_gate_blocks(w_ih1.T, h, hp), 0, hp
                                 ).astype(compute_dtype)                   # (Hp, 4Hp)
        self.w_hh1_t = _pad_axis(_pad_gate_blocks(w_hh1.T, h, hp), 0, hp
                                 ).astype(compute_dtype)                   # (Hp, 4Hp)
        self.b1 = _pad_gate_blocks((b_ih1 + b_hh1)[None, :], h, hp)        # (1, 4Hp) f32

        # Output linear -- pre-transposed, row-padded to Hp, column-padded to Vp.
        w_lin = unif(keys[9], (v, h))
        b_lin = unif(keys[10], (v,))
        self.w_lin_t = _pad_axis(_pad_axis(w_lin.T, 0, hp), 1, vp
                                 ).astype(compute_dtype)                   # (Hp, Vp)
        self.b_lin = _pad_axis(b_lin[None, :], 1, vp)                      # (1, Vp) f32

    def __call__(self, input_ids, hidden=None):
        """input_ids: (seq_len, batch) int32. Returns (logits, (h_n, c_n))."""
        s, b = input_ids.shape
        h, hp = self.hidden_dim, self.hidden_pad
        v, vp = self.vocab_size, self.vocab_pad
        bp = _round_up(b, 16)                 # 16 sublanes/vreg for bf16 output stores
        cdt = self.compute_dtype

        if hidden is None:
            h0p = jnp.zeros((2, bp, hp), jnp.float32)
            c0p = jnp.zeros((2, bp, hp), jnp.float32)
        else:
            h_0, c_0 = hidden                 # (2, B, H)
            h0p = _pad_axis(_pad_axis(h_0.astype(jnp.float32), 1, bp), 2, hp)
            c0p = _pad_axis(_pad_axis(c_0.astype(jnp.float32), 1, bp), 2, hp)

        # TODO(synk): fused-table gather stays in plain JAX glue; an in-kernel gather
        # would need scalar-prefetched ids + serial row DMAs.
        xproj = jnp.take(self.xproj_table, input_ids, axis=0)       # (S, B, 4Hp) f32
        xproj = _pad_axis(xproj, 1, bp).reshape(s * bp, 4 * hp)     # (S*Bp, 4Hp)

        chunk = _pick_seq_chunk(s, bp, hp)
        n_chunks = s // chunk

        # TODO(synk): on v7x (2 TCs) a leading "parallel" grid axis over batch halves
        # would shard the recurrence across cores; skipped for this tiny batch.
        lstm_out, h_n, c_n = pl.pallas_call(
            _lstm2_kernel,
            out_shape=(
                jax.ShapeDtypeStruct((s * bp, hp), cdt),
                jax.ShapeDtypeStruct((2, bp, hp), jnp.float32),
                jax.ShapeDtypeStruct((2, bp, hp), jnp.float32),
            ),
            grid=(n_chunks,),
            in_specs=[
                pl.BlockSpec((chunk * bp, 4 * hp), lambda i: (i, 0)),   # streamed xproj
                pl.BlockSpec((hp, 4 * hp), lambda i: (0, 0)),           # w_hh0 (resident)
                pl.BlockSpec((hp, 4 * hp), lambda i: (0, 0)),           # w_ih1 (resident)
                pl.BlockSpec((hp, 4 * hp), lambda i: (0, 0)),           # w_hh1 (resident)
                pl.BlockSpec((1, 4 * hp), lambda i: (0, 0)),            # b1
                pl.BlockSpec((2, bp, hp), lambda i: (0, 0, 0)),         # h0
                pl.BlockSpec((2, bp, hp), lambda i: (0, 0, 0)),         # c0
            ],
            out_specs=(
                pl.BlockSpec((chunk * bp, hp), lambda i: (i, 0)),       # streamed output
                pl.BlockSpec((2, bp, hp), lambda i: (0, 0, 0)),         # h_n
                pl.BlockSpec((2, bp, hp), lambda i: (0, 0, 0)),         # c_n
            ),
            scratch_shapes=[
                pltpu.VMEM((2, bp, hp), jnp.float32),                   # h carry
                pltpu.VMEM((2, bp, hp), jnp.float32),                   # c carry
            ],
            compiler_params=pltpu.CompilerParams(
                dimension_semantics=("arbitrary",),
                vmem_limit_bytes=_LSTM_VMEM_LIMIT),
        )(xproj, self.w_hh0_t, self.w_ih1_t, self.w_hh1_t, self.b1, h0p, c0p)

        # output.view(-1, hidden_dim) @ linear -- tiled, parallel grid, lane-dense Vp.
        logits_p = _tiled_linear(lstm_out, self.w_lin_t, self.b_lin)    # (S*Bp, Vp)

        # Strip batch / hidden / vocab padding (glue).
        logits = logits_p.reshape(s, bp, vp)[:, :b, :v].reshape(s * b, v)
        h_n = h_n[:, :b, :h]
        c_n = c_n[:, :b, :h]
        return logits, (h_n, c_n)


# ----------------------------------- Main ------------------------------------ #

if __name__ == "__main__":
    vocab_size = 32
    embedding_dim = 16
    hidden_dim = 32
    num_layers = 2
    seq_len = 8
    batch_size = 2

    key = jax.random.PRNGKey(0)
    k_param, k_input = jax.random.split(key)

    model = PoetryModelPallas(vocab_size, embedding_dim, hidden_dim,
                              num_layers, k_param)

    input_ids = jax.random.randint(k_input, (seq_len, batch_size), 0,
                                   vocab_size, dtype=jnp.int32)

    logits, (h_n, c_n) = model(input_ids)
    jax.block_until_ready((logits, h_n, c_n))

    assert logits.shape == (seq_len * batch_size, vocab_size)
    assert h_n.shape == (2, batch_size, hidden_dim)
    assert c_n.shape == (2, batch_size, hidden_dim)
    assert bool(jnp.all(jnp.isfinite(logits)))
    assert bool(jnp.all(jnp.isfinite(h_n))) and bool(jnp.all(jnp.isfinite(c_n)))

    print("KERNEL_OK")
</pallas_src>

<mosaic_0001>
module attributes {stable_mosaic.version = 11 : i64} {
  func.func @_lstm2_kernel(%arg0: i32, %arg1: memref<128x512xf32, #tpu.memory_space<vmem>>, %arg2: memref<128x512xbf16, #tpu.memory_space<vmem>>, %arg3: memref<128x512xbf16, #tpu.memory_space<vmem>>, %arg4: memref<128x512xbf16, #tpu.memory_space<vmem>>, %arg5: memref<1x512xf32, #tpu.memory_space<vmem>>, %arg6: memref<2x16x128xf32, #tpu.memory_space<vmem>>, %arg7: memref<2x16x128xf32, #tpu.memory_space<vmem>>, %arg8: memref<128x128xbf16, #tpu.memory_space<vmem>>, %arg9: memref<2x16x128xf32, #tpu.memory_space<vmem>>, %arg10: memref<2x16x128xf32, #tpu.memory_space<vmem>>, %arg11: memref<2x16x128xf32, #tpu.memory_space<vmem>>, %arg12: memref<2x16x128xf32, #tpu.memory_space<vmem>>) attributes {dimension_semantics = [#tpu.dimension_semantics<arbitrary>], iteration_bounds = array<i64: 1>, scalar_prefetch = 0 : i64, scratch_operands = 2 : i64, tpu.core_type = #tpu.core_type<tc>, window_params = [{transform_indices = @transform_0, window_bounds = array<i64: 128, 512>}, {pipeline_mode = #tpu.pipeline_mode<synchronous>, transform_indices = @transform_1, window_bounds = array<i64: 128, 512>}, {pipeline_mode = #tpu.pipeline_mode<synchronous>, transform_indices = @transform_2, window_bounds = array<i64: 128, 512>}, {pipeline_mode = #tpu.pipeline_mode<synchronous>, transform_indices = @transform_3, window_bounds = array<i64: 128, 512>}, {pipeline_mode = #tpu.pipeline_mode<synchronous>, transform_indices = @transform_4, window_bounds = array<i64: 1, 512>}, {pipeline_mode = #tpu.pipeline_mode<synchronous>, transform_indices = @transform_5, window_bounds = array<i64: 2, 16, 128>}, {pipeline_mode = #tpu.pipeline_mode<synchronous>, transform_indices = @transform_6, window_bounds = array<i64: 2, 16, 128>}, {transform_indices = @transform_7, window_bounds = array<i64: 128, 128>}, {pipeline_mode = #tpu.pipeline_mode<synchronous>, transform_indices = @transform_8, window_bounds = array<i64: 2, 16, 128>}, {pipeline_mode = #tpu.pipeline_mode<synchronous>, transform_indices = @transform_9, window_bounds = array<i64: 2, 16, 128>}]} {
    %c0_i32 = arith.constant 0 : i32
    %0 = arith.cmpi eq, %arg0, %c0_i32 : i32
    %1 = arith.extui %0 : i1 to i32
    %c0_i32_0 = arith.constant 0 : i32
    %2 = arith.cmpi ne, %1, %c0_i32_0 : i32
    scf.if %2 {
      %c0_112 = arith.constant 0 : index
      %c0_113 = arith.constant 0 : index
      %c0_114 = arith.constant 0 : index
      %496 = vector.load %arg6[%c0_112, %c0_113, %c0_114] : memref<2x16x128xf32, #tpu.memory_space<vmem>>, vector<2x16x128xf32>
      %c0_115 = arith.constant 0 : index
      %c0_116 = arith.constant 0 : index
      %c0_117 = arith.constant 0 : index
      %497 = vector.load %arg11[%c0_115, %c0_116, %c0_117] : memref<2x16x128xf32, #tpu.memory_space<vmem>>, vector<2x16x128xf32>
      tpu.vector_store %arg11[%c0_115, %c0_116, %c0_117], %496 {strides = array<i32>} : memref<2x16x128xf32, #tpu.memory_space<vmem>>, vector<2x16x128xf32>,
      %c0_118 = arith.constant 0 : index
      %c0_119 = arith.constant 0 : index
      %c0_120 = arith.constant 0 : index
      %498 = vector.load %arg7[%c0_118, %c0_119, %c0_120] : memref<2x16x128xf32, #tpu.memory_space<vmem>>, vector<2x16x128xf32>
      %c0_121 = arith.constant 0 : index
      %c0_122 = arith.constant 0 : index
      %c0_123 = arith.constant 0 : index
      %499 = vector.load %arg12[%c0_121, %c0_122, %c0_123] : memref<2x16x128xf32, #tpu.memory_space<vmem>>, vector<2x16x128xf32>
      tpu.vector_store %arg12[%c0_121, %c0_122, %c0_123], %498 {strides = array<i32>} : memref<2x16x128xf32, #tpu.memory_space<vmem>>, vector<2x16x128xf32>,
    } else {
    }
    %c0 = arith.constant 0 : index
    %c0_1 = arith.constant 0 : index
    %3 = vector.load %arg2[%c0, %c0_1] : memref<128x512xbf16, #tpu.memory_space<vmem>>, vector<128x512xbf16>
    %c0_2 = arith.constant 0 : index
    %c0_3 = arith.constant 0 : index
    %4 = vector.load %arg3[%c0_2, %c0_3] : memref<128x512xbf16, #tpu.memory_space<vmem>>, vector<128x512xbf16>
    %c0_4 = arith.constant 0 : index
    %c0_5 = arith.constant 0 : index
    %5 = vector.load %arg4[%c0_4, %c0_5] : memref<128x512xbf16, #tpu.memory_space<vmem>>, vector<128x512xbf16>
    %c0_6 = arith.constant 0 : index
    %c0_7 = arith.constant 0 : index
    %6 = vector.load %arg5[%c0_6, %c0_7] : memref<1x512xf32, #tpu.memory_space<vmem>>, vector<1x512xf32>
    %7 = vector.shape_cast %6 : vector<1x512xf32> to vector<1x512xf32>
    %8 = vector.broadcast %7 : vector<1x512xf32> to vector<16x512xf32>
    %c0_8 = arith.constant 0 : index
    %c0_9 = arith.constant 0 : index
    %c0_10 = arith.constant 0 : index
    %9 = vector.load %arg11[%c0_8, %c0_9, %c0_10] : memref<2x16x128xf32, #tpu.memory_space<vmem>>, vector<1x16x128xf32>
    %10 = vector.shape_cast %9 : vector<1x16x128xf32> to vector<16x128xf32>
    %c0_11 = arith.constant 0 : index
    %c0_12 = arith.constant 0 : index
    %c0_13 = arith.constant 0 : index
    %11 = vector.load %arg12[%c0_11, %c0_12, %c0_13] : memref<2x16x128xf32, #tpu.memory_space<vmem>>, vector<1x16x128xf32>
    %12 = vector.shape_cast %11 : vector<1x16x128xf32> to vector<16x128xf32>
    %c1 = arith.constant 1 : index
    %c0_14 = arith.constant 0 : index
    %c0_15 = arith.constant 0 : index
    %13 = vector.load %arg11[%c1, %c0_14, %c0_15] : memref<2x16x128xf32, #tpu.memory_space<vmem>>, vector<1x16x128xf32>
    %14 = vector.shape_cast %13 : vector<1x16x128xf32> to vector<16x128xf32>
    %c1_16 = arith.constant 1 : index
    %c0_17 = arith.constant 0 : index
    %c0_18 = arith.constant 0 : index
    %15 = vector.load %arg12[%c1_16, %c0_17, %c0_18] : memref<2x16x128xf32, #tpu.memory_space<vmem>>, vector<1x16x128xf32>
    %16 = vector.shape_cast %15 : vector<1x16x128xf32> to vector<16x128xf32>
    %c0_i32_19 = arith.constant 0 : i32
    %c16_i32 = arith.constant 16 : i32
    %17 = arith.muli %c0_i32_19, %c16_i32 : i32
    %18 = tpu.assume_multiple %17, 16 : i32
    %19 = arith.index_cast %18 : i32 to index
    %c0_20 = arith.constant 0 : index
    %20 = vector.load %arg1[%19, %c0_20] : memref<128x512xf32, #tpu.memory_space<vmem>>, vector<16x512xf32>
    %21 = arith.truncf %10 : vector<16x128xf32> to vector<16x128xbf16>
    %cst = arith.constant dense<0.000000e+00> : vector<16x512xf32>
    %22 = tpu.matmul %21, %3, %cst {dimension_numbers = #tpu.dot_dimension_numbers<[1], [0], [0], [1], [0, 0, 1, 1], [], []>} : vector<16x128xbf16>, vector<128x512xbf16>, vector<16x512xf32> -> vector<16x512xf32>
    %23 = arith.addf %20, %22 : vector<16x512xf32>
    %24 = vector.extract_strided_slice %23 {offsets = [0, 0], sizes = [16, 256], strides = [1, 1]} : vector<16x512xf32> to vector<16x256xf32>
    %25 = arith.negf %24 : vector<16x256xf32>
    %26 = math.exp %25 : vector<16x256xf32>
    %cst_21 = arith.constant 1.000000e+00 : f32
    %27 = vector.broadcast %cst_21 : f32 to vector<16x256xf32>
    %28 = arith.addf %27, %26 : vector<16x256xf32>
    %29 = arith.divf %27, %28 : vector<16x256xf32>
    %30 = vector.extract_strided_slice %29 {offsets = [0, 0], sizes = [16, 128], strides = [1, 1]} : vector<16x256xf32> to vector<16x128xf32>
    %31 = vector.extract_strided_slice %29 {offsets = [0, 128], sizes = [16, 128], strides = [1, 1]} : vector<16x256xf32> to vector<16x128xf32>
    %32 = vector.extract_strided_slice %23 {offsets = [0, 256], sizes = [16, 128], strides = [1, 1]} : vector<16x512xf32> to vector<16x128xf32>
    %33 = math.tanh %32 : vector<16x128xf32>
    %34 = vector.extract_strided_slice %23 {offsets = [0, 384], sizes = [16, 128], strides = [1, 1]} : vector<16x512xf32> to vector<16x128xf32>
    %35 = arith.negf %34 : vector<16x128xf32>
    %36 = math.exp %35 : vector<16x128xf32>
    %cst_22 = arith.constant 1.000000e+00 : f32
    %37 = vector.broadcast %cst_22 : f32 to vector<16x128xf32>
    %38 = arith.addf %37, %36 : vector<16x128xf32>
    %39 = arith.divf %37, %38 : vector<16x128xf32>
    %40 = arith.mulf %31, %12 : vector<16x128xf32>
    %41 = arith.mulf %30, %33 : vector<16x128xf32>
    %42 = arith.addf %40, %41 : vector<16x128xf32>
    %43 = math.tanh %42 : vector<16x128xf32>
    %44 = arith.mulf %39, %43 : vector<16x128xf32>
    %45 = arith.truncf %44 : vector<16x128xf32> to vector<16x128xbf16>
    %cst_23 = arith.constant dense<0.000000e+00> : vector<16x512xf32>
    %46 = tpu.matmul %45, %4, %cst_23 {dimension_numbers = #tpu.dot_dimension_numbers<[1], [0], [0], [1], [0, 0, 1, 1], [], []>} : vector<16x128xbf16>, vector<128x512xbf16>, vector<16x512xf32> -> vector<16x512xf32>
    %47 = arith.truncf %14 : vector<16x128xf32> to vector<16x128xbf16>
    %cst_24 = arith.constant dense<0.000000e+00> : vector<16x512xf32>
    %48 = tpu.matmul %47, %5, %cst_24 {dimension_numbers = #tpu.dot_dimension_numbers<[1], [0], [0], [1], [0, 0, 1, 1], [], []>} : vector<16x128xbf16>, vector<128x512xbf16>, vector<16x512xf32> -> vector<16x512xf32>
    %49 = arith.addf %46, %48 : vector<16x512xf32>
    %50 = arith.addf %49, %8 : vector<16x512xf32>
    %51 = vector.extract_strided_slice %50 {offsets = [0, 0], sizes = [16, 256], strides = [1, 1]} : vector<16x512xf32> to vector<16x256xf32>
    %52 = arith.negf %51 : vector<16x256xf32>
    %53 = math.exp %52 : vector<16x256xf32>
    %cst_25 = arith.constant 1.000000e+00 : f32
    %54 = vector.broadcast %cst_25 : f32 to vector<16x256xf32>
    %55 = arith.addf %54, %53 : vector<16x256xf32>
    %56 = arith.divf %54, %55 : vector<16x256xf32>
    %57 = vector.extract_strided_slice %56 {offsets = [0, 0], sizes = [16, 128], strides = [1, 1]} : vector<16x256xf32> to vector<16x128xf32>
    %58 = vector.extract_strided_slice %56 {offsets = [0, 128], sizes = [16, 128], strides = [1, 1]} : vector<16x256xf32> to vector<16x128xf32>
    %59 = vector.extract_strided_slice %50 {offsets = [0, 256], sizes = [16, 128], strides = [1, 1]} : vector<16x512xf32> to vector<16x128xf32>
    %60 = math.tanh %59 : vector<16x128xf32>
    %61 = vector.extract_strided_slice %50 {offsets = [0, 384], sizes = [16, 128], strides = [1, 1]} : vector<16x512xf32> to vector<16x128xf32>
    %62 = arith.negf %61 : vector<16x128xf32>
    %63 = math.exp %62 : vector<16x128xf32>
    %cst_26 = arith.constant 1.000000e+00 : f32
    %64 = vector.broadcast %cst_26 : f32 to vector<16x128xf32>
    %65 = arith.addf %64, %63 : vector<16x128xf32>
    %66 = arith.divf %64, %65 : vector<16x128xf32>
    %67 = arith.mulf %58, %16 : vector<16x128xf32>
    %68 = arith.mulf %57, %60 : vector<16x128xf32>
    %69 = arith.addf %67, %68 : vector<16x128xf32>
    %70 = math.tanh %69 : vector<16x128xf32>
    %71 = arith.mulf %66, %70 : vector<16x128xf32>
    %72 = arith.truncf %71 : vector<16x128xf32> to vector<16x128xbf16>
    %73 = arith.index_cast %18 : i32 to index
    %c0_27 = arith.constant 0 : index
    %74 = vector.load %arg8[%73, %c0_27] : memref<128x128xbf16, #tpu.memory_space<vmem>>, vector<16x128xbf16>
    tpu.vector_store %arg8[%73, %c0_27], %72 {strides = array<i32>} : memref<128x128xbf16, #tpu.memory_space<vmem>>, vector<16x128xbf16>,
    %c1_i32 = arith.constant 1 : i32
    %c16_i32_28 = arith.constant 16 : i32
    %75 = arith.muli %c1_i32, %c16_i32_28 : i32
    %76 = tpu.assume_multiple %75, 16 : i32
    %77 = arith.index_cast %76 : i32 to index
    %c0_29 = arith.constant 0 : index
    %78 = vector.load %arg1[%77, %c0_29] : memref<128x512xf32, #tpu.memory_space<vmem>>, vector<16x512xf32>
    %79 = arith.truncf %44 : vector<16x128xf32> to vector<16x128xbf16>
    %cst_30 = arith.constant dense<0.000000e+00> : vector<16x512xf32>
    %80 = tpu.matmul %79, %3, %cst_30 {dimension_numbers = #tpu.dot_dimension_numbers<[1], [0], [0], [1], [0, 0, 1, 1], [], []>} : vector<16x128xbf16>, vector<128x512xbf16>, vector<16x512xf32> -> vector<16x512xf32>
    %81 = arith.addf %78, %80 : vector<16x512xf32>
    %82 = vector.extract_strided_slice %81 {offsets = [0, 0], sizes = [16, 256], strides = [1, 1]} : vector<16x512xf32> to vector<16x256xf32>
    %83 = arith.negf %82 : vector<16x256xf32>
    %84 = math.exp %83 : vector<16x256xf32>
    %cst_31 = arith.constant 1.000000e+00 : f32
    %85 = vector.broadcast %cst_31 : f32 to vector<16x256xf32>
    %86 = arith.addf %85, %84 : vector<16x256xf32>
    %87 = arith.divf %85, %86 : vector<16x256xf32>
    %88 = vector.extract_strided_slice %87 {offsets = [0, 0], sizes = [16, 128], strides = [1, 1]} : vector<16x256xf32> to vector<16x128xf32>
    %89 = vector.extract_strided_slice %87 {offsets = [0, 128], sizes = [16, 128], strides = [1, 1]} : vector<16x256xf32> to vector<16x128xf32>
    %90 = vector.extract_strided_slice %81 {offsets = [0, 256], sizes = [16, 128], strides = [1, 1]} : vector<16x512xf32> to vector<16x128xf32>
    %91 = math.tanh %90 : vector<16x128xf32>
    %92 = vector.extract_strided_slice %81 {offsets = [0, 384], sizes = [16, 128], strides = [1, 1]} : vector<16x512xf32> to vector<16x128xf32>
    %93 = arith.negf %92 : vector<16x128xf32>
    %94 = math.exp %93 : vector<16x128xf32>
    %cst_32 = arith.constant 1.000000e+00 : f32
    %95 = vector.broadcast %cst_32 : f32 to vector<16x128xf32>
    %96 = arith.addf %95, %94 : vector<16x128xf32>
    %97 = arith.divf %95, %96 : vector<16x128xf32>
    %98 = arith.mulf %89, %42 : vector<16x128xf32>
    %99 = arith.mulf %88, %91 : vector<16x128xf32>
    %100 = arith.addf %98, %99 : vector<16x128xf32>
    %101 = math.tanh %100 : vector<16x128xf32>
    %102 = arith.mulf %97, %101 : vector<16x128xf32>
    %103 = arith.truncf %102 : vector<16x128xf32> to vector<16x128xbf16>
    %cst_33 = arith.constant dense<0.000000e+00> : vector<16x512xf32>
    %104 = tpu.matmul %103, %4, %cst_33 {dimension_numbers = #tpu.dot_dimension_numbers<[1], [0], [0], [1], [0, 0, 1, 1], [], []>} : vector<16x128xbf16>, vector<128x512xbf16>, vector<16x512xf32> -> vector<16x512xf32>
    %105 = arith.truncf %71 : vector<16x128xf32> to vector<16x128xbf16>
    %cst_34 = arith.constant dense<0.000000e+00> : vector<16x512xf32>
    %106 = tpu.matmul %105, %5, %cst_34 {dimension_numbers = #tpu.dot_dimension_numbers<[1], [0], [0], [1], [0, 0, 1, 1], [], []>} : vector<16x128xbf16>, vector<128x512xbf16>, vector<16x512xf32> -> vector<16x512xf32>
    %107 = arith.addf %104, %106 : vector<16x512xf32>
    %108 = arith.addf %107, %8 : vector<16x512xf32>
    %109 = vector.extract_strided_slice %108 {offsets = [0, 0], sizes = [16, 256], strides = [1, 1]} : vector<16x512xf32> to vector<16x256xf32>
    %110 = arith.negf %109 : vector<16x256xf32>
    %111 = math.exp %110 : vector<16x256xf32>
    %cst_35 = arith.constant 1.000000e+00 : f32
    %112 = vector.broadcast %cst_35 : f32 to vector<16x256xf32>
    %113 = arith.addf %112, %111 : vector<16x256xf32>
    %114 = arith.divf %112, %113 : vector<16x256xf32>
    %115 = vector.extract_strided_slice %114 {offsets = [0, 0], sizes = [16, 128], strides = [1, 1]} : vector<16x256xf32> to vector<16x128xf32>
    %116 = vector.extract_strided_slice %114 {offsets = [0, 128], sizes = [16, 128], strides = [1, 1]} : vector<16x256xf32> to vector<16x128xf32>
    %117 = vector.extract_strided_slice %108 {offsets = [0, 256], sizes = [16, 128], strides = [1, 1]} : vector<16x512xf32> to vector<16x128xf32>
    %118 = math.tanh %117 : vector<16x128xf32>
    %119 = vector.extract_strided_slice %108 {offsets = [0, 384], sizes = [16, 128], strides = [1, 1]} : vector<16x512xf32> to vector<16x128xf32>
    %120 = arith.negf %119 : vector<16x128xf32>
    %121 = math.exp %120 : vector<16x128xf32>
    %cst_36 = arith.constant 1.000000e+00 : f32
    %122 = vector.broadcast %cst_36 : f32 to vector<16x128xf32>
    %123 = arith.addf %122, %121 : vector<16x128xf32>
    %124 = arith.divf %122, %123 : vector<16x128xf32>
    %125 = arith.mulf %116, %69 : vector<16x128xf32>
    %126 = arith.mulf %115, %118 : vector<16x128xf32>
    %127 = arith.addf %125, %126 : vector<16x128xf32>
    %128 = math.tanh %127 : vector<16x128xf32>
    %129 = arith.mulf %124, %128 : vector<16x128xf32>
    %130 = arith.truncf %129 : vector<16x128xf32> to vector<16x128xbf16>
    %131 = arith.index_cast %76 : i32 to index
    %c0_37 = arith.constant 0 : index
    %132 = vector.load %arg8[%131, %c0_37] : memref<128x128xbf16, #tpu.memory_space<vmem>>, vector<16x128xbf16>
    tpu.vector_store %arg8[%131, %c0_37], %130 {strides = array<i32>} : memref<128x128xbf16, #tpu.memory_space<vmem>>, vector<16x128xbf16>,
    %c2_i32 = arith.constant 2 : i32
    %c16_i32_38 = arith.constant 16 : i32
    %133 = arith.muli %c2_i32, %c16_i32_38 : i32
    %134 = tpu.assume_multiple %133, 16 : i32
    %135 = arith.index_cast %134 : i32 to index
    %c0_39 = arith.constant 0 : index
    %136 = vector.load %arg1[%135, %c0_39] : memref<128x512xf32, #tpu.memory_space<vmem>>, vector<16x512xf32>
    %137 = arith.truncf %102 : vector<16x128xf32> to vector<16x128xbf16>
    %cst_40 = arith.constant dense<0.000000e+00> : vector<16x512xf32>
    %138 = tpu.matmul %137, %3, %cst_40 {dimension_numbers = #tpu.dot_dimension_numbers<[1], [0], [0], [1], [0, 0, 1, 1], [], []>} : vector<16x128xbf16>, vector<128x512xbf16>, vector<16x512xf32> -> vector<16x512xf32>
    %139 = arith.addf %136, %138 : vector<16x512xf32>
    %140 = vector.extract_strided_slice %139 {offsets = [0, 0], sizes = [16, 256], strides = [1, 1]} : vector<16x512xf32> to vector<16x256xf32>
    %141 = arith.negf %140 : vector<16x256xf32>
    %142 = math.exp %141 : vector<16x256xf32>
    %cst_41 = arith.constant 1.000000e+00 : f32
    %143 = vector.broadcast %cst_41 : f32 to vector<16x256xf32>
    %144 = arith.addf %143, %142 : vector<16x256xf32>
    %145 = arith.divf %143, %144 : vector<16x256xf32>
    %146 = vector.extract_strided_slice %145 {offsets = [0, 0], sizes = [16, 128], strides = [1, 1]} : vector<16x256xf32> to vector<16x128xf32>
    %147 = vector.extract_strided_slice %145 {offsets = [0, 128], sizes = [16, 128], strides = [1, 1]} : vector<16x256xf32> to vector<16x128xf32>
    %148 = vector.extract_strided_slice %139 {offsets = [0, 256], sizes = [16, 128], strides = [1, 1]} : vector<16x512xf32> to vector<16x128xf32>
    %149 = math.tanh %148 : vector<16x128xf32>
    %150 = vector.extract_strided_slice %139 {offsets = [0, 384], sizes = [16, 128], strides = [1, 1]} : vector<16x512xf32> to vector<16x128xf32>
    %151 = arith.negf %150 : vector<16x128xf32>
    %152 = math.exp %151 : vector<16x128xf32>
    %cst_42 = arith.constant 1.000000e+00 : f32
    %153 = vector.broadcast %cst_42 : f32 to vector<16x128xf32>
    %154 = arith.addf %153, %152 : vector<16x128xf32>
    %155 = arith.divf %153, %154 : vector<16x128xf32>
    %156 = arith.mulf %147, %100 : vector<16x128xf32>
    %157 = arith.mulf %146, %149 : vector<16x128xf32>
    %158 = arith.addf %156, %157 : vector<16x128xf32>
    %159 = math.tanh %158 : vector<16x128xf32>
    %160 = arith.mulf %155, %159 : vector<16x128xf32>
    %161 = arith.truncf %160 : vector<16x128xf32> to vector<16x128xbf16>
    %cst_43 = arith.constant dense<0.000000e+00> : vector<16x512xf32>
    %162 = tpu.matmul %161, %4, %cst_43 {dimension_numbers = #tpu.dot_dimension_numbers<[1], [0], [0], [1], [0, 0, 1, 1], [], []>} : vector<16x128xbf16>, vector<128x512xbf16>, vector<16x512xf32> -> vector<16x512xf32>
    %163 = arith.truncf %129 : vector<16x128xf32> to vector<16x128xbf16>
    %cst_44 = arith.constant dense<0.000000e+00> : vector<16x512xf32>
    %164 = tpu.matmul %163, %5, %cst_44 {dimension_numbers = #tpu.dot_dimension_numbers<[1], [0], [0], [1], [0, 0, 1, 1], [], []>} : vector<16x128xbf16>, vector<128x512xbf16>, vector<16x512xf32> -> vector<16x512xf32>
    %165 = arith.addf %162, %164 : vector<16x512xf32>
    %166 = arith.addf %165, %8 : vector<16x512xf32>
    %167 = vector.extract_strided_slice %166 {offsets = [0, 0], sizes = [16, 256], strides = [1, 1]} : vector<16x512xf32> to vector<16x256xf32>
    %168 = arith.negf %167 : vector<16x256xf32>
    %169 = math.exp %168 : vector<16x256xf32>
    %cst_45 = arith.constant 1.000000e+00 : f32
    %170 = vector.broadcast %cst_45 : f32 to vector<16x256xf32>
    %171 = arith.addf %170, %169 : vector<16x256xf32>
    %172 = arith.divf %170, %171 : vector<16x256xf32>
    %173 = vector.extract_strided_slice %172 {offsets = [0, 0], sizes = [16, 128], strides = [1, 1]} : vector<16x256xf32> to vector<16x128xf32>
    %174 = vector.extract_strided_slice %172 {offsets = [0, 128], sizes = [16, 128], strides = [1, 1]} : vector<16x256xf32> to vector<16x128xf32>
    %175 = vector.extract_strided_slice %166 {offsets = [0, 256], sizes = [16, 128], strides = [1, 1]} : vector<16x512xf32> to vector<16x128xf32>
    %176 = math.tanh %175 : vector<16x128xf32>
    %177 = vector.extract_strided_slice %166 {offsets = [0, 384], sizes = [16, 128], strides = [1, 1]} : vector<16x512xf32> to vector<16x128xf32>
    %178 = arith.negf %177 : vector<16x128xf32>
    %179 = math.exp %178 : vector<16x128xf32>
    %cst_46 = arith.constant 1.000000e+00 : f32
    %180 = vector.broadcast %cst_46 : f32 to vector<16x128xf32>
    %181 = arith.addf %180, %179 : vector<16x128xf32>
    %182 = arith.divf %180, %181 : vector<16x128xf32>
    %183 = arith.mulf %174, %127 : vector<16x128xf32>
    %184 = arith.mulf %173, %176 : vector<16x128xf32>
    %185 = arith.addf %183, %184 : vector<16x128xf32>
    %186 = math.tanh %185 : vector<16x128xf32>
    %187 = arith.mulf %182, %186 : vector<16x128xf32>
    %188 = arith.truncf %187 : vector<16x128xf32> to vector<16x128xbf16>
    %189 = arith.index_cast %134 : i32 to index
    %c0_47 = arith.constant 0 : index
    %190 = vector.load %arg8[%189, %c0_47] : memref<128x128xbf16, #tpu.memory_space<vmem>>, vector<16x128xbf16>
    tpu.vector_store %arg8[%189, %c0_47], %188 {strides = array<i32>} : memref<128x128xbf16, #tpu.memory_space<vmem>>, vector<16x128xbf16>,
    %c3_i32 = arith.constant 3 : i32
    %c16_i32_48 = arith.constant 16 : i32
    %191 = arith.muli %c3_i32, %c16_i32_48 : i32
    %192 = tpu.assume_multiple %191, 16 : i32
    %193 = arith.index_cast %192 : i32 to index
    %c0_49 = arith.constant 0 : index
    %194 = vector.load %arg1[%193, %c0_49] : memref<128x512xf32, #tpu.memory_space<vmem>>, vector<16x512xf32>
    %195 = arith.truncf %160 : vector<16x128xf32> to vector<16x128xbf16>
    %cst_50 = arith.constant dense<0.000000e+00> : vector<16x512xf32>
    %196 = tpu.matmul %195, %3, %cst_50 {dimension_numbers = #tpu.dot_dimension_numbers<[1], [0], [0], [1], [0, 0, 1, 1], [], []>} : vector<16x128xbf16>, vector<128x512xbf16>, vector<16x512xf32> -> vector<16x512xf32>
    %197 = arith.addf %194, %196 : vector<16x512xf32>
    %198 = vector.extract_strided_slice %197 {offsets = [0, 0], sizes = [16, 256], strides = [1, 1]} : vector<16x512xf32> to vector<16x256xf32>
    %199 = arith.negf %198 : vector<16x256xf32>
    %200 = math.exp %199 : vector<16x256xf32>
    %cst_51 = arith.constant 1.000000e+00 : f32
    %201 = vector.broadcast %cst_51 : f32 to vector<16x256xf32>
    %202 = arith.addf %201, %200 : vector<16x256xf32>
    %203 = arith.divf %201, %202 : vector<16x256xf32>
    %204 = vector.extract_strided_slice %203 {offsets = [0, 0], sizes = [16, 128], strides = [1, 1]} : vector<16x256xf32> to vector<16x128xf32>
    %205 = vector.extract_strided_slice %203 {offsets = [0, 128], sizes = [16, 128], strides = [1, 1]} : vector<16x256xf32> to vector<16x128xf32>
    %206 = vector.extract_strided_slice %197 {offsets = [0, 256], sizes = [16, 128], strides = [1, 1]} : vector<16x512xf32> to vector<16x128xf32>
    %207 = math.tanh %206 : vector<16x128xf32>
    %208 = vector.extract_strided_slice %197 {offsets = [0, 384], sizes = [16, 128], strides = [1, 1]} : vector<16x512xf32> to vector<16x128xf32>
    %209 = arith.negf %208 : vector<16x128xf32>
    %210 = math.exp %209 : vector<16x128xf32>
    %cst_52 = arith.constant 1.000000e+00 : f32
    %211 = vector.broadcast %cst_52 : f32 to vector<16x128xf32>
    %212 = arith.addf %211, %210 : vector<16x128xf32>
    %213 = arith.divf %211, %212 : vector<16x128xf32>
    %214 = arith.mulf %205, %158 : vector<16x128xf32>
    %215 = arith.mulf %204, %207 : vector<16x128xf32>
    %216 = arith.addf %214, %215 : vector<16x128xf32>
    %217 = math.tanh %216 : vector<16x128xf32>
    %218 = arith.mulf %213, %217 : vector<16x128xf32>
    %219 = arith.truncf %218 : vector<16x128xf32> to vector<16x128xbf16>
    %cst_53 = arith.constant dense<0.000000e+00> : vector<16x512xf32>
    %220 = tpu.matmul %219, %4, %cst_53 {dimension_numbers = #tpu.dot_dimension_numbers<[1], [0], [0], [1], [0, 0, 1, 1], [], []>} : vector<16x128xbf16>, vector<128x512xbf16>, vector<16x512xf32> -> vector<16x512xf32>
    %221 = arith.truncf %187 : vector<16x128xf32> to vector<16x128xbf16>
    %cst_54 = arith.constant dense<0.000000e+00> : vector<16x512xf32>
    %222 = tpu.matmul %221, %5, %cst_54 {dimension_numbers = #tpu.dot_dimension_numbers<[1], [0], [0], [1], [0, 0, 1, 1], [], []>} : vector<16x128xbf16>, vector<128x512xbf16>, vector<16x512xf32> -> vector<16x512xf32>
    %223 = arith.addf %220, %222 : vector<16x512xf32>
    %224 = arith.addf %223, %8 : vector<16x512xf32>
    %225 = vector.extract_strided_slice %224 {offsets = [0, 0], sizes = [16, 256], strides = [1, 1]} : vector<16x512xf32> to vector<16x256xf32>
    %226 = arith.negf %225 : vector<16x256xf32>
    %227 = math.exp %226 : vector<16x256xf32>
    %cst_55 = arith.constant 1.000000e+00 : f32
    %228 = vector.broadcast %cst_55 : f32 to vector<16x256xf32>
    %229 = arith.addf %228, %227 : vector<16x256xf32>
    %230 = arith.divf %228, %229 : vector<16x256xf32>
    %231 = vector.extract_strided_slice %230 {offsets = [0, 0], sizes = [16, 128], strides = [1, 1]} : vector<16x256xf32> to vector<16x128xf32>
    %232 = vector.extract_strided_slice %230 {offsets = [0, 128], sizes = [16, 128], strides = [1, 1]} : vector<16x256xf32> to vector<16x128xf32>
    %233 = vector.extract_strided_slice %224 {offsets = [0, 256], sizes = [16, 128], strides = [1, 1]} : vector<16x512xf32> to vector<16x128xf32>
    %234 = math.tanh %233 : vector<16x128xf32>
    %235 = vector.extract_strided_slice %224 {offsets = [0, 384], sizes = [16, 128], strides = [1, 1]} : vector<16x512xf32> to vector<16x128xf32>
    %236 = arith.negf %235 : vector<16x128xf32>
    %237 = math.exp %236 : vector<16x128xf32>
    %cst_56 = arith.constant 1.000000e+00 : f32
    %238 = vector.broadcast %cst_56 : f32 to vector<16x128xf32>
    %239 = arith.addf %238, %237 : vector<16x128xf32>
    %240 = arith.divf %238, %239 : vector<16x128xf32>
    %241 = arith.mulf %232, %185 : vector<16x128xf32>
    %242 = arith.mulf %231, %234 : vector<16x128xf32>
    %243 = arith.addf %241, %242 : vector<16x128xf32>
    %244 = math.tanh %243 : vector<16x128xf32>
    %245 = arith.mulf %240, %244 : vector<16x128xf32>
    %246 = arith.truncf %245 : vector<16x128xf32> to vector<16x128xbf16>
    %247 = arith.index_cast %192 : i32 to index
    %c0_57 = arith.constant 0 : index
    %248 = vector.load %arg8[%247, %c0_57] : memref<128x128xbf16, #tpu.memory_space<vmem>>, vector<16x128xbf16>
    tpu.vector_store %arg8[%247, %c0_57], %246 {strides = array<i32>} : memref<128x128xbf16, #tpu.memory_space<vmem>>, vector<16x128xbf16>,
    %c4_i32 = arith.constant 4 : i32
    %c16_i32_58 = arith.constant 16 : i32
    %249 = arith.muli %c4_i32, %c16_i32_58 : i32
    %250 = tpu.assume_multiple %249, 16 : i32
    %251 = arith.index_cast %250 : i32 to index
    %c0_59 = arith.constant 0 : index
    %252 = vector.load %arg1[%251, %c0_59] : memref<128x512xf32, #tpu.memory_space<vmem>>, vector<16x512xf32>
    %253 = arith.truncf %218 : vector<16x128xf32> to vector<16x128xbf16>
    %cst_60 = arith.constant dense<0.000000e+00> : vector<16x512xf32>
    %254 = tpu.matmul %253, %3, %cst_60 {dimension_numbers = #tpu.dot_dimension_numbers<[1], [0], [0], [1], [0, 0, 1, 1], [], []>} : vector<16x128xbf16>, vector<128x512xbf16>, vector<16x512xf32> -> vector<16x512xf32>
    %255 = arith.addf %252, %254 : vector<16x512xf32>
    %256 = vector.extract_strided_slice %255 {offsets = [0, 0], sizes = [16, 256], strides = [1, 1]} : vector<16x512xf32> to vector<16x256xf32>
    %257 = arith.negf %256 : vector<16x256xf32>
    %258 = math.exp %257 : vector<16x256xf32>
    %cst_61 = arith.constant 1.000000e+00 : f32
    %259 = vector.broadcast %cst_61 : f32 to vector<16x256xf32>
    %260 = arith.addf %259, %258 : vector<16x256xf32>
    %261 = arith.divf %259, %260 : vector<16x256xf32>
    %262 = vector.extract_strided_slice %261 {offsets = [0, 0], sizes = [16, 128], strides = [1, 1]} : vector<16x256xf32> to vector<16x128xf32>
    %263 = vector.extract_strided_slice %261 {offsets = [0, 128], sizes = [16, 128], strides = [1, 1]} : vector<16x256xf32> to vector<16x128xf32>
    %264 = vector.extract_strided_slice %255 {offsets = [0, 256], sizes = [16, 128], strides = [1, 1]} : vector<16x512xf32> to vector<16x128xf32>
    %265 = math.tanh %264 : vector<16x128xf32>
    %266 = vector.extract_strided_slice %255 {offsets = [0, 384], sizes = [16, 128], strides = [1, 1]} : vector<16x512xf32> to vector<16x128xf32>
    %267 = arith.negf %266 : vector<16x128xf32>
    %268 = math.exp %267 : vector<16x128xf32>
    %cst_62 = arith.constant 1.000000e+00 : f32
    %269 = vector.broadcast %cst_62 : f32 to vector<16x128xf32>
    %270 = arith.addf %269, %268 : vector<16x128xf32>
    %271 = arith.divf %269, %270 : vector<16x128xf32>
    %272 = arith.mulf %263, %216 : vector<16x128xf32>
    %273 = arith.mulf %262, %265 : vector<16x128xf32>
    %274 = arith.addf %272, %273 : vector<16x128xf32>
    %275 = math.tanh %274 : vector<16x128xf32>
    %276 = arith.mulf %271, %275 : vector<16x128xf32>
    %277 = arith.truncf %276 : vector<16x128xf32> to vector<16x128xbf16>
    %cst_63 = arith.constant dense<0.000000e+00> : vector<16x512xf32>
    %278 = tpu.matmul %277, %4, %cst_63 {dimension_numbers = #tpu.dot_dimension_numbers<[1], [0], [0], [1], [0, 0, 1, 1], [], []>} : vector<16x128xbf16>, vector<128x512xbf16>, vector<16x512xf32> -> vector<16x512xf32>
    %279 = arith.truncf %245 : vector<16x128xf32> to vector<16x128xbf16>
    %cst_64 = arith.constant dense<0.000000e+00> : vector<16x512xf32>
    %280 = tpu.matmul %279, %5, %cst_64 {dimension_numbers = #tpu.dot_dimension_numbers<[1], [0], [0], [1], [0, 0, 1, 1], [], []>} : vector<16x128xbf16>, vector<128x512xbf16>, vector<16x512xf32> -> vector<16x512xf32>
    %281 = arith.addf %278, %280 : vector<16x512xf32>
    %282 = arith.addf %281, %8 : vector<16x512xf32>
    %283 = vector.extract_strided_slice %282 {offsets = [0, 0], sizes = [16, 256], strides = [1, 1]} : vector<16x512xf32> to vector<16x256xf32>
    %284 = arith.negf %283 : vector<16x256xf32>
    %285 = math.exp %284 : vector<16x256xf32>
    %cst_65 = arith.constant 1.000000e+00 : f32
    %286 = vector.broadcast %cst_65 : f32 to vector<16x256xf32>
    %287 = arith.addf %286, %285 : vector<16x256xf32>
    %288 = arith.divf %286, %287 : vector<16x256xf32>
    %289 = vector.extract_strided_slice %288 {offsets = [0, 0], sizes = [16, 128], strides = [1, 1]} : vector<16x256xf32> to vector<16x128xf32>
    %290 = vector.extract_strided_slice %288 {offsets = [0, 128], sizes = [16, 128], strides = [1, 1]} : vector<16x256xf32> to vector<16x128xf32>
    %291 = vector.extract_strided_slice %282 {offsets = [0, 256], sizes = [16, 128], strides = [1, 1]} : vector<16x512xf32> to vector<16x128xf32>
    %292 = math.tanh %291 : vector<16x128xf32>
    %293 = vector.extract_strided_slice %282 {offsets = [0, 384], sizes = [16, 128], strides = [1, 1]} : vector<16x512xf32> to vector<16x128xf32>
    %294 = arith.negf %293 : vector<16x128xf32>
    %295 = math.exp %294 : vector<16x128xf32>
    %cst_66 = arith.constant 1.000000e+00 : f32
    %296 = vector.broadcast %cst_66 : f32 to vector<16x128xf32>
    %297 = arith.addf %296, %295 : vector<16x128xf32>
    %298 = arith.divf %296, %297 : vector<16x128xf32>
    %299 = arith.mulf %290, %243 : vector<16x128xf32>
    %300 = arith.mulf %289, %292 : vector<16x128xf32>
    %301 = arith.addf %299, %300 : vector<16x128xf32>
    %302 = math.tanh %301 : vector<16x128xf32>
    %303 = arith.mulf %298, %302 : vector<16x128xf32>
    %304 = arith.truncf %303 : vector<16x128xf32> to vector<16x128xbf16>
    %305 = arith.index_cast %250 : i32 to index
    %c0_67 = arith.constant 0 : index
    %306 = vector.load %arg8[%305, %c0_67] : memref<128x128xbf16, #tpu.memory_space<vmem>>, vector<16x128xbf16>
    tpu.vector_store %arg8[%305, %c0_67], %304 {strides = array<i32>} : memref<128x128xbf16, #tpu.memory_space<vmem>>, vector<16x128xbf16>,
    %c5_i32 = arith.constant 5 : i32
    %c16_i32_68 = arith.constant 16 : i32
    %307 = arith.muli %c5_i32, %c16_i32_68 : i32
    %308 = tpu.assume_multiple %307, 16 : i32
    %309 = arith.index_cast %308 : i32 to index
    %c0_69 = arith.constant 0 : index
    %310 = vector.load %arg1[%309, %c0_69] : memref<128x512xf32, #tpu.memory_space<vmem>>, vector<16x512xf32>
    %311 = arith.truncf %276 : vector<16x128xf32> to vector<16x128xbf16>
    %cst_70 = arith.constant dense<0.000000e+00> : vector<16x512xf32>
    %312 = tpu.matmul %311, %3, %cst_70 {dimension_numbers = #tpu.dot_dimension_numbers<[1], [0], [0], [1], [0, 0, 1, 1], [], []>} : vector<16x128xbf16>, vector<128x512xbf16>, vector<16x512xf32> -> vector<16x512xf32>
    %313 = arith.addf %310, %312 : vector<16x512xf32>
    %314 = vector.extract_strided_slice %313 {offsets = [0, 0], sizes = [16, 256], strides = [1, 1]} : vector<16x512xf32> to vector<16x256xf32>
    %315 = arith.negf %314 : vector<16x256xf32>
    %316 = math.exp %315 : vector<16x256xf32>
    %cst_71 = arith.constant 1.000000e+00 : f32
    %317 = vector.broadcast %cst_71 : f32 to vector<16x256xf32>
    %318 = arith.addf %317, %316 : vector<16x256xf32>
    %319 = arith.divf %317, %318 : vector<16x256xf32>
    %320 = vector.extract_strided_slice %319 {offsets = [0, 0], sizes = [16, 128], strides = [1, 1]} : vector<16x256xf32> to vector<16x128xf32>
    %321 = vector.extract_strided_slice %319 {offsets = [0, 128], sizes = [16, 128], strides = [1, 1]} : vector<16x256xf32> to vector<16x128xf32>
    %322 = vector.extract_strided_slice %313 {offsets = [0, 256], sizes = [16, 128], strides = [1, 1]} : vector<16x512xf32> to vector<16x128xf32>
    %323 = math.tanh %322 : vector<16x128xf32>
    %324 = vector.extract_strided_slice %313 {offsets = [0, 384], sizes = [16, 128], strides = [1, 1]} : vector<16x512xf32> to vector<16x128xf32>
    %325 = arith.negf %324 : vector<16x128xf32>
    %326 = math.exp %325 : vector<16x128xf32>
    %cst_72 = arith.constant 1.000000e+00 : f32
    %327 = vector.broadcast %cst_72 : f32 to vector<16x128xf32>
    %328 = arith.addf %327, %326 : vector<16x128xf32>
    %329 = arith.divf %327, %328 : vector<16x128xf32>
    %330 = arith.mulf %321, %274 : vector<16x128xf32>
    %331 = arith.mulf %320, %323 : vector<16x128xf32>
    %332 = arith.addf %330, %331 : vector<16x128xf32>
    %333 = math.tanh %332 : vector<16x128xf32>
    %334 = arith.mulf %329, %333 : vector<16x128xf32>
    %335 = arith.truncf %334 : vector<16x128xf32> to vector<16x128xbf16>
    %cst_73 = arith.constant dense<0.000000e+00> : vector<16x512xf32>
    %336 = tpu.matmul %335, %4, %cst_73 {dimension_numbers = #tpu.dot_dimension_numbers<[1], [0], [0], [1], [0, 0, 1, 1], [], []>} : vector<16x128xbf16>, vector<128x512xbf16>, vector<16x512xf32> -> vector<16x512xf32>
    %337 = arith.truncf %303 : vector<16x128xf32> to vector<16x128xbf16>
    %cst_74 = arith.constant dense<0.000000e+00> : vector<16x512xf32>
    %338 = tpu.matmul %337, %5, %cst_74 {dimension_numbers = #tpu.dot_dimension_numbers<[1], [0], [0], [1], [0, 0, 1, 1], [], []>} : vector<16x128xbf16>, vector<128x512xbf16>, vector<16x512xf32> -> vector<16x512xf32>
    %339 = arith.addf %336, %338 : vector<16x512xf32>
    %340 = arith.addf %339, %8 : vector<16x512xf32>
    %341 = vector.extract_strided_slice %340 {offsets = [0, 0], sizes = [16, 256], strides = [1, 1]} : vector<16x512xf32> to vector<16x256xf32>
    %342 = arith.negf %341 : vector<16x256xf32>
    %343 = math.exp %342 : vector<16x256xf32>
    %cst_75 = arith.constant 1.000000e+00 : f32
    %344 = vector.broadcast %cst_75 : f32 to vector<16x256xf32>
    %345 = arith.addf %344, %343 : vector<16x256xf32>
    %346 = arith.divf %344, %345 : vector<16x256xf32>
    %347 = vector.extract_strided_slice %346 {offsets = [0, 0], sizes = [16, 128], strides = [1, 1]} : vector<16x256xf32> to vector<16x128xf32>
    %348 = vector.extract_strided_slice %346 {offsets = [0, 128], sizes = [16, 128], strides = [1, 1]} : vector<16x256xf32> to vector<16x128xf32>
    %349 = vector.extract_strided_slice %340 {offsets = [0, 256], sizes = [16, 128], strides = [1, 1]} : vector<16x512xf32> to vector<16x128xf32>
    %350 = math.tanh %349 : vector<16x128xf32>
    %351 = vector.extract_strided_slice %340 {offsets = [0, 384], sizes = [16, 128], strides = [1, 1]} : vector<16x512xf32> to vector<16x128xf32>
    %352 = arith.negf %351 : vector<16x128xf32>
    %353 = math.exp %352 : vector<16x128xf32>
    %cst_76 = arith.constant 1.000000e+00 : f32
    %354 = vector.broadcast %cst_76 : f32 to vector<16x128xf32>
    %355 = arith.addf %354, %353 : vector<16x128xf32>
    %356 = arith.divf %354, %355 : vector<16x128xf32>
    %357 = arith.mulf %348, %301 : vector<16x128xf32>
    %358 = arith.mulf %347, %350 : vector<16x128xf32>
    %359 = arith.addf %357, %358 : vector<16x128xf32>
    %360 = math.tanh %359 : vector<16x128xf32>
    %361 = arith.mulf %356, %360 : vector<16x128xf32>
    %362 = arith.truncf %361 : vector<16x128xf32> to vector<16x128xbf16>
    %363 = arith.index_cast %308 : i32 to index
    %c0_77 = arith.constant 0 : index
    %364 = vector.load %arg8[%363, %c0_77] : memref<128x128xbf16, #tpu.memory_space<vmem>>, vector<16x128xbf16>
    tpu.vector_store %arg8[%363, %c0_77], %362 {strides = array<i32>} : memref<128x128xbf16, #tpu.memory_space<vmem>>, vector<16x128xbf16>,
    %c6_i32 = arith.constant 6 : i32
    %c16_i32_78 = arith.constant 16 : i32
    %365 = arith.muli %c6_i32, %c16_i32_78 : i32
    %366 = tpu.assume_multiple %365, 16 : i32
    %367 = arith.index_cast %366 : i32 to index
    %c0_79 = arith.constant 0 : index
    %368 = vector.load %arg1[%367, %c0_79] : memref<128x512xf32, #tpu.memory_space<vmem>>, vector<16x512xf32>
    %369 = arith.truncf %334 : vector<16x128xf32> to vector<16x128xbf16>
    %cst_80 = arith.constant dense<0.000000e+00> : vector<16x512xf32>
    %370 = tpu.matmul %369, %3, %cst_80 {dimension_numbers = #tpu.dot_dimension_numbers<[1], [0], [0], [1], [0, 0, 1, 1], [], []>} : vector<16x128xbf16>, vector<128x512xbf16>, vector<16x512xf32> -> vector<16x512xf32>
    %371 = arith.addf %368, %370 : vector<16x512xf32>
    %372 = vector.extract_strided_slice %371 {offsets = [0, 0], sizes = [16, 256], strides = [1, 1]} : vector<16x512xf32> to vector<16x256xf32>
    %373 = arith.negf %372 : vector<16x256xf32>
    %374 = math.exp %373 : vector<16x256xf32>
    %cst_81 = arith.constant 1.000000e+00 : f32
    %375 = vector.broadcast %cst_81 : f32 to vector<16x256xf32>
    %376 = arith.addf %375, %374 : vector<16x256xf32>
    %377 = arith.divf %375, %376 : vector<16x256xf32>
    %378 = vector.extract_strided_slice %377 {offsets = [0, 0], sizes = [16, 128], strides = [1, 1]} : vector<16x256xf32> to vector<16x128xf32>
    %379 = vector.extract_strided_slice %377 {offsets = [0, 128], sizes = [16, 128], strides = [1, 1]} : vector<16x256xf32> to vector<16x128xf32>
    %380 = vector.extract_strided_slice %371 {offsets = [0, 256], sizes = [16, 128], strides = [1, 1]} : vector<16x512xf32> to vector<16x128xf32>
    %381 = math.tanh %380 : vector<16x128xf32>
    %382 = vector.extract_strided_slice %371 {offsets = [0, 384], sizes = [16, 128], strides = [1, 1]} : vector<16x512xf32> to vector<16x128xf32>
    %383 = arith.negf %382 : vector<16x128xf32>
    %384 = math.exp %383 : vector<16x128xf32>
    %cst_82 = arith.constant 1.000000e+00 : f32
    %385 = vector.broadcast %cst_82 : f32 to vector<16x128xf32>
    %386 = arith.addf %385, %384 : vector<16x128xf32>
    %387 = arith.divf %385, %386 : vector<16x128xf32>
    %388 = arith.mulf %379, %332 : vector<16x128xf32>
    %389 = arith.mulf %378, %381 : vector<16x128xf32>
    %390 = arith.addf %388, %389 : vector<16x128xf32>
    %391 = math.tanh %390 : vector<16x128xf32>
    %392 = arith.mulf %387, %391 : vector<16x128xf32>
    %393 = arith.truncf %392 : vector<16x128xf32> to vector<16x128xbf16>
    %cst_83 = arith.constant dense<0.000000e+00> : vector<16x512xf32>
    %394 = tpu.matmul %393, %4, %cst_83 {dimension_numbers = #tpu.dot_dimension_numbers<[1], [0], [0], [1], [0, 0, 1, 1], [], []>} : vector<16x128xbf16>, vector<128x512xbf16>, vector<16x512xf32> -> vector<16x512xf32>
    %395 = arith.truncf %361 : vector<16x128xf32> to vector<16x128xbf16>
    %cst_84 = arith.constant dense<0.000000e+00> : vector<16x512xf32>
    %396 = tpu.matmul %395, %5, %cst_84 {dimension_numbers = #tpu.dot_dimension_numbers<[1], [0], [0], [1], [0, 0, 1, 1], [], []>} : vector<16x128xbf16>, vector<128x512xbf16>, vector<16x512xf32> -> vector<16x512xf32>
    %397 = arith.addf %394, %396 : vector<16x512xf32>
    %398 = arith.addf %397, %8 : vector<16x512xf32>
    %399 = vector.extract_strided_slice %398 {offsets = [0, 0], sizes = [16, 256], strides = [1, 1]} : vector<16x512xf32> to vector<16x256xf32>
    %400 = arith.negf %399 : vector<16x256xf32>
    %401 = math.exp %400 : vector<16x256xf32>
    %cst_85 = arith.constant 1.000000e+00 : f32
    %402 = vector.broadcast %cst_85 : f32 to vector<16x256xf32>
    %403 = arith.addf %402, %401 : vector<16x256xf32>
    %404 = arith.divf %402, %403 : vector<16x256xf32>
    %405 = vector.extract_strided_slice %404 {offsets = [0, 0], sizes = [16, 128], strides = [1, 1]} : vector<16x256xf32> to vector<16x128xf32>
    %406 = vector.extract_strided_slice %404 {offsets = [0, 128], sizes = [16, 128], strides = [1, 1]} : vector<16x256xf32> to vector<16x128xf32>
    %407 = vector.extract_strided_slice %398 {offsets = [0, 256], sizes = [16, 128], strides = [1, 1]} : vector<16x512xf32> to vector<16x128xf32>
    %408 = math.tanh %407 : vector<16x128xf32>
    %409 = vector.extract_strided_slice %398 {offsets = [0, 384], sizes = [16, 128], strides = [1, 1]} : vector<16x512xf32> to vector<16x128xf32>
    %410 = arith.negf %409 : vector<16x128xf32>
    %411 = math.exp %410 : vector<16x128xf32>
    %cst_86 = arith.constant 1.000000e+00 : f32
    %412 = vector.broadcast %cst_86 : f32 to vector<16x128xf32>
    %413 = arith.addf %412, %411 : vector<16x128xf32>
    %414 = arith.divf %412, %413 : vector<16x128xf32>
    %415 = arith.mulf %406, %359 : vector<16x128xf32>
    %416 = arith.mulf %405, %408 : vector<16x128xf32>
    %417 = arith.addf %415, %416 : vector<16x128xf32>
    %418 = math.tanh %417 : vector<16x128xf32>
    %419 = arith.mulf %414, %418 : vector<16x128xf32>
    %420 = arith.truncf %419 : vector<16x128xf32> to vector<16x128xbf16>
    %421 = arith.index_cast %366 : i32 to index
    %c0_87 = arith.constant 0 : index
    %422 = vector.load %arg8[%421, %c0_87] : memref<128x128xbf16, #tpu.memory_space<vmem>>, vector<16x128xbf16>
    tpu.vector_store %arg8[%421, %c0_87], %420 {strides = array<i32>} : memref<128x128xbf16, #tpu.memory_space<vmem>>, vector<16x128xbf16>,
    %c7_i32 = arith.constant 7 : i32
    %c16_i32_88 = arith.constant 16 : i32
    %423 = arith.muli %c7_i32, %c16_i32_88 : i32
    %424 = tpu.assume_multiple %423, 16 : i32
    %425 = arith.index_cast %424 : i32 to index
    %c0_89 = arith.constant 0 : index
    %426 = vector.load %arg1[%425, %c0_89] : memref<128x512xf32, #tpu.memory_space<vmem>>, vector<16x512xf32>
    %427 = arith.truncf %392 : vector<16x128xf32> to vector<16x128xbf16>
    %cst_90 = arith.constant dense<0.000000e+00> : vector<16x512xf32>
    %428 = tpu.matmul %427, %3, %cst_90 {dimension_numbers = #tpu.dot_dimension_numbers<[1], [0], [0], [1], [0, 0, 1, 1], [], []>} : vector<16x128xbf16>, vector<128x512xbf16>, vector<16x512xf32> -> vector<16x512xf32>
    %429 = arith.addf %426, %428 : vector<16x512xf32>
    %430 = vector.extract_strided_slice %429 {offsets = [0, 0], sizes = [16, 256], strides = [1, 1]} : vector<16x512xf32> to vector<16x256xf32>
    %431 = arith.negf %430 : vector<16x256xf32>
    %432 = math.exp %431 : vector<16x256xf32>
    %cst_91 = arith.constant 1.000000e+00 : f32
    %433 = vector.broadcast %cst_91 : f32 to vector<16x256xf32>
    %434 = arith.addf %433, %432 : vector<16x256xf32>
    %435 = arith.divf %433, %434 : vector<16x256xf32>
    %436 = vector.extract_strided_slice %435 {offsets = [0, 0], sizes = [16, 128], strides = [1, 1]} : vector<16x256xf32> to vector<16x128xf32>
    %437 = vector.extract_strided_slice %435 {offsets = [0, 128], sizes = [16, 128], strides = [1, 1]} : vector<16x256xf32> to vector<16x128xf32>
    %438 = vector.extract_strided_slice %429 {offsets = [0, 256], sizes = [16, 128], strides = [1, 1]} : vector<16x512xf32> to vector<16x128xf32>
    %439 = math.tanh %438 : vector<16x128xf32>
    %440 = vector.extract_strided_slice %429 {offsets = [0, 384], sizes = [16, 128], strides = [1, 1]} : vector<16x512xf32> to vector<16x128xf32>
    %441 = arith.negf %440 : vector<16x128xf32>
    %442 = math.exp %441 : vector<16x128xf32>
    %cst_92 = arith.constant 1.000000e+00 : f32
    %443 = vector.broadcast %cst_92 : f32 to vector<16x128xf32>
    %444 = arith.addf %443, %442 : vector<16x128xf32>
    %445 = arith.divf %443, %444 : vector<16x128xf32>
    %446 = arith.mulf %437, %390 : vector<16x128xf32>
    %447 = arith.mulf %436, %439 : vector<16x128xf32>
    %448 = arith.addf %446, %447 : vector<16x128xf32>
    %449 = math.tanh %448 : vector<16x128xf32>
    %450 = arith.mulf %445, %449 : vector<16x128xf32>
    %451 = arith.truncf %450 : vector<16x128xf32> to vector<16x128xbf16>
    %cst_93 = arith.constant dense<0.000000e+00> : vector<16x512xf32>
    %452 = tpu.matmul %451, %4, %cst_93 {dimension_numbers = #tpu.dot_dimension_numbers<[1], [0], [0], [1], [0, 0, 1, 1], [], []>} : vector<16x128xbf16>, vector<128x512xbf16>, vector<16x512xf32> -> vector<16x512xf32>
    %453 = arith.truncf %419 : vector<16x128xf32> to vector<16x128xbf16>
    %cst_94 = arith.constant dense<0.000000e+00> : vector<16x512xf32>
    %454 = tpu.matmul %453, %5, %cst_94 {dimension_numbers = #tpu.dot_dimension_numbers<[1], [0], [0], [1], [0, 0, 1, 1], [], []>} : vector<16x128xbf16>, vector<128x512xbf16>, vector<16x512xf32> -> vector<16x512xf32>
    %455 = arith.addf %452, %454 : vector<16x512xf32>
    %456 = arith.addf %455, %8 : vector<16x512xf32>
    %457 = vector.extract_strided_slice %456 {offsets = [0, 0], sizes = [16, 256], strides = [1, 1]} : vector<16x512xf32> to vector<16x256xf32>
    %458 = arith.negf %457 : vector<16x256xf32>
    %459 = math.exp %458 : vector<16x256xf32>
    %cst_95 = arith.constant 1.000000e+00 : f32
    %460 = vector.broadcast %cst_95 : f32 to vector<16x256xf32>
    %461 = arith.addf %460, %459 : vector<16x256xf32>
    %462 = arith.divf %460, %461 : vector<16x256xf32>
    %463 = vector.extract_strided_slice %462 {offsets = [0, 0], sizes = [16, 128], strides = [1, 1]} : vector<16x256xf32> to vector<16x128xf32>
    %464 = vector.extract_strided_slice %462 {offsets = [0, 128], sizes = [16, 128], strides = [1, 1]} : vector<16x256xf32> to vector<16x128xf32>
    %465 = vector.extract_strided_slice %456 {offsets = [0, 256], sizes = [16, 128], strides = [1, 1]} : vector<16x512xf32> to vector<16x128xf32>
    %466 = math.tanh %465 : vector<16x128xf32>
    %467 = vector.extract_strided_slice %456 {offsets = [0, 384], sizes = [16, 128], strides = [1, 1]} : vector<16x512xf32> to vector<16x128xf32>
    %468 = arith.negf %467 : vector<16x128xf32>
    %469 = math.exp %468 : vector<16x128xf32>
    %cst_96 = arith.constant 1.000000e+00 : f32
    %470 = vector.broadcast %cst_96 : f32 to vector<16x128xf32>
    %471 = arith.addf %470, %469 : vector<16x128xf32>
    %472 = arith.divf %470, %471 : vector<16x128xf32>
    %473 = arith.mulf %464, %417 : vector<16x128xf32>
    %474 = arith.mulf %463, %466 : vector<16x128xf32>
    %475 = arith.addf %473, %474 : vector<16x128xf32>
    %476 = math.tanh %475 : vector<16x128xf32>
    %477 = arith.mulf %472, %476 : vector<16x128xf32>
    %478 = arith.truncf %477 : vector<16x128xf32> to vector<16x128xbf16>
    %479 = arith.index_cast %424 : i32 to index
    %c0_97 = arith.constant 0 : index
    %480 = vector.load %arg8[%479, %c0_97] : memref<128x128xbf16, #tpu.memory_space<vmem>>, vector<16x128xbf16>
    tpu.vector_store %arg8[%479, %c0_97], %478 {strides = array<i32>} : memref<128x128xbf16, #tpu.memory_space<vmem>>, vector<16x128xbf16>,
    %c8_i32 = arith.constant 8 : i32
    %c0_98 = arith.constant 0 : index
    %c0_99 = arith.constant 0 : index
    %c0_100 = arith.constant 0 : index
    %481 = vector.load %arg11[%c0_98, %c0_99, %c0_100] : memref<2x16x128xf32, #tpu.memory_space<vmem>>, vector<1x16x128xf32>
    %482 = vector.shape_cast %481 : vector<1x16x128xf32> to vector<16x128xf32>
    %483 = vector.shape_cast %450 : vector<16x128xf32> to vector<1x16x128xf32>
    tpu.vector_store %arg11[%c0_98, %c0_99, %c0_100], %483 {strides = array<i32>} : memref<2x16x128xf32, #tpu.memory_space<vmem>>, vector<1x16x128xf32>,
    %c1_101 = arith.constant 1 : index
    %c0_102 = arith.constant 0 : index
    %c0_103 = arith.constant 0 : index
    %484 = vector.load %arg11[%c1_101, %c0_102, %c0_103] : memref<2x16x128xf32, #tpu.memory_space<vmem>>, vector<1x16x128xf32>
    %485 = vector.shape_cast %484 : vector<1x16x128xf32> to vector<16x128xf32>
    %486 = vector.shape_cast %477 : vector<16x128xf32> to vector<1x16x128xf32>
    tpu.vector_store %arg11[%c1_101, %c0_102, %c0_103], %486 {strides = array<i32>} : memref<2x16x128xf32, #tpu.memory_space<vmem>>, vector<1x16x128xf32>,
    %c0_104 = arith.constant 0 : index
    %c0_105 = arith.constant 0 : index
    %c0_106 = arith.constant 0 : index
    %487 = vector.load %arg12[%c0_104, %c0_105, %c0_106] : memref<2x16x128xf32, #tpu.memory_space<vmem>>, vector<1x16x128xf32>
    %488 = vector.shape_cast %487 : vector<1x16x128xf32> to vector<16x128xf32>
    %489 = vector.shape_cast %448 : vector<16x128xf32> to vector<1x16x128xf32>
    tpu.vector_store %arg12[%c0_104, %c0_105, %c0_106], %489 {strides = array<i32>} : memref<2x16x128xf32, #tpu.memory_space<vmem>>, vector<1x16x128xf32>,
    %c1_107 = arith.constant 1 : index
    %c0_108 = arith.constant 0 : index
    %c0_109 = arith.constant 0 : index
    %490 = vector.load %arg12[%c1_107, %c0_108, %c0_109] : memref<2x16x128xf32, #tpu.memory_space<vmem>>, vector<1x16x128xf32>
    %491 = vector.shape_cast %490 : vector<1x16x128xf32> to vector<16x128xf32>
    %492 = vector.shape_cast %475 : vector<16x128xf32> to vector<1x16x128xf32>
    tpu.vector_store %arg12[%c1_107, %c0_108, %c0_109], %492 {strides = array<i32>} : memref<2x16x128xf32, #tpu.memory_space<vmem>>, vector<1x16x128xf32>,
    %c0_i32_110 = arith.constant 0 : i32
    %493 = arith.cmpi eq, %arg0, %c0_i32_110 : i32
    %494 = arith.extui %493 : i1 to i32
    %c0_i32_111 = arith.constant 0 : i32
    %495 = arith.cmpi ne, %494, %c0_i32_111 : i32
    scf.if %495 {
      %c0_112 = arith.constant 0 : index
      %c0_113 = arith.constant 0 : index
      %c0_114 = arith.constant 0 : index
      %496 = vector.load %arg9[%c0_112, %c0_113, %c0_114] : memref<2x16x128xf32, #tpu.memory_space<vmem>>, vector<1x16x128xf32>
      %497 = vector.shape_cast %496 : vector<1x16x128xf32> to vector<16x128xf32>
      %498 = vector.shape_cast %450 : vector<16x128xf32> to vector<1x16x128xf32>
      tpu.vector_store %arg9[%c0_112, %c0_113, %c0_114], %498 {strides = array<i32>} : memref<2x16x128xf32, #tpu.memory_space<vmem>>, vector<1x16x128xf32>,
      %c1_115 = arith.constant 1 : index
      %c0_116 = arith.constant 0 : index
      %c0_117 = arith.constant 0 : index
      %499 = vector.load %arg9[%c1_115, %c0_116, %c0_117] : memref<2x16x128xf32, #tpu.memory_space<vmem>>, vector<1x16x128xf32>
      %500 = vector.shape_cast %499 : vector<1x16x128xf32> to vector<16x128xf32>
      %501 = vector.shape_cast %477 : vector<16x128xf32> to vector<1x16x128xf32>
      tpu.vector_store %arg9[%c1_115, %c0_116, %c0_117], %501 {strides = array<i32>} : memref<2x16x128xf32, #tpu.memory_space<vmem>>, vector<1x16x128xf32>,
      %c0_118 = arith.constant 0 : index
      %c0_119 = arith.constant 0 : index
      %c0_120 = arith.constant 0 : index
      %502 = vector.load %arg10[%c0_118, %c0_119, %c0_120] : memref<2x16x128xf32, #tpu.memory_space<vmem>>, vector<1x16x128xf32>
      %503 = vector.shape_cast %502 : vector<1x16x128xf32> to vector<16x128xf32>
      %504 = vector.shape_cast %448 : vector<16x128xf32> to vector<1x16x128xf32>
      tpu.vector_store %arg10[%c0_118, %c0_119, %c0_120], %504 {strides = array<i32>} : memref<2x16x128xf32, #tpu.memory_space<vmem>>, vector<1x16x128xf32>,
      %c1_121 = arith.constant 1 : index
      %c0_122 = arith.constant 0 : index
      %c0_123 = arith.constant 0 : index
      %505 = vector.load %arg10[%c1_121, %c0_122, %c0_123] : memref<2x16x128xf32, #tpu.memory_space<vmem>>, vector<1x16x128xf32>
      %506 = vector.shape_cast %505 : vector<1x16x128xf32> to vector<16x128xf32>
      %507 = vector.shape_cast %475 : vector<16x128xf32> to vector<1x16x128xf32>
      tpu.vector_store %arg10[%c1_121, %c0_122, %c0_123], %507 {strides = array<i32>} : memref<2x16x128xf32, #tpu.memory_space<vmem>>, vector<1x16x128xf32>,
    } else {
    }
    return
  }
  func.func @transform_0(%arg0: i32) -> (i32, i32) {
    %c0_i32 = arith.constant 0 : i32
    %c0_i32_0 = arith.constant 0 : i32
    return %arg0, %c0_i32 : i32, i32
  }
  func.func @transform_1(%arg0: i32) -> (i32, i32) {
    %c0_i32 = arith.constant 0 : i32
    %c0_i32_0 = arith.constant 0 : i32
    %c0_i32_1 = arith.constant 0 : i32
    return %c0_i32, %c0_i32_0 : i32, i32
  }
  func.func @transform_2(%arg0: i32) -> (i32, i32) {
    %c0_i32 = arith.constant 0 : i32
    %c0_i32_0 = arith.constant 0 : i32
    %c0_i32_1 = arith.constant 0 : i32
    return %c0_i32, %c0_i32_0 : i32, i32
  }
  func.func @transform_3(%arg0: i32) -> (i32, i32) {
    %c0_i32 = arith.constant 0 : i32
    %c0_i32_0 = arith.constant 0 : i32
    %c0_i32_1 = arith.constant 0 : i32
    return %c0_i32, %c0_i32_0 : i32, i32
  }
  func.func @transform_4(%arg0: i32) -> (i32, i32) {
    %c0_i32 = arith.constant 0 : i32
    %c0_i32_0 = arith.constant 0 : i32
    %c0_i32_1 = arith.constant 0 : i32
    return %c0_i32, %c0_i32_0 : i32, i32
  }
  func.func @transform_5(%arg0: i32) -> (i32, i32, i32) {
    %c0_i32 = arith.constant 0 : i32
    %c0_i32_0 = arith.constant 0 : i32
    %c0_i32_1 = arith.constant 0 : i32
    %c0_i32_2 = arith.constant 0 : i32
    return %c0_i32, %c0_i32_0, %c0_i32_1 : i32, i32, i32
  }
  func.func @transform_6(%arg0: i32) -> (i32, i32, i32) {
    %c0_i32 = arith.constant 0 : i32
    %c0_i32_0 = arith.constant 0 : i32
    %c0_i32_1 = arith.constant 0 : i32
    %c0_i32_2 = arith.constant 0 : i32
    return %c0_i32, %c0_i32_0, %c0_i32_1 : i32, i32, i32
  }
  func.func @transform_7(%arg0: i32) -> (i32, i32) {
    %c0_i32 = arith.constant 0 : i32
    %c0_i32_0 = arith.constant 0 : i32
    return %arg0, %c0_i32 : i32, i32
  }
  func.func @transform_8(%arg0: i32) -> (i32, i32, i32) {
    %c0_i32 = arith.constant 0 : i32
    %c0_i32_0 = arith.constant 0 : i32
    %c0_i32_1 = arith.constant 0 : i32
    %c0_i32_2 = arith.constant 0 : i32
    return %c0_i32, %c0_i32_0, %c0_i32_1 : i32, i32, i32
  }
  func.func @transform_9(%arg0: i32) -> (i32, i32, i32) {
    %c0_i32 = arith.constant 0 : i32
    %c0_i32_0 = arith.constant 0 : i32
    %c0_i32_1 = arith.constant 0 : i32
    %c0_i32_2 = arith.constant 0 : i32
    return %c0_i32, %c0_i32_0, %c0_i32_1 : i32, i32, i32
  }
}

</mosaic_0001>

<llo_original>
// kernel: tpu_custom_call.1
$region0: #{tpu_custom_call.1}
  #allocation0 [shape = 'u32[]', space=smem, size = 0x4, offset = 0x4, fixed_abs, tag = 'smem constant byte address 0x4 - core index']
  #allocation1 [shape = 'u32[144,128]{1,0:T(1,128)}', space=vmem, size = 0x12000, scoped, tag = 'internal scratch']
  #allocation2 [shape = 'f32[2,16,128]{2,1,0:T(8,128)}', space=vmem, size = 0x4000, scoped, tag = 'scratch operand']
  #allocation3 [shape = 'f32[2,16,128]{2,1,0:T(8,128)}', space=vmem, size = 0x4000, scoped, tag = 'scratch operand']
  %s0 = inlined_call_operand.hbm [shape: f32[128,512], index: 0, kind: input, shape index: {}]
  %s1 = inlined_call_operand.hbm [shape: bf16[128,512], index: 1, kind: input, shape index: {}]
  %s2 = inlined_call_operand.hbm [shape: bf16[128,512], index: 2, kind: input, shape index: {}]
  %s3 = inlined_call_operand.hbm [shape: bf16[128,512], index: 3, kind: input, shape index: {}]
  %s4 = inlined_call_operand.vmem [shape: f32[1,512], index: 4, kind: input, shape index: {}]
  %s5 = inlined_call_operand.hbm [shape: f32[2,16,128], index: 5, kind: input, shape index: {}]
  %s6 = inlined_call_operand.hbm [shape: f32[2,16,128], index: 6, kind: input, shape index: {}]
  %s7 = inlined_call_operand.hbm [shape: bf16[128,128], index: 7, kind: output, shape index: {0}]
  %s8 = inlined_call_operand.hbm [shape: f32[2,16,128], index: 8, kind: output, shape index: {1}]
  %s9 = inlined_call_operand.hbm [shape: f32[2,16,128], index: 9, kind: output, shape index: {2}]
  %10 = xla_tuple %s7, %s8, %s9
  %s11 = sld [smem:[#allocation0]]
  $region86: #{tpu_custom_call.1} parent=0
    _
  %s13 = ssub.s32 1, %s11
  %s14 = scalar_select 0, %s13, %s11
  $region1: #{tpu_custom_call.1} parent=0
    #allocation4 [shape = 'u8[262144]{0}', space=vmem, size = 0x40000, scoped, tag = 'input window, operand 0, single buffered']
    #allocation5 [shape = 's32[1]{0}', space=sflag, size = 0x4, scoped, tag = 'scoped memory for tpu_custom_call.1']
    #allocation6 [shape = 's32[1]{0}', space=sflag, size = 0x4, scoped, tag = 'scoped memory for tpu_custom_call.1']
    #allocation7 [shape = 'u8[131072]{0}', space=vmem, size = 0x20000, scoped, tag = 'input window, operand 1, single buffered']
    #allocation8 [shape = 's32[1]{0}', space=sflag, size = 0x4, scoped, tag = 'scoped memory for tpu_custom_call.1']
    #allocation9 [shape = 'u8[131072]{0}', space=vmem, size = 0x20000, scoped, tag = 'input window, operand 2, single buffered']
    #allocation10 [shape = 'u8[131072]{0}', space=vmem, size = 0x20000, scoped, tag = 'input window, operand 3, single buffered']
    #allocation11 [shape = 's32[1]{0}', space=sflag, size = 0x4, scoped, tag = 'scoped memory for tpu_custom_call.1']
    #allocation12 [shape = 'u8[16384]{0}', space=vmem, size = 0x4000, scoped, tag = 'input window, operand 5, single buffered']
    #allocation13 [shape = 'u8[16384]{0}', space=vmem, size = 0x4000, scoped, tag = 'input window, operand 6, single buffered']
    #allocation14 [shape = 's32[1]{0}', space=sflag, size = 0x4, scoped, tag = 'scoped memory for tpu_custom_call.1']
    #allocation15 [shape = 'u8[32768]{0}', space=vmem, size = 0x8000, scoped, tag = 'output window, operand 0, single buffered']
    #allocation16 [shape = 'u8[16384]{0}', space=vmem, size = 0x4000, scoped, tag = 'output window, operand 1, single buffered']
    #allocation17 [shape = 's32[1]{0}', space=sflag, size = 0x4, scoped, tag = 'scoped memory for tpu_custom_call.1']
    #allocation18 [shape = 'u8[16384]{0}', space=vmem, size = 0x4000, scoped, tag = 'output window, operand 2, single buffered']
    %15 = vsyncpa [#allocation5], 0
    %16 = vsyncpa [#allocation8], 0
    %17 = vsyncpa [#allocation11], 0
    %18 = vsyncpa [#allocation14], 0
    %19 = vsyncpa [#allocation6], 0
    %20 = vsyncpa [#allocation17], 0
    // Predicated region
    $region2: #{tpu_custom_call.1} parent=1 // pred_check
      _
    $region3: #{tpu_custom_call.1} parent=1 // pred_check_branch
      %22 = sbr.rel (0) target = $region5
    $region4: #{tpu_custom_call.1} parent=1 // pred_region
      %s24 = ssub.s32 8192, 8192
      %25 = vsyncadd [#allocation5], %s24
      %s26 = sshll.u32 [#allocation4], 4
      %s27 = int_to_ptr.vmem [resolvable:$true] %s26
      %32 = dma.hbm_to_vmem [thread:$0]  %s0, 8192, %s27, [#allocation5], 512, 512, 32
    $region5: #{tpu_custom_call.1} parent=1 // pred_fallthru
      _
    // Predicated region
    $region6: #{tpu_custom_call.1} parent=1 // pred_check
      _
    $region7: #{tpu_custom_call.1} parent=1 // pred_check_branch
      %34 = sbr.rel (0) target = $region9
    $region8: #{tpu_custom_call.1} parent=1 // pred_region
      %s36 = ssub.s32 4096, 4096
      %37 = vsyncadd [#allocation8], %s36
      %s38 = sshll.u32 [#allocation7], 4
      %s39 = int_to_ptr.vmem [resolvable:$true] %s38
      %44 = dma.hbm_to_vmem [thread:$0]  %s1, 4096, %s39, [#allocation8], 256, 256, 16
    $region9: #{tpu_custom_call.1} parent=1 // pred_fallthru
      _
    // Predicated region
    $region10: #{tpu_custom_call.1} parent=1 // pred_check
      _
    $region11: #{tpu_custom_call.1} parent=1 // pred_check_branch
      %46 = sbr.rel (0) target = $region13
    $region12: #{tpu_custom_call.1} parent=1 // pred_region
      %s48 = ssub.s32 4096, 4096
      %49 = vsyncadd [#allocation8], %s48
      %s50 = sshll.u32 [#allocation9], 4
      %s51 = int_to_ptr.vmem [resolvable:$true] %s50
      %56 = dma.hbm_to_vmem [thread:$0]  %s2, 4096, %s51, [#allocation8], 256, 256, 16
    $region13: #{tpu_custom_call.1} parent=1 // pred_fallthru
      _
    // Predicated region
    $region14: #{tpu_custom_call.1} parent=1 // pred_check
      _
    $region15: #{tpu_custom_call.1} parent=1 // pred_check_branch
      %58 = sbr.rel (0) target = $region17
    $region16: #{tpu_custom_call.1} parent=1 // pred_region
      %s60 = ssub.s32 4096, 4096
      %61 = vsyncadd [#allocation11], %s60
      %s62 = sshll.u32 [#allocation10], 4
      %s63 = int_to_ptr.vmem [resolvable:$true] %s62
      %68 = dma.hbm_to_vmem [thread:$0]  %s3, 4096, %s63, [#allocation11], 256, 256, 16
    $region17: #{tpu_custom_call.1} parent=1 // pred_fallthru
      _
    // Predicated region
    $region18: #{tpu_custom_call.1} parent=1 // pred_check
      _
    $region19: #{tpu_custom_call.1} parent=1 // pred_check_branch
      %70 = sbr.rel (0) target = $region21
    $region20: #{tpu_custom_call.1} parent=1 // pred_region
      _
    $region21: #{tpu_custom_call.1} parent=1 // pred_fallthru
      _
    // Predicated region
    $region22: #{tpu_custom_call.1} parent=1 // pred_check
      _
    $region23: #{tpu_custom_call.1} parent=1 // pred_check_branch
      %72 = sbr.rel (0) target = $region25
    $region24: #{tpu_custom_call.1} parent=1 // pred_region
      %s74 = ssub.s32 512, 512
      %75 = vsyncadd [#allocation11], %s74
      %s76 = sshll.u32 [#allocation12], 4
      %s77 = int_to_ptr.vmem [resolvable:$true] %s76
      %82 = dma.hbm_to_vmem [thread:$0]  %s5, 512, %s77, [#allocation11], 128, 128, 8
    $region25: #{tpu_custom_call.1} parent=1 // pred_fallthru
      _
    // Predicated region
    $region26: #{tpu_custom_call.1} parent=1 // pred_check
      _
    $region27: #{tpu_custom_call.1} parent=1 // pred_check_branch
      %84 = sbr.rel (0) target = $region29
    $region28: #{tpu_custom_call.1} parent=1 // pred_region
      %s86 = ssub.s32 512, 512
      %87 = vsyncadd [#allocation14], %s86
      %s88 = sshll.u32 [#allocation13], 4
      %s89 = int_to_ptr.vmem [resolvable:$true] %s88
      %94 = dma.hbm_to_vmem [thread:$0]  %s6, 512, %s89, [#allocation14], 128, 128, 8
    $region29: #{tpu_custom_call.1} parent=1 // pred_fallthru
      _
    // Predicated region
    $region30: #{tpu_custom_call.1} parent=1 // pred_check
      _
    $region31: #{tpu_custom_call.1} parent=1 // pred_check_branch
      %96 = sbr.rel (0) target = $region33
    $region32: #{tpu_custom_call.1} parent=1 // pred_region
      %97 = dma.done [#allocation5], 8192
    $region33: #{tpu_custom_call.1} parent=1 // pred_fallthru
      _
    // Predicated region
    $region34: #{tpu_custom_call.1} parent=1 // pred_check
      _
    $region35: #{tpu_custom_call.1} parent=1 // pred_check_branch
      %99 = sbr.rel (0) target = $region37
    $region36: #{tpu_custom_call.1} parent=1 // pred_region
      %100 = dma.done [#allocation8], 4096
    $region37: #{tpu_custom_call.1} parent=1 // pred_fallthru
      _
    // Predicated region
    $region38: #{tpu_custom_call.1} parent=1 // pred_check
      _
    $region39: #{tpu_custom_call.1} parent=1 // pred_check_branch
      %102 = sbr.rel (0) target = $region41
    $region40: #{tpu_custom_call.1} parent=1 // pred_region
      %103 = dma.done [#allocation8], 4096
    $region41: #{tpu_custom_call.1} parent=1 // pred_fallthru
      _
    // Predicated region
    $region42: #{tpu_custom_call.1} parent=1 // pred_check
      _
    $region43: #{tpu_custom_call.1} parent=1 // pred_check_branch
      %105 = sbr.rel (0) target = $region45
    $region44: #{tpu_custom_call.1} parent=1 // pred_region
      %106 = dma.done [#allocation11], 4096
    $region45: #{tpu_custom_call.1} parent=1 // pred_fallthru
      _
    // Predicated region
    $region46: #{tpu_custom_call.1} parent=1 // pred_check
      _
    $region47: #{tpu_custom_call.1} parent=1 // pred_check_branch
      %108 = sbr.rel (0) target = $region49
    $region48: #{tpu_custom_call.1} parent=1 // pred_region
      %109 = dma.done [#allocation11], 512
    $region49: #{tpu_custom_call.1} parent=1 // pred_fallthru
      _
    // Predicated region
    $region50: #{tpu_custom_call.1} parent=1 // pred_check
      _
    $region51: #{tpu_custom_call.1} parent=1 // pred_check_branch
      %111 = sbr.rel (0) target = $region53
    $region52: #{tpu_custom_call.1} parent=1 // pred_region
      %112 = dma.done [#allocation14], 512
    $region53: #{tpu_custom_call.1} parent=1 // pred_fallthru
      _
    %p114 = scmp.eq.s32.totalorder 0, 0
    // Predicated region
    $region54: #{tpu_custom_call.1} parent=1 // pred_check
      %p115 = pneg %p114
    $region55: #{tpu_custom_call.1} parent=1 // pred_check_branch
      %117 = sbr.rel (%p115) target = $region57
    $region56: #{tpu_custom_call.1} parent=1 // pred_region
      %v118 = vld [vmem:[#allocation12] sm:$0xff]
      %v119 = vld [vmem:[#allocation12 + $0x8] sm:$0xff]
      %v120 = vld [vmem:[#allocation12 + $0x10] sm:$0xff]
      %v121 = vld [vmem:[#allocation12 + $0x18] sm:$0xff]
      %122 = vst [vmem:[#allocation2] sm:$0xff] %v118
      %123 = vst [vmem:[#allocation2 + $0x8] sm:$0xff] %v119
      %124 = vst [vmem:[#allocation2 + $0x10] sm:$0xff] %v120
      %125 = vst [vmem:[#allocation2 + $0x18] sm:$0xff] %v121
      %v126 = vld [vmem:[#allocation13] sm:$0xff]
      %v127 = vld [vmem:[#allocation13 + $0x8] sm:$0xff]
      %v128 = vld [vmem:[#allocation13 + $0x10] sm:$0xff]
      %v129 = vld [vmem:[#allocation13 + $0x18] sm:$0xff]
      %130 = vst [vmem:[#allocation3] sm:$0xff] %v126
      %131 = vst [vmem:[#allocation3 + $0x8] sm:$0xff] %v127
      %132 = vst [vmem:[#allocation3 + $0x10] sm:$0xff] %v128
      %133 = vst [vmem:[#allocation3 + $0x18] sm:$0xff] %v129
    $region57: #{tpu_custom_call.1} parent=1 // pred_fallthru
      _
    %v134 = vld [vmem:[#allocation7] sm:$0xff]
    %v135 = vld [vmem:[#allocation7 + $0x8] sm:$0xff]
    %v136 = vld [vmem:[#allocation7 + $0x10] sm:$0xff]
    %v137 = vld [vmem:[#allocation7 + $0x18] sm:$0xff]
    %v138 = vld [vmem:[#allocation7 + $0x20] sm:$0xff]
    %v139 = vld [vmem:[#allocation7 + $0x28] sm:$0xff]
    %v140 = vld [vmem:[#allocation7 + $0x30] sm:$0xff]
    %v141 = vld [vmem:[#allocation7 + $0x38] sm:$0xff]
    %v142 = vld [vmem:[#allocation7 + $0x40] sm:$0xff]
    %v143 = vld [vmem:[#allocation7 + $0x48] sm:$0xff]
    %v144 = vld [vmem:[#allocation7 + $0x50] sm:$0xff]
    %v145 = vld [vmem:[#allocation7 + $0x58] sm:$0xff]
    %v146 = vld [vmem:[#allocation7 + $0x60] sm:$0xff]
    %v147 = vld [vmem:[#allocation7 + $0x68] sm:$0xff]
    %v148 = vld [vmem:[#allocation7 + $0x70] sm:$0xff]
    %v149 = vld [vmem:[#allocation7 + $0x78] sm:$0xff]
    %v150 = vld [vmem:[#allocation7 + $0x80] sm:$0xff]
    %v151 = vld [vmem:[#allocation7 + $0x88] sm:$0xff]
    %v152 = vld [vmem:[#allocation7 + $0x90] sm:$0xff]
    %v153 = vld [vmem:[#allocation7 + $0x98] sm:$0xff]
    %v154 = vld [vmem:[#allocation7 + $0xa0] sm:$0xff]
    %v155 = vld [vmem:[#allocation7 + $0xa8] sm:$0xff]
    %v156 = vld [vmem:[#allocation7 + $0xb0] sm:$0xff]
    %v157 = vld [vmem:[#allocation7 + $0xb8] sm:$0xff]
    %v158 = vld [vmem:[#allocation7 + $0xc0] sm:$0xff]
    %v159 = vld [vmem:[#allocation7 + $0xc8] sm:$0xff]
    %v160 = vld [vmem:[#allocation7 + $0xd0] sm:$0xff]
    %v161 = vld [vmem:[#allocation7 + $0xd8] sm:$0xff]
    %v162 = vld [vmem:[#allocation7 + $0xe0] sm:$0xff]
    %v163 = vld [vmem:[#allocation7 + $0xe8] sm:$0xff]
    %v164 = vld [vmem:[#allocation7 + $0xf0] sm:$0xff]
    %v165 = vld [vmem:[#allocation7 + $0xf8] sm:$0xff]
    %v166 = vld [vmem:[#allocation9] sm:$0xff]
    %v167 = vld [vmem:[#allocation9 + $0x8] sm:$0xff]
    %v168 = vld [vmem:[#allocation9 + $0x10] sm:$0xff]
    %v169 = vld [vmem:[#allocation9 + $0x18] sm:$0xff]
    %v170 = vld [vmem:[#allocation9 + $0x20] sm:$0xff]
    %v171 = vld [vmem:[#allocation9 + $0x28] sm:$0xff]
    %v172 = vld [vmem:[#allocation9 + $0x30] sm:$0xff]
    %v173 = vld [vmem:[#allocation9 + $0x38] sm:$0xff]
    %v174 = vld [vmem:[#allocation9 + $0x40] sm:$0xff]
    %v175 = vld [vmem:[#allocation9 + $0x48] sm:$0xff]
    %v176 = vld [vmem:[#allocation9 + $0x50] sm:$0xff]
    %v177 = vld [vmem:[#allocation9 + $0x58] sm:$0xff]
    %v178 = vld [vmem:[#allocation9 + $0x60] sm:$0xff]
    %v179 = vld [vmem:[#allocation9 + $0x68] sm:$0xff]
    %v180 = vld [vmem:[#allocation9 + $0x70] sm:$0xff]
    %v181 = vld [vmem:[#allocation9 + $0x78] sm:$0xff]
    %v182 = vld [vmem:[#allocation9 + $0x80] sm:$0xff]
    %v183 = vld [vmem:[#allocation9 + $0x88] sm:$0xff]
    %v184 = vld [vmem:[#allocation9 + $0x90] sm:$0xff]
    %v185 = vld [vmem:[#allocation9 + $0x98] sm:$0xff]
    %v186 = vld [vmem:[#allocation9 + $0xa0] sm:$0xff]
    %v187 = vld [vmem:[#allocation9 + $0xa8] sm:$0xff]
    %v188 = vld [vmem:[#allocation9 + $0xb0] sm:$0xff]
    %v189 = vld [vmem:[#allocation9 + $0xb8] sm:$0xff]
    %v190 = vld [vmem:[#allocation9 + $0xc0] sm:$0xff]
    %v191 = vld [vmem:[#allocation9 + $0xc8] sm:$0xff]
    %v192 = vld [vmem:[#allocation9 + $0xd0] sm:$0xff]
    %v193 = vld [vmem:[#allocation9 + $0xd8] sm:$0xff]
    %v194 = vld [vmem:[#allocation9 + $0xe0] sm:$0xff]
    %v195 = vld [vmem:[#allocation9 + $0xe8] sm:$0xff]
    %v196 = vld [vmem:[#allocation9 + $0xf0] sm:$0xff]
    %v197 = vld [vmem:[#allocation9 + $0xf8] sm:$0xff]
    %v198 = vld [vmem:[#allocation10] sm:$0xff]
    %v199 = vld [vmem:[#allocation10 + $0x8] sm:$0xff]
    %v200 = vld [vmem:[#allocation10 + $0x10] sm:$0xff]
    %v201 = vld [vmem:[#allocation10 + $0x18] sm:$0xff]
    %v202 = vld [vmem:[#allocation10 + $0x20] sm:$0xff]
    %v203 = vld [vmem:[#allocation10 + $0x28] sm:$0xff]
    %v204 = vld [vmem:[#allocation10 + $0x30] sm:$0xff]
    %v205 = vld [vmem:[#allocation10 + $0x38] sm:$0xff]
    %v206 = vld [vmem:[#allocation10 + $0x40] sm:$0xff]
    %v207 = vld [vmem:[#allocation10 + $0x48] sm:$0xff]
    %v208 = vld [vmem:[#allocation10 + $0x50] sm:$0xff]
    %v209 = vld [vmem:[#allocation10 + $0x58] sm:$0xff]
    %v210 = vld [vmem:[#allocation10 + $0x60] sm:$0xff]
    %v211 = vld [vmem:[#allocation10 + $0x68] sm:$0xff]
    %v212 = vld [vmem:[#allocation10 + $0x70] sm:$0xff]
    %v213 = vld [vmem:[#allocation10 + $0x78] sm:$0xff]
    %v214 = vld [vmem:[#allocation10 + $0x80] sm:$0xff]
    %v215 = vld [vmem:[#allocation10 + $0x88] sm:$0xff]
    %v216 = vld [vmem:[#allocation10 + $0x90] sm:$0xff]
    %v217 = vld [vmem:[#allocation10 + $0x98] sm:$0xff]
    %v218 = vld [vmem:[#allocation10 + $0xa0] sm:$0xff]
    %v219 = vld [vmem:[#allocation10 + $0xa8] sm:$0xff]
    %v220 = vld [vmem:[#allocation10 + $0xb0] sm:$0xff]
    %v221 = vld [vmem:[#allocation10 + $0xb8] sm:$0xff]
    %v222 = vld [vmem:[#allocation10 + $0xc0] sm:$0xff]
    %v223 = vld [vmem:[#allocation10 + $0xc8] sm:$0xff]
    %v224 = vld [vmem:[#allocation10 + $0xd0] sm:$0xff]
    %v225 = vld [vmem:[#allocation10 + $0xd8] sm:$0xff]
    %v226 = vld [vmem:[#allocation10 + $0xe0] sm:$0xff]
    %v227 = vld [vmem:[#allocation10 + $0xe8] sm:$0xff]
    %v228 = vld [vmem:[#allocation10 + $0xf0] sm:$0xff]
    %v229 = vld [vmem:[#allocation10 + $0xf8] sm:$0xff]
    %v230 = vld [vmem:[%s4] sm:$0xf]
    %v232 = vlaneseq
    %v233 = vshrl.u32 %v232, 7
    %v234 = vsub.s32 0, %v233
    %v235 = vrot.slane %v230, %v234
    %v236 = vlaneseq
    %v237 = vshrl.u32 %v236, 7
    %v238 = vsub.s32 1, %v237
    %v239 = vrot.slane %v230, %v238
    %v240 = vlaneseq
    %v241 = vshrl.u32 %v240, 7
    %v242 = vsub.s32 2, %v241
    %v243 = vrot.slane %v230, %v242
    %v244 = vlaneseq
    %v245 = vshrl.u32 %v244, 7
    %v246 = vsub.s32 3, %v245
    %v247 = vrot.slane %v230, %v246
    %v252 = vld [vmem:[#allocation2] sm:$0xff]
    %v253 = vld [vmem:[#allocation2 + $0x8] sm:$0xff]
    %v254 = vld [vmem:[#allocation3] sm:$0xff]
    %v255 = vld [vmem:[#allocation3 + $0x8] sm:$0xff]
    %s256 = scalar_lea.vmem [#allocation2], 16
    %v257 = vld [vmem:[%s256] sm:$0xff]
    %v258 = vld [vmem:[%s256 + $0x8] sm:$0xff]
    %s259 = scalar_lea.vmem [#allocation3], 16
    %v260 = vld [vmem:[%s259] sm:$0xff]
    %v261 = vld [vmem:[%s259 + $0x8] sm:$0xff]
    %s262 = smul.u32 0, 4
    %s263 = smul.addr %s262, 8
    %s264 = scalar_lea.vmem [#allocation4], %s263
    %v265 = vld [vmem:[%s264] sm:$0xff]
    %v266 = vld [vmem:[%s264 + $0x8] sm:$0xff]
    %v267 = vld [vmem:[%s264 + $0x10] sm:$0xff]
    %v268 = vld [vmem:[%s264 + $0x18] sm:$0xff]
    %v269 = vld [vmem:[%s264 + $0x20] sm:$0xff]
    %v270 = vld [vmem:[%s264 + $0x28] sm:$0xff]
    %v271 = vld [vmem:[%s264 + $0x30] sm:$0xff]
    %v272 = vld [vmem:[%s264 + $0x38] sm:$0xff]
    %v273 = vpack.c.bf16 %v253, %v252
    %v306 = vunpack.c.l.b16 %v134
    %v307 = vunpack.c.h.b16 %v134
    %v308 = vunpack.c.l.b16 %v135
    %v309 = vunpack.c.h.b16 %v135
    %v310 = vunpack.c.l.b16 %v136
    %v311 = vunpack.c.h.b16 %v136
    %v312 = vunpack.c.l.b16 %v137
    %v313 = vunpack.c.h.b16 %v137
    %v314 = vunpack.c.l.b16 %v138
    %v315 = vunpack.c.h.b16 %v138
    %v316 = vunpack.c.l.b16 %v139
    %v317 = vunpack.c.h.b16 %v139
    %v318 = vunpack.c.l.b16 %v140
    %v319 = vunpack.c.h.b16 %v140
    %v320 = vunpack.c.l.b16 %v141
    %v321 = vunpack.c.h.b16 %v141
    %v322 = vunpack.c.l.b16 %v142
    %v323 = vunpack.c.h.b16 %v142
    %v324 = vunpack.c.l.b16 %v143
    %v325 = vunpack.c.h.b16 %v143
    %v326 = vunpack.c.l.b16 %v144
    %v327 = vunpack.c.h.b16 %v144
    %v328 = vunpack.c.l.b16 %v145
    %v329 = vunpack.c.h.b16 %v145
    %v330 = vunpack.c.l.b16 %v146
    %v331 = vunpack.c.h.b16 %v146
    %v332 = vunpack.c.l.b16 %v147
    %v333 = vunpack.c.h.b16 %v147
    %v334 = vunpack.c.l.b16 %v148
    %v335 = vunpack.c.h.b16 %v148
    %v336 = vunpack.c.l.b16 %v149
    %v337 = vunpack.c.h.b16 %v149
    %v338 = vunpack.c.l.b16 %v150
    %v339 = vunpack.c.h.b16 %v150
    %v340 = vunpack.c.l.b16 %v151
    %v341 = vunpack.c.h.b16 %v151
    %v342 = vunpack.c.l.b16 %v152
    %v343 = vunpack.c.h.b16 %v152
    %v344 = vunpack.c.l.b16 %v153
    %v345 = vunpack.c.h.b16 %v153
    %v346 = vunpack.c.l.b16 %v154
    %v347 = vunpack.c.h.b16 %v154
    %v348 = vunpack.c.l.b16 %v155
    %v349 = vunpack.c.h.b16 %v155
    %v350 = vunpack.c.l.b16 %v156
    %v351 = vunpack.c.h.b16 %v156
    %v352 = vunpack.c.l.b16 %v157
    %v353 = vunpack.c.h.b16 %v157
    %v354 = vunpack.c.l.b16 %v158
    %v355 = vunpack.c.h.b16 %v158
    %v356 = vunpack.c.l.b16 %v159
    %v357 = vunpack.c.h.b16 %v159
    %v358 = vunpack.c.l.b16 %v160
    %v359 = vunpack.c.h.b16 %v160
    %v360 = vunpack.c.l.b16 %v161
    %v361 = vunpack.c.h.b16 %v161
    %v362 = vunpack.c.l.b16 %v162
    %v363 = vunpack.c.h.b16 %v162
    %v364 = vunpack.c.l.b16 %v163
    %v365 = vunpack.c.h.b16 %v163
    %v366 = vunpack.c.l.b16 %v164
    %v367 = vunpack.c.h.b16 %v164
    %v368 = vunpack.c.l.b16 %v165
    %v369 = vunpack.c.h.b16 %v165
    %v370 = vpack.c.b16 %v310, %v306
    %v371 = vpack.c.b16 %v311, %v307
    %v372 = vpack.c.b16 %v312, %v308
    %v373 = vpack.c.b16 %v313, %v309
    %v374 = vpack.c.b16 %v318, %v314
    %v375 = vpack.c.b16 %v319, %v315
    %v376 = vpack.c.b16 %v320, %v316
    %v377 = vpack.c.b16 %v321, %v317
    %v378 = vpack.c.b16 %v326, %v322
    %v379 = vpack.c.b16 %v327, %v323
    %v380 = vpack.c.b16 %v328, %v324
    %v381 = vpack.c.b16 %v329, %v325
    %v382 = vpack.c.b16 %v334, %v330
    %v383 = vpack.c.b16 %v335, %v331
    %v384 = vpack.c.b16 %v336, %v332
    %v385 = vpack.c.b16 %v337, %v333
    %v386 = vpack.c.b16 %v342, %v338
    %v387 = vpack.c.b16 %v343, %v339
    %v388 = vpack.c.b16 %v344, %v340
    %v389 = vpack.c.b16 %v345, %v341
    %v390 = vpack.c.b16 %v350, %v346
    %v391 = vpack.c.b16 %v351, %v347
    %v392 = vpack.c.b16 %v352, %v348
    %v393 = vpack.c.b16 %v353, %v349
    %v394 = vpack.c.b16 %v358, %v354
    %v395 = vpack.c.b16 %v359, %v355
    %v396 = vpack.c.b16 %v360, %v356
    %v397 = vpack.c.b16 %v361, %v357
    %v398 = vpack.c.b16 %v366, %v362
    %v399 = vpack.c.b16 %v367, %v363
    %v400 = vpack.c.b16 %v368, %v364
    %v401 = vpack.c.b16 %v369, %v365
    %434 = vmatprep.subr.bf16.mxu0 %v399
    %435 = vmatpush1.bf16.msra.mxu0 %v398
    %436 = vmatprep.subr.bf16.mxu0 %v395
    %437 = vmatpush1.bf16.msra.mxu0 %v394
    %438 = vmatprep.subr.bf16.mxu0 %v391
    %439 = vmatpush1.bf16.msra.mxu0 %v390
    %440 = vmatprep.subr.bf16.mxu0 %v387
    %441 = vmatpush1.bf16.msra.mxu0 %v386
    %442 = vmatprep.subr.bf16.mxu0 %v383
    %443 = vmatpush1.bf16.msra.mxu0 %v382
    %444 = vmatprep.subr.bf16.mxu0 %v379
    %445 = vmatpush1.bf16.msra.mxu0 %v378
    %446 = vmatprep.subr.bf16.mxu0 %v375
    %447 = vmatpush1.bf16.msra.mxu0 %v374
    %448 = vmatprep.subr.bf16.mxu0 %v371
    %449 = vmatpush1.bf16.msra.mxu0 %v370
    %450 = vmatprep.subr.bf16.mxu0 0
    %451 = vmatpush2.bf16.msra.mxu0 0
    %452 = vmatprep.subr.bf16.mxu0 0
    %453 = vmatpush2.bf16.msra.mxu0 0
    %454 = vmatprep.subr.bf16.mxu0 0
    %455 = vmatpush2.bf16.msra.mxu0 0
    %456 = vmatprep.subr.bf16.mxu0 0
    %457 = vmatpush2.bf16.msra.mxu0 0
    %458 = vmatprep.subr.bf16.mxu0 0
    %459 = vmatpush2.bf16.msra.mxu0 0
    %460 = vmatprep.subr.bf16.mxu0 0
    %461 = vmatpush2.bf16.msra.mxu0 0
    %462 = vmatprep.subr.bf16.mxu0 0
    %463 = vmatpush2.bf16.msra.mxu0 0
    %464 = vmatprep.subr.bf16.mxu0 0
    %465 = vmatpush2.bf16.msra.mxu0 0
    %466 = vmatprep.mubr.bf16.mxu0 0
    %467 = vmatmul.mubr.bf16.gmra.mxu0 %v273
    %v468 = vpop.f32.mrf.mxu0
    %v469 = vadd.f32 0.0, %v468
    %v470 = vpop.f32.mrf.mxu0
    %v471 = vadd.f32 0.0, %v470
    %v472 = vpop.f32.mrf.mxu0
    %v473 = vadd.f32 0.0, %v472
    %v474 = vpop.f32.mrf.mxu0
    %v475 = vadd.f32 0.0, %v474
    %476 = vdwg.mxu0
    %477 = vmatprep.subr.bf16.mxu0 %v401
    %478 = vmatpush1.bf16.msra.mxu0 %v400
    %479 = vmatprep.subr.bf16.mxu0 %v397
    %480 = vmatpush1.bf16.msra.mxu0 %v396
    %481 = vmatprep.subr.bf16.mxu0 %v393
    %482 = vmatpush1.bf16.msra.mxu0 %v392
    %483 = vmatprep.subr.bf16.mxu0 %v389
    %484 = vmatpush1.bf16.msra.mxu0 %v388
    %485 = vmatprep.subr.bf16.mxu0 %v385
    %486 = vmatpush1.bf16.msra.mxu0 %v384
    %487 = vmatprep.subr.bf16.mxu0 %v381
    %488 = vmatpush1.bf16.msra.mxu0 %v380
    %489 = vmatprep.subr.bf16.mxu0 %v377
    %490 = vmatpush1.bf16.msra.mxu0 %v376
    %491 = vmatprep.subr.bf16.mxu0 %v373
    %492 = vmatpush1.bf16.msra.mxu0 %v372
    %493 = vmatprep.subr.bf16.mxu0 0
    %494 = vmatpush2.bf16.msra.mxu0 0
    %495 = vmatprep.subr.bf16.mxu0 0
    %496 = vmatpush2.bf16.msra.mxu0 0
    %497 = vmatprep.subr.bf16.mxu0 0
    %498 = vmatpush2.bf16.msra.mxu0 0
    %499 = vmatprep.subr.bf16.mxu0 0
    %500 = vmatpush2.bf16.msra.mxu0 0
    %501 = vmatprep.subr.bf16.mxu0 0
    %502 = vmatpush2.bf16.msra.mxu0 0
    %503 = vmatprep.subr.bf16.mxu0 0
    %504 = vmatpush2.bf16.msra.mxu0 0
    %505 = vmatprep.subr.bf16.mxu0 0
    %506 = vmatpush2.bf16.msra.mxu0 0
    %507 = vmatprep.subr.bf16.mxu0 0
    %508 = vmatpush2.bf16.msra.mxu0 0
    %509 = vmatprep.mubr.bf16.mxu0 0
    %510 = vmatmul.mubr.bf16.gmra.mxu0 %v273
    %v511 = vpop.f32.mrf.mxu0
    %v512 = vadd.f32 0.0, %v511
    %v513 = vpop.f32.mrf.mxu0
    %v514 = vadd.f32 0.0, %v513
    %v515 = vpop.f32.mrf.mxu0
    %v516 = vadd.f32 0.0, %v515
    %v517 = vpop.f32.mrf.mxu0
    %v518 = vadd.f32 0.0, %v517
    %519 = vdwg.mxu0
    %v520 = vadd.f32 %v265, %v469
    %v521 = vadd.f32 %v266, %v471
    %v522 = vadd.f32 %v267, %v512
    %v523 = vadd.f32 %v268, %v514
    %v524 = vadd.f32 %v269, %v473
    %v525 = vadd.f32 %v270, %v475
    %v526 = vadd.f32 %v271, %v516
    %v527 = vadd.f32 %v272, %v518
    %v528 = vxor.u32 %v520, 2147483648
    %v529 = vxor.u32 %v521, 2147483648
    %v530 = vxor.u32 %v524, 2147483648
    %v531 = vxor.u32 %v525, 2147483648
    %v532 = vmul.f32 %v528, 1.442695
    %v533 = vpow.pop %v532
    %v534 = vmul.f32 %v529, 1.442695
    %v535 = vpow.pop %v534
    %v536 = vmul.f32 %v530, 1.442695
    %v537 = vpow.pop %v536
    %v538 = vmul.f32 %v531, 1.442695
    %v539 = vpow.pop %v538
    %v540 = vadd.f32 %v533, 1.0
    %v541 = vadd.f32 %v535, 1.0
    %v542 = vadd.f32 %v537, 1.0
    %v543 = vadd.f32 %v539, 1.0
    %v544 = vrcp.pop %v540
    %v545 = vmul.f32 1.0, %v544
    %v546 = vrcp.pop %v541
    %v547 = vmul.f32 1.0, %v546
    %v548 = vrcp.pop %v542
    %v549 = vmul.f32 1.0, %v548
    %v550 = vrcp.pop %v543
    %v551 = vmul.f32 1.0, %v550
    %v552 = vtanh.pop %v522
    %v553 = vtanh.pop %v526
    %v554 = vxor.u32 %v523, 2147483648
    %v555 = vxor.u32 %v527, 2147483648
    %v556 = vmul.f32 %v554, 1.442695
    %v557 = vpow.pop %v556
    %v558 = vmul.f32 %v555, 1.442695
    %v559 = vpow.pop %v558
    %v560 = vadd.f32 %v557, 1.0
    %v561 = vadd.f32 %v559, 1.0
    %v562 = vrcp.pop %v560
    %v563 = vmul.f32 1.0, %v562
    %v564 = vrcp.pop %v561
    %v565 = vmul.f32 1.0, %v564
    %v566 = vmul.f32 %v547, %v254
    %v567 = vmul.f32 %v551, %v255
    %v568 = vmul.f32 %v545, %v552
    %v569 = vmul.f32 %v549, %v553
    %v570 = vadd.f32 %v566, %v568
    %v571 = vadd.f32 %v567, %v569
    %v572 = vtanh.pop %v570
    %v573 = vtanh.pop %v571
    %v574 = vmul.f32 %v563, %v572
    %v575 = vmul.f32 %v565, %v573
    %v576 = vpack.c.bf16 %v575, %v574
    %v577 = vpack.c.bf16 %v258, %v257
    %v610 = vunpack.c.l.b16 %v198
    %v611 = vunpack.c.h.b16 %v198
    %v612 = vunpack.c.l.b16 %v199
    %v613 = vunpack.c.h.b16 %v199
    %v614 = vunpack.c.l.b16 %v200
    %v615 = vunpack.c.h.b16 %v200
    %v616 = vunpack.c.l.b16 %v201
    %v617 = vunpack.c.h.b16 %v201
    %v618 = vunpack.c.l.b16 %v202
    %v619 = vunpack.c.h.b16 %v202
    %v620 = vunpack.c.l.b16 %v203
    %v621 = vunpack.c.h.b16 %v203
    %v622 = vunpack.c.l.b16 %v204
    %v623 = vunpack.c.h.b16 %v204
    %v624 = vunpack.c.l.b16 %v205
    %v625 = vunpack.c.h.b16 %v205
    %v626 = vunpack.c.l.b16 %v206
    %v627 = vunpack.c.h.b16 %v206
    %v628 = vunpack.c.l.b16 %v207
    %v629 = vunpack.c.h.b16 %v207
    %v630 = vunpack.c.l.b16 %v208
    %v631 = vunpack.c.h.b16 %v208
    %v632 = vunpack.c.l.b16 %v209
    %v633 = vunpack.c.h.b16 %v209
    %v634 = vunpack.c.l.b16 %v210
    %v635 = vunpack.c.h.b16 %v210
    %v636 = vunpack.c.l.b16 %v211
    %v637 = vunpack.c.h.b16 %v211
    %v638 = vunpack.c.l.b16 %v212
    %v639 = vunpack.c.h.b16 %v212
    %v640 = vunpack.c.l.b16 %v213
    %v641 = vunpack.c.h.b16 %v213
    %v642 = vunpack.c.l.b16 %v214
    %v643 = vunpack.c.h.b16 %v214
    %v644 = vunpack.c.l.b16 %v215
    %v645 = vunpack.c.h.b16 %v215
    %v646 = vunpack.c.l.b16 %v216
    %v647 = vunpack.c.h.b16 %v216
    %v648 = vunpack.c.l.b16 %v217
    %v649 = vunpack.c.h.b16 %v217
    %v650 = vunpack.c.l.b16 %v218
    %v651 = vunpack.c.h.b16 %v218
    %v652 = vunpack.c.l.b16 %v219
    %v653 = vunpack.c.h.b16 %v219
    %v654 = vunpack.c.l.b16 %v220
    %v655 = vunpack.c.h.b16 %v220
    %v656 = vunpack.c.l.b16 %v221
    %v657 = vunpack.c.h.b16 %v221
    %v658 = vunpack.c.l.b16 %v222
    %v659 = vunpack.c.h.b16 %v222
    %v660 = vunpack.c.l.b16 %v223
    %v661 = vunpack.c.h.b16 %v223
    %v662 = vunpack.c.l.b16 %v224
    %v663 = vunpack.c.h.b16 %v224
    %v664 = vunpack.c.l.b16 %v225
    %v665 = vunpack.c.h.b16 %v225
    %v666 = vunpack.c.l.b16 %v226
    %v667 = vunpack.c.h.b16 %v226
    %v668 = vunpack.c.l.b16 %v227
    %v669 = vunpack.c.h.b16 %v227
    %v670 = vunpack.c.l.b16 %v228
    %v671 = vunpack.c.h.b16 %v228
    %v672 = vunpack.c.l.b16 %v229
    %v673 = vunpack.c.h.b16 %v229
    %v674 = vpack.c.b16 %v614, %v610
    %v675 = vpack.c.b16 %v615, %v611
    %v676 = vpack.c.b16 %v616, %v612
    %v677 = vpack.c.b16 %v617, %v613
    %v678 = vpack.c.b16 %v622, %v618
    %v679 = vpack.c.b16 %v623, %v619
    %v680 = vpack.c.b16 %v624, %v620
    %v681 = vpack.c.b16 %v625, %v621
    %v682 = vpack.c.b16 %v630, %v626
    %v683 = vpack.c.b16 %v631, %v627
    %v684 = vpack.c.b16 %v632, %v628
    %v685 = vpack.c.b16 %v633, %v629
    %v686 = vpack.c.b16 %v638, %v634
    %v687 = vpack.c.b16 %v639, %v635
    %v688 = vpack.c.b16 %v640, %v636
    %v689 = vpack.c.b16 %v641, %v637
    %v690 = vpack.c.b16 %v646, %v642
    %v691 = vpack.c.b16 %v647, %v643
    %v692 = vpack.c.b16 %v648, %v644
    %v693 = vpack.c.b16 %v649, %v645
    %v694 = vpack.c.b16 %v654, %v650
    %v695 = vpack.c.b16 %v655, %v651
    %v696 = vpack.c.b16 %v656, %v652
    %v697 = vpack.c.b16 %v657, %v653
    %v698 = vpack.c.b16 %v662, %v658
    %v699 = vpack.c.b16 %v663, %v659
    %v700 = vpack.c.b16 %v664, %v660
    %v701 = vpack.c.b16 %v665, %v661
    %v702 = vpack.c.b16 %v670, %v666
    %v703 = vpack.c.b16 %v671, %v667
    %v704 = vpack.c.b16 %v672, %v668
    %v705 = vpack.c.b16 %v673, %v669
    %738 = vmatprep.subr.bf16.mxu0 %v703
    %739 = vmatpush1.bf16.msra.mxu0 %v702
    %740 = vmatprep.subr.bf16.mxu0 %v699
    %741 = vmatpush1.bf16.msra.mxu0 %v698
    %742 = vmatprep.subr.bf16.mxu0 %v695
    %743 = vmatpush1.bf16.msra.mxu0 %v694
    %744 = vmatprep.subr.bf16.mxu0 %v691
    %745 = vmatpush1.bf16.msra.mxu0 %v690
    %746 = vmatprep.subr.bf16.mxu0 %v687
    %747 = vmatpush1.bf16.msra.mxu0 %v686
    %748 = vmatprep.subr.bf16.mxu0 %v683
    %749 = vmatpush1.bf16.msra.mxu0 %v682
    %750 = vmatprep.subr.bf16.mxu0 %v679
    %751 = vmatpush1.bf16.msra.mxu0 %v678
    %752 = vmatprep.subr.bf16.mxu0 %v675
    %753 = vmatpush1.bf16.msra.mxu0 %v674
    %754 = vmatprep.subr.bf16.mxu0 0
    %755 = vmatpush2.bf16.msra.mxu0 0
    %756 = vmatprep.subr.bf16.mxu0 0
    %757 = vmatpush2.bf16.msra.mxu0 0
    %758 = vmatprep.subr.bf16.mxu0 0
    %759 = vmatpush2.bf16.msra.mxu0 0
    %760 = vmatprep.subr.bf16.mxu0 0
    %761 = vmatpush2.bf16.msra.mxu0 0
    %762 = vmatprep.subr.bf16.mxu0 0
    %763 = vmatpush2.bf16.msra.mxu0 0
    %764 = vmatprep.subr.bf16.mxu0 0
    %765 = vmatpush2.bf16.msra.mxu0 0
    %766 = vmatprep.subr.bf16.mxu0 0
    %767 = vmatpush2.bf16.msra.mxu0 0
    %768 = vmatprep.subr.bf16.mxu0 0
    %769 = vmatpush2.bf16.msra.mxu0 0
    %770 = vmatprep.mubr.bf16.mxu0 0
    %771 = vmatmul.mubr.bf16.gmra.mxu0 %v577
    %v772 = vpop.f32.mrf.mxu0
    %v773 = vadd.f32 0.0, %v772
    %v774 = vpop.f32.mrf.mxu0
    %v775 = vadd.f32 0.0, %v774
    %v776 = vpop.f32.mrf.mxu0
    %v777 = vadd.f32 0.0, %v776
    %v778 = vpop.f32.mrf.mxu0
    %v779 = vadd.f32 0.0, %v778
    %780 = vdwg.mxu0
    %781 = vmatprep.subr.bf16.mxu0 %v705
    %782 = vmatpush1.bf16.msra.mxu0 %v704
    %783 = vmatprep.subr.bf16.mxu0 %v701
    %784 = vmatpush1.bf16.msra.mxu0 %v700
    %785 = vmatprep.subr.bf16.mxu0 %v697
    %786 = vmatpush1.bf16.msra.mxu0 %v696
    %787 = vmatprep.subr.bf16.mxu0 %v693
    %788 = vmatpush1.bf16.msra.mxu0 %v692
    %789 = vmatprep.subr.bf16.mxu0 %v689
    %790 = vmatpush1.bf16.msra.mxu0 %v688
    %791 = vmatprep.subr.bf16.mxu0 %v685
    %792 = vmatpush1.bf16.msra.mxu0 %v684
    %793 = vmatprep.subr.bf16.mxu0 %v681
    %794 = vmatpush1.bf16.msra.mxu0 %v680
    %795 = vmatprep.subr.bf16.mxu0 %v677
    %796 = vmatpush1.bf16.msra.mxu0 %v676
    %797 = vmatprep.subr.bf16.mxu0 0
    %798 = vmatpush2.bf16.msra.mxu0 0
    %799 = vmatprep.subr.bf16.mxu0 0
    %800 = vmatpush2.bf16.msra.mxu0 0
    %801 = vmatprep.subr.bf16.mxu0 0
    %802 = vmatpush2.bf16.msra.mxu0 0
    %803 = vmatprep.subr.bf16.mxu0 0
    %804 = vmatpush2.bf16.msra.mxu0 0
    %805 = vmatprep.subr.bf16.mxu0 0
    %806 = vmatpush2.bf16.msra.mxu0 0
    %807 = vmatprep.subr.bf16.mxu0 0
    %808 = vmatpush2.bf16.msra.mxu0 0
    %809 = vmatprep.subr.bf16.mxu0 0
    %810 = vmatpush2.bf16.msra.mxu0 0
    %811 = vmatprep.subr.bf16.mxu0 0
    %812 = vmatpush2.bf16.msra.mxu0 0
    %813 = vmatprep.mubr.bf16.mxu0 0
    %814 = vmatmul.mubr.bf16.gmra.mxu0 %v577
    %v815 = vpop.f32.mrf.mxu0
    %v816 = vadd.f32 0.0, %v815
    %v817 = vpop.f32.mrf.mxu0
    %v818 = vadd.f32 0.0, %v817
    %v819 = vpop.f32.mrf.mxu0
    %v820 = vadd.f32 0.0, %v819
    %v821 = vpop.f32.mrf.mxu0
    %v822 = vadd.f32 0.0, %v821
    %823 = vdwg.mxu0
    %v856 = vunpack.c.l.b16 %v166
    %v857 = vunpack.c.h.b16 %v166
    %v858 = vunpack.c.l.b16 %v167
    %v859 = vunpack.c.h.b16 %v167
    %v860 = vunpack.c.l.b16 %v168
    %v861 = vunpack.c.h.b16 %v168
    %v862 = vunpack.c.l.b16 %v169
    %v863 = vunpack.c.h.b16 %v169
    %v864 = vunpack.c.l.b16 %v170
    %v865 = vunpack.c.h.b16 %v170
    %v866 = vunpack.c.l.b16 %v171
    %v867 = vunpack.c.h.b16 %v171
    %v868 = vunpack.c.l.b16 %v172
    %v869 = vunpack.c.h.b16 %v172
    %v870 = vunpack.c.l.b16 %v173
    %v871 = vunpack.c.h.b16 %v173
    %v872 = vunpack.c.l.b16 %v174
    %v873 = vunpack.c.h.b16 %v174
    %v874 = vunpack.c.l.b16 %v175
    %v875 = vunpack.c.h.b16 %v175
    %v876 = vunpack.c.l.b16 %v176
    %v877 = vunpack.c.h.b16 %v176
    %v878 = vunpack.c.l.b16 %v177
    %v879 = vunpack.c.h.b16 %v177
    %v880 = vunpack.c.l.b16 %v178
    %v881 = vunpack.c.h.b16 %v178
    %v882 = vunpack.c.l.b16 %v179
    %v883 = vunpack.c.h.b16 %v179
    %v884 = vunpack.c.l.b16 %v180
    %v885 = vunpack.c.h.b16 %v180
    %v886 = vunpack.c.l.b16 %v181
    %v887 = vunpack.c.h.b16 %v181
    %v888 = vunpack.c.l.b16 %v182
    %v889 = vunpack.c.h.b16 %v182
    %v890 = vunpack.c.l.b16 %v183
    %v891 = vunpack.c.h.b16 %v183
    %v892 = vunpack.c.l.b16 %v184
    %v893 = vunpack.c.h.b16 %v184
    %v894 = vunpack.c.l.b16 %v185
    %v895 = vunpack.c.h.b16 %v185
    %v896 = vunpack.c.l.b16 %v186
    %v897 = vunpack.c.h.b16 %v186
    %v898 = vunpack.c.l.b16 %v187
    %v899 = vunpack.c.h.b16 %v187
    %v900 = vunpack.c.l.b16 %v188
    %v901 = vunpack.c.h.b16 %v188
    %v902 = vunpack.c.l.b16 %v189
    %v903 = vunpack.c.h.b16 %v189
    %v904 = vunpack.c.l.b16 %v190
    %v905 = vunpack.c.h.b16 %v190
    %v906 = vunpack.c.l.b16 %v191
    %v907 = vunpack.c.h.b16 %v191
    %v908 = vunpack.c.l.b16 %v192
    %v909 = vunpack.c.h.b16 %v192
    %v910 = vunpack.c.l.b16 %v193
    %v911 = vunpack.c.h.b16 %v193
    %v912 = vunpack.c.l.b16 %v194
    %v913 = vunpack.c.h.b16 %v194
    %v914 = vunpack.c.l.b16 %v195
    %v915 = vunpack.c.h.b16 %v195
    %v916 = vunpack.c.l.b16 %v196
    %v917 = vunpack.c.h.b16 %v196
    %v918 = vunpack.c.l.b16 %v197
    %v919 = vunpack.c.h.b16 %v197
    %v920 = vpack.c.b16 %v860, %v856
    %v921 = vpack.c.b16 %v861, %v857
    %v922 = vpack.c.b16 %v862, %v858
    %v923 = vpack.c.b16 %v863, %v859
    %v924 = vpack.c.b16 %v868, %v864
    %v925 = vpack.c.b16 %v869, %v865
    %v926 = vpack.c.b16 %v870, %v866
    %v927 = vpack.c.b16 %v871, %v867
    %v928 = vpack.c.b16 %v876, %v872
    %v929 = vpack.c.b16 %v877, %v873
    %v930 = vpack.c.b16 %v878, %v874
    %v931 = vpack.c.b16 %v879, %v875
    %v932 = vpack.c.b16 %v884, %v880
    %v933 = vpack.c.b16 %v885, %v881
    %v934 = vpack.c.b16 %v886, %v882
    %v935 = vpack.c.b16 %v887, %v883
    %v936 = vpack.c.b16 %v892, %v888
    %v937 = vpack.c.b16 %v893, %v889
    %v938 = vpack.c.b16 %v894, %v890
    %v939 = vpack.c.b16 %v895, %v891
    %v940 = vpack.c.b16 %v900, %v896
    %v941 = vpack.c.b16 %v901, %v897
    %v942 = vpack.c.b16 %v902, %v898
    %v943 = vpack.c.b16 %v903, %v899
    %v944 = vpack.c.b16 %v908, %v904
    %v945 = vpack.c.b16 %v909, %v905
    %v946 = vpack.c.b16 %v910, %v906
    %v947 = vpack.c.b16 %v911, %v907
    %v948 = vpack.c.b16 %v916, %v912
    %v949 = vpack.c.b16 %v917, %v913
    %v950 = vpack.c.b16 %v918, %v914
    %v951 = vpack.c.b16 %v919, %v915
    %984 = vmatprep.subr.bf16.mxu0 %v949
    %985 = vmatpush1.bf16.msra.mxu0 %v948
    %986 = vmatprep.subr.bf16.mxu0 %v945
    %987 = vmatpush1.bf16.msra.mxu0 %v944
    %988 = vmatprep.subr.bf16.mxu0 %v941
    %989 = vmatpush1.bf16.msra.mxu0 %v940
    %990 = vmatprep.subr.bf16.mxu0 %v937
    %991 = vmatpush1.bf16.msra.mxu0 %v936
    %992 = vmatprep.subr.bf16.mxu0 %v933
    %993 = vmatpush1.bf16.msra.mxu0 %v932
    %994 = vmatprep.subr.bf16.mxu0 %v929
    %995 = vmatpush1.bf16.msra.mxu0 %v928
    %996 = vmatprep.subr.bf16.mxu0 %v925
    %997 = vmatpush1.bf16.msra.mxu0 %v924
    %998 = vmatprep.subr.bf16.mxu0 %v921
    %999 = vmatpush1.bf16.msra.mxu0 %v920
    %1000 = vmatprep.subr.bf16.mxu0 0
    %1001 = vmatpush2.bf16.msra.mxu0 0
    %1002 = vmatprep.subr.bf16.mxu0 0
    %1003 = vmatpush2.bf16.msra.mxu0 0
    %1004 = vmatprep.subr.bf16.mxu0 0
    %1005 = vmatpush2.bf16.msra.mxu0 0
    %1006 = vmatprep.subr.bf16.mxu0 0
    %1007 = vmatpush2.bf16.msra.mxu0 0
    %1008 = vmatprep.subr.bf16.mxu0 0
    %1009 = vmatpush2.bf16.msra.mxu0 0
    %1010 = vmatprep.subr.bf16.mxu0 0
    %1011 = vmatpush2.bf16.msra.mxu0 0
    %1012 = vmatprep.subr.bf16.mxu0 0
    %1013 = vmatpush2.bf16.msra.mxu0 0
    %1014 = vmatprep.subr.bf16.mxu0 0
    %1015 = vmatpush2.bf16.msra.mxu0 0
    %1016 = vmatprep.mubr.bf16.mxu0 0
    %1017 = vmatmul.mubr.bf16.gmra.mxu0 %v576
    %v1018 = vpop.f32.mrf.mxu0
    %v1019 = vadd.f32 %v773, %v1018
    %v1020 = vpop.f32.mrf.mxu0
    %v1021 = vadd.f32 %v775, %v1020
    %v1022 = vpop.f32.mrf.mxu0
    %v1023 = vadd.f32 %v777, %v1022
    %v1024 = vpop.f32.mrf.mxu0
    %v1025 = vadd.f32 %v779, %v1024
    %1026 = vdwg.mxu0
    %1027 = vmatprep.subr.bf16.mxu0 %v951
    %1028 = vmatpush1.bf16.msra.mxu0 %v950
    %1029 = vmatprep.subr.bf16.mxu0 %v947
    %1030 = vmatpush1.bf16.msra.mxu0 %v946
    %1031 = vmatprep.subr.bf16.mxu0 %v943
    %1032 = vmatpush1.bf16.msra.mxu0 %v942
    %1033 = vmatprep.subr.bf16.mxu0 %v939
    %1034 = vmatpush1.bf16.msra.mxu0 %v938
    %1035 = vmatprep.subr.bf16.mxu0 %v935
    %1036 = vmatpush1.bf16.msra.mxu0 %v934
    %1037 = vmatprep.subr.bf16.mxu0 %v931
    %1038 = vmatpush1.bf16.msra.mxu0 %v930
    %1039 = vmatprep.subr.bf16.mxu0 %v927
    %1040 = vmatpush1.bf16.msra.mxu0 %v926
    %1041 = vmatprep.subr.bf16.mxu0 %v923
    %1042 = vmatpush1.bf16.msra.mxu0 %v922
    %1043 = vmatprep.subr.bf16.mxu0 0
    %1044 = vmatpush2.bf16.msra.mxu0 0
    %1045 = vmatprep.subr.bf16.mxu0 0
    %1046 = vmatpush2.bf16.msra.mxu0 0
    %1047 = vmatprep.subr.bf16.mxu0 0
    %1048 = vmatpush2.bf16.msra.mxu0 0
    %1049 = vmatprep.subr.bf16.mxu0 0
    %1050 = vmatpush2.bf16.msra.mxu0 0
    %1051 = vmatprep.subr.bf16.mxu0 0
    %1052 = vmatpush2.bf16.msra.mxu0 0
    %1053 = vmatprep.subr.bf16.mxu0 0
    %1054 = vmatpush2.bf16.msra.mxu0 0
    %1055 = vmatprep.subr.bf16.mxu0 0
    %1056 = vmatpush2.bf16.msra.mxu0 0
    %1057 = vmatprep.subr.bf16.mxu0 0
    %1058 = vmatpush2.bf16.msra.mxu0 0
    %1059 = vmatprep.mubr.bf16.mxu0 0
    %1060 = vmatmul.mubr.bf16.gmra.mxu0 %v576
    %v1061 = vpop.f32.mrf.mxu0
    %v1062 = vadd.f32 %v816, %v1061
    %v1063 = vpop.f32.mrf.mxu0
    %v1064 = vadd.f32 %v818, %v1063
    %v1065 = vpop.f32.mrf.mxu0
    %v1066 = vadd.f32 %v820, %v1065
    %v1067 = vpop.f32.mrf.mxu0
    %v1068 = vadd.f32 %v822, %v1067
    %1069 = vdwg.mxu0
    %v1070 = vadd.f32 %v1019, %v235
    %v1071 = vadd.f32 %v1021, %v239
    %v1072 = vadd.f32 %v1062, %v243
    %v1073 = vadd.f32 %v1064, %v247
    %v1074 = vadd.f32 %v1023, %v235
    %v1075 = vadd.f32 %v1025, %v239
    %v1076 = vadd.f32 %v1066, %v243
    %v1077 = vadd.f32 %v1068, %v247
    %v1078 = vxor.u32 %v1070, 2147483648
    %v1079 = vxor.u32 %v1071, 2147483648
    %v1080 = vxor.u32 %v1074, 2147483648
    %v1081 = vxor.u32 %v1075, 2147483648
    %v1082 = vmul.f32 %v1078, 1.442695
    %v1083 = vpow.pop %v1082
    %v1084 = vmul.f32 %v1079, 1.442695
    %v1085 = vpow.pop %v1084
    %v1086 = vmul.f32 %v1080, 1.442695
    %v1087 = vpow.pop %v1086
    %v1088 = vmul.f32 %v1081, 1.442695
    %v1089 = vpow.pop %v1088
    %v1090 = vadd.f32 %v1083, 1.0
    %v1091 = vadd.f32 %v1085, 1.0
    %v1092 = vadd.f32 %v1087, 1.0
    %v1093 = vadd.f32 %v1089, 1.0
    %v1094 = vrcp.pop %v1090
    %v1095 = vmul.f32 1.0, %v1094
    %v1096 = vrcp.pop %v1091
    %v1097 = vmul.f32 1.0, %v1096
    %v1098 = vrcp.pop %v1092
    %v1099 = vmul.f32 1.0, %v1098
    %v1100 = vrcp.pop %v1093
    %v1101 = vmul.f32 1.0, %v1100
    %v1102 = vtanh.pop %v1072
    %v1103 = vtanh.pop %v1076
    %v1104 = vxor.u32 %v1073, 2147483648
    %v1105 = vxor.u32 %v1077, 2147483648
    %v1106 = vmul.f32 %v1104, 1.442695
    %v1107 = vpow.pop %v1106
    %v1108 = vmul.f32 %v1105, 1.442695
    %v1109 = vpow.pop %v1108
    %v1110 = vadd.f32 %v1107, 1.0
    %v1111 = vadd.f32 %v1109, 1.0
    %v1112 = vrcp.pop %v1110
    %v1113 = vmul.f32 1.0, %v1112
    %v1114 = vrcp.pop %v1111
    %v1115 = vmul.f32 1.0, %v1114
    %v1116 = vmul.f32 %v1097, %v260
    %v1117 = vmul.f32 %v1101, %v261
    %v1118 = vmul.f32 %v1095, %v1102
    %v1119 = vmul.f32 %v1099, %v1103
    %v1120 = vadd.f32 %v1116, %v1118
    %v1121 = vadd.f32 %v1117, %v1119
    %v1122 = vtanh.pop %v1120
    %v1123 = vtanh.pop %v1121
    %v1124 = vmul.f32 %v1113, %v1122
    %v1125 = vmul.f32 %v1115, %v1123
    %v1126 = vpack.c.bf16 %v1125, %v1124
    %v1128 = vunpack.c.l.b16 %v1126
    %v1129 = vunpack.c.h.b16 %v1126
    %v1130 = vpack.c.b16 %v1128, %v1128
    %v1131 = vpack.c.b16 %v1129, %v1129
    %1134 = vst [vmem:[#allocation15] sm:$0xf] %v1130
    %1135 = vst [vmem:[#allocation15 + $0x4] sm:$0xf] %v1131
    %s1136 = smul.u32 2, 4
    %s1137 = smul.addr %s1136, 8
    %s1138 = scalar_lea.vmem [#allocation4], %s1137
    %v1139 = vld [vmem:[%s1138] sm:$0xff]
    %v1140 = vld [vmem:[%s1138 + $0x8] sm:$0xff]
    %v1141 = vld [vmem:[%s1138 + $0x10] sm:$0xff]
    %v1142 = vld [vmem:[%s1138 + $0x18] sm:$0xff]
    %v1143 = vld [vmem:[%s1138 + $0x20] sm:$0xff]
    %v1144 = vld [vmem:[%s1138 + $0x28] sm:$0xff]
    %v1145 = vld [vmem:[%s1138 + $0x30] sm:$0xff]
    %v1146 = vld [vmem:[%s1138 + $0x38] sm:$0xff]
    %1147 = vmatprep.subr.bf16.mxu0 %v399
    %1148 = vmatpush1.bf16.msra.mxu0 %v398
    %1149 = vmatprep.subr.bf16.mxu0 %v395
    %1150 = vmatpush1.bf16.msra.mxu0 %v394
    %1151 = vmatprep.subr.bf16.mxu0 %v391
    %1152 = vmatpush1.bf16.msra.mxu0 %v390
    %1153 = vmatprep.subr.bf16.mxu0 %v387
    %1154 = vmatpush1.bf16.msra.mxu0 %v386
    %1155 = vmatprep.subr.bf16.mxu0 %v383
    %1156 = vmatpush1.bf16.msra.mxu0 %v382
    %1157 = vmatprep.subr.bf16.mxu0 %v379
    %1158 = vmatpush1.bf16.msra.mxu0 %v378
    %1159 = vmatprep.subr.bf16.mxu0 %v375
    %1160 = vmatpush1.bf16.msra.mxu0 %v374
    %1161 = vmatprep.subr.bf16.mxu0 %v371
    %1162 = vmatpush1.bf16.msra.mxu0 %v370
    %1163 = vmatprep.subr.bf16.mxu0 0
    %1164 = vmatpush2.bf16.msra.mxu0 0
    %1165 = vmatprep.subr.bf16.mxu0 0
    %1166 = vmatpush2.bf16.msra.mxu0 0
    %1167 = vmatprep.subr.bf16.mxu0 0
    %1168 = vmatpush2.bf16.msra.mxu0 0
    %1169 = vmatprep.subr.bf16.mxu0 0
    %1170 = vmatpush2.bf16.msra.mxu0 0
    %1171 = vmatprep.subr.bf16.mxu0 0
    %1172 = vmatpush2.bf16.msra.mxu0 0
    %1173 = vmatprep.subr.bf16.mxu0 0
    %1174 = vmatpush2.bf16.msra.mxu0 0
    %1175 = vmatprep.subr.bf16.mxu0 0
    %1176 = vmatpush2.bf16.msra.mxu0 0
    %1177 = vmatprep.subr.bf16.mxu0 0
    %1178 = vmatpush2.bf16.msra.mxu0 0
    %1179 = vmatprep.mubr.bf16.mxu0 0
    %1180 = vmatmul.mubr.bf16.gmra.mxu0 %v576
    %v1181 = vpop.f32.mrf.mxu0
    %v1182 = vadd.f32 0.0, %v1181
    %v1183 = vpop.f32.mrf.mxu0
    %v1184 = vadd.f32 0.0, %v1183
    %v1185 = vpop.f32.mrf.mxu0
    %v1186 = vadd.f32 0.0, %v1185
    %v1187 = vpop.f32.mrf.mxu0
    %v1188 = vadd.f32 0.0, %v1187
    %1189 = vdwg.mxu0
    %1190 = vmatprep.subr.bf16.mxu0 %v401
    %1191 = vmatpush1.bf16.msra.mxu0 %v400
    %1192 = vmatprep.subr.bf16.mxu0 %v397
    %1193 = vmatpush1.bf16.msra.mxu0 %v396
    %1194 = vmatprep.subr.bf16.mxu0 %v393
    %1195 = vmatpush1.bf16.msra.mxu0 %v392
    %1196 = vmatprep.subr.bf16.mxu0 %v389
    %1197 = vmatpush1.bf16.msra.mxu0 %v388
    %1198 = vmatprep.subr.bf16.mxu0 %v385
    %1199 = vmatpush1.bf16.msra.mxu0 %v384
    %1200 = vmatprep.subr.bf16.mxu0 %v381
    %1201 = vmatpush1.bf16.msra.mxu0 %v380
    %1202 = vmatprep.subr.bf16.mxu0 %v377
    %1203 = vmatpush1.bf16.msra.mxu0 %v376
    %1204 = vmatprep.subr.bf16.mxu0 %v373
    %1205 = vmatpush1.bf16.msra.mxu0 %v372
    %1206 = vmatprep.subr.bf16.mxu0 0
    %1207 = vmatpush2.bf16.msra.mxu0 0
    %1208 = vmatprep.subr.bf16.mxu0 0
    %1209 = vmatpush2.bf16.msra.mxu0 0
    %1210 = vmatprep.subr.bf16.mxu0 0
    %1211 = vmatpush2.bf16.msra.mxu0 0
    %1212 = vmatprep.subr.bf16.mxu0 0
    %1213 = vmatpush2.bf16.msra.mxu0 0
    %1214 = vmatprep.subr.bf16.mxu0 0
    %1215 = vmatpush2.bf16.msra.mxu0 0
    %1216 = vmatprep.subr.bf16.mxu0 0
    %1217 = vmatpush2.bf16.msra.mxu0 0
    %1218 = vmatprep.subr.bf16.mxu0 0
    %1219 = vmatpush2.bf16.msra.mxu0 0
    %1220 = vmatprep.subr.bf16.mxu0 0
    %1221 = vmatpush2.bf16.msra.mxu0 0
    %1222 = vmatprep.mubr.bf16.mxu0 0
    %1223 = vmatmul.mubr.bf16.gmra.mxu0 %v576
    %v1224 = vpop.f32.mrf.mxu0
    %v1225 = vadd.f32 0.0, %v1224
    %v1226 = vpop.f32.mrf.mxu0
    %v1227 = vadd.f32 0.0, %v1226
    %v1228 = vpop.f32.mrf.mxu0
    %v1229 = vadd.f32 0.0, %v1228
    %v1230 = vpop.f32.mrf.mxu0
    %v1231 = vadd.f32 0.0, %v1230
    %1232 = vdwg.mxu0
    %v1233 = vadd.f32 %v1139, %v1182
    %v1234 = vadd.f32 %v1140, %v1184
    %v1235 = vadd.f32 %v1141, %v1225
    %v1236 = vadd.f32 %v1142, %v1227
    %v1237 = vadd.f32 %v1143, %v1186
    %v1238 = vadd.f32 %v1144, %v1188
    %v1239 = vadd.f32 %v1145, %v1229
    %v1240 = vadd.f32 %v1146, %v1231
    %v1241 = vxor.u32 %v1233, 2147483648
    %v1242 = vxor.u32 %v1234, 2147483648
    %v1243 = vxor.u32 %v1237, 2147483648
    %v1244 = vxor.u32 %v1238, 2147483648
    %v1245 = vmul.f32 %v1241, 1.442695
    %v1246 = vpow.pop %v1245
    %v1247 = vmul.f32 %v1242, 1.442695
    %v1248 = vpow.pop %v1247
    %v1249 = vmul.f32 %v1243, 1.442695
    %v1250 = vpow.pop %v1249
    %v1251 = vmul.f32 %v1244, 1.442695
    %v1252 = vpow.pop %v1251
    %v1253 = vadd.f32 %v1246, 1.0
    %v1254 = vadd.f32 %v1248, 1.0
    %v1255 = vadd.f32 %v1250, 1.0
    %v1256 = vadd.f32 %v1252, 1.0
    %v1257 = vrcp.pop %v1253
    %v1258 = vmul.f32 1.0, %v1257
    %v1259 = vrcp.pop %v1254
    %v1260 = vmul.f32 1.0, %v1259
    %v1261 = vrcp.pop %v1255
    %v1262 = vmul.f32 1.0, %v1261
    %v1263 = vrcp.pop %v1256
    %v1264 = vmul.f32 1.0, %v1263
    %v1265 = vtanh.pop %v1235
    %v1266 = vtanh.pop %v1239
    %v1267 = vxor.u32 %v1236, 2147483648
    %v1268 = vxor.u32 %v1240, 2147483648
    %v1269 = vmul.f32 %v1267, 1.442695
    %v1270 = vpow.pop %v1269
    %v1271 = vmul.f32 %v1268, 1.442695
    %v1272 = vpow.pop %v1271
    %v1273 = vadd.f32 %v1270, 1.0
    %v1274 = vadd.f32 %v1272, 1.0
    %v1275 = vrcp.pop %v1273
    %v1276 = vmul.f32 1.0, %v1275
    %v1277 = vrcp.pop %v1274
    %v1278 = vmul.f32 1.0, %v1277
    %v1279 = vmul.f32 %v1260, %v570
    %v1280 = vmul.f32 %v1264, %v571
    %v1281 = vmul.f32 %v1258, %v1265
    %v1282 = vmul.f32 %v1262, %v1266
    %v1283 = vadd.f32 %v1279, %v1281
    %v1284 = vadd.f32 %v1280, %v1282
    %v1285 = vtanh.pop %v1283
    %v1286 = vtanh.pop %v1284
    %v1287 = vmul.f32 %v1276, %v1285
    %v1288 = vmul.f32 %v1278, %v1286
    %v1289 = vpack.c.bf16 %v1288, %v1287
    %1290 = vmatprep.subr.bf16.mxu0 %v703
    %1291 = vmatpush1.bf16.msra.mxu0 %v702
    %1292 = vmatprep.subr.bf16.mxu0 %v699
    %1293 = vmatpush1.bf16.msra.mxu0 %v698
    %1294 = vmatprep.subr.bf16.mxu0 %v695
    %1295 = vmatpush1.bf16.msra.mxu0 %v694
    %1296 = vmatprep.subr.bf16.mxu0 %v691
    %1297 = vmatpush1.bf16.msra.mxu0 %v690
    %1298 = vmatprep.subr.bf16.mxu0 %v687
    %1299 = vmatpush1.bf16.msra.mxu0 %v686
    %1300 = vmatprep.subr.bf16.mxu0 %v683
    %1301 = vmatpush1.bf16.msra.mxu0 %v682
    %1302 = vmatprep.subr.bf16.mxu0 %v679
    %1303 = vmatpush1.bf16.msra.mxu0 %v678
    %1304 = vmatprep.subr.bf16.mxu0 %v675
    %1305 = vmatpush1.bf16.msra.mxu0 %v674
    %1306 = vmatprep.subr.bf16.mxu0 0
    %1307 = vmatpush2.bf16.msra.mxu0 0
    %1308 = vmatprep.subr.bf16.mxu0 0
    %1309 = vmatpush2.bf16.msra.mxu0 0
    %1310 = vmatprep.subr.bf16.mxu0 0
    %1311 = vmatpush2.bf16.msra.mxu0 0
    %1312 = vmatprep.subr.bf16.mxu0 0
    %1313 = vmatpush2.bf16.msra.mxu0 0
    %1314 = vmatprep.subr.bf16.mxu0 0
    %1315 = vmatpush2.bf16.msra.mxu0 0
    %1316 = vmatprep.subr.bf16.mxu0 0
    %1317 = vmatpush2.bf16.msra.mxu0 0
    %1318 = vmatprep.subr.bf16.mxu0 0
    %1319 = vmatpush2.bf16.msra.mxu0 0
    %1320 = vmatprep.subr.bf16.mxu0 0
    %1321 = vmatpush2.bf16.msra.mxu0 0
    %1322 = vmatprep.mubr.bf16.mxu0 0
    %1323 = vmatmul.mubr.bf16.gmra.mxu0 %v1126
    %v1324 = vpop.f32.mrf.mxu0
    %v1325 = vadd.f32 0.0, %v1324
    %v1326 = vpop.f32.mrf.mxu0
    %v1327 = vadd.f32 0.0, %v1326
    %v1328 = vpop.f32.mrf.mxu0
    %v1329 = vadd.f32 0.0, %v1328
    %v1330 = vpop.f32.mrf.mxu0
    %v1331 = vadd.f32 0.0, %v1330
    %1332 = vdwg.mxu0
    %1333 = vmatprep.subr.bf16.mxu0 %v705
    %1334 = vmatpush1.bf16.msra.mxu0 %v704
    %1335 = vmatprep.subr.bf16.mxu0 %v701
    %1336 = vmatpush1.bf16.msra.mxu0 %v700
    %1337 = vmatprep.subr.bf16.mxu0 %v697
    %1338 = vmatpush1.bf16.msra.mxu0 %v696
    %1339 = vmatprep.subr.bf16.mxu0 %v693
    %1340 = vmatpush1.bf16.msra.mxu0 %v692
    %1341 = vmatprep.subr.bf16.mxu0 %v689
    %1342 = vmatpush1.bf16.msra.mxu0 %v688
    %1343 = vmatprep.subr.bf16.mxu0 %v685
    %1344 = vmatpush1.bf16.msra.mxu0 %v684
    %1345 = vmatprep.subr.bf16.mxu0 %v681
    %1346 = vmatpush1.bf16.msra.mxu0 %v680
    %1347 = vmatprep.subr.bf16.mxu0 %v677
    %1348 = vmatpush1.bf16.msra.mxu0 %v676
    %1349 = vmatprep.subr.bf16.mxu0 0
    %1350 = vmatpush2.bf16.msra.mxu0 0
    %1351 = vmatprep.subr.bf16.mxu0 0
    %1352 = vmatpush2.bf16.msra.mxu0 0
    %1353 = vmatprep.subr.bf16.mxu0 0
    %1354 = vmatpush2.bf16.msra.mxu0 0
    %1355 = vmatprep.subr.bf16.mxu0 0
    %1356 = vmatpush2.bf16.msra.mxu0 0
    %1357 = vmatprep.subr.bf16.mxu0 0
    %1358 = vmatpush2.bf16.msra.mxu0 0
    %1359 = vmatprep.subr.bf16.mxu0 0
    %1360 = vmatpush2.bf16.msra.mxu0 0
    %1361 = vmatprep.subr.bf16.mxu0 0
    %1362 = vmatpush2.bf16.msra.mxu0 0
    %1363 = vmatprep.subr.bf16.mxu0 0
    %1364 = vmatpush2.bf16.msra.mxu0 0
    %1365 = vmatprep.mubr.bf16.mxu0 0
    %1366 = vmatmul.mubr.bf16.gmra.mxu0 %v1126
    %v1367 = vpop.f32.mrf.mxu0
    %v1368 = vadd.f32 0.0, %v1367
    %v1369 = vpop.f32.mrf.mxu0
    %v1370 = vadd.f32 0.0, %v1369
    %v1371 = vpop.f32.mrf.mxu0
    %v1372 = vadd.f32 0.0, %v1371
    %v1373 = vpop.f32.mrf.mxu0
    %v1374 = vadd.f32 0.0, %v1373
    %1375 = vdwg.mxu0
    %1376 = vmatprep.subr.bf16.mxu0 %v949
    %1377 = vmatpush1.bf16.msra.mxu0 %v948
    %1378 = vmatprep.subr.bf16.mxu0 %v945
    %1379 = vmatpush1.bf16.msra.mxu0 %v944
    %1380 = vmatprep.subr.bf16.mxu0 %v941
    %1381 = vmatpush1.bf16.msra.mxu0 %v940
    %1382 = vmatprep.subr.bf16.mxu0 %v937
    %1383 = vmatpush1.bf16.msra.mxu0 %v936
    %1384 = vmatprep.subr.bf16.mxu0 %v933
    %1385 = vmatpush1.bf16.msra.mxu0 %v932
    %1386 = vmatprep.subr.bf16.mxu0 %v929
    %1387 = vmatpush1.bf16.msra.mxu0 %v928
    %1388 = vmatprep.subr.bf16.mxu0 %v925
    %1389 = vmatpush1.bf16.msra.mxu0 %v924
    %1390 = vmatprep.subr.bf16.mxu0 %v921
    %1391 = vmatpush1.bf16.msra.mxu0 %v920
    %1392 = vmatprep.subr.bf16.mxu0 0
    %1393 = vmatpush2.bf16.msra.mxu0 0
    %1394 = vmatprep.subr.bf16.mxu0 0
    %1395 = vmatpush2.bf16.msra.mxu0 0
    %1396 = vmatprep.subr.bf16.mxu0 0
    %1397 = vmatpush2.bf16.msra.mxu0 0
    %1398 = vmatprep.subr.bf16.mxu0 0
    %1399 = vmatpush2.bf16.msra.mxu0 0
    %1400 = vmatprep.subr.bf16.mxu0 0
    %1401 = vmatpush2.bf16.msra.mxu0 0
    %1402 = vmatprep.subr.bf16.mxu0 0
    %1403 = vmatpush2.bf16.msra.mxu0 0
    %1404 = vmatprep.subr.bf16.mxu0 0
    %1405 = vmatpush2.bf16.msra.mxu0 0
    %1406 = vmatprep.subr.bf16.mxu0 0
    %1407 = vmatpush2.bf16.msra.mxu0 0
    %1408 = vmatprep.mubr.bf16.mxu0 0
    %1409 = vmatmul.mubr.bf16.gmra.mxu0 %v1289
    %v1410 = vpop.f32.mrf.mxu0
    %v1411 = vadd.f32 %v1325, %v1410
    %v1412 = vpop.f32.mrf.mxu0
    %v1413 = vadd.f32 %v1327, %v1412
    %v1414 = vpop.f32.mrf.mxu0
    %v1415 = vadd.f32 %v1329, %v1414
    %v1416 = vpop.f32.mrf.mxu0
    %v1417 = vadd.f32 %v1331, %v1416
    %1418 = vdwg.mxu0
    %1419 = vmatprep.subr.bf16.mxu0 %v951
    %1420 = vmatpush1.bf16.msra.mxu0 %v950
    %1421 = vmatprep.subr.bf16.mxu0 %v947
    %1422 = vmatpush1.bf16.msra.mxu0 %v946
    %1423 = vmatprep.subr.bf16.mxu0 %v943
    %1424 = vmatpush1.bf16.msra.mxu0 %v942
    %1425 = vmatprep.subr.bf16.mxu0 %v939
    %1426 = vmatpush1.bf16.msra.mxu0 %v938
    %1427 = vmatprep.subr.bf16.mxu0 %v935
    %1428 = vmatpush1.bf16.msra.mxu0 %v934
    %1429 = vmatprep.subr.bf16.mxu0 %v931
    %1430 = vmatpush1.bf16.msra.mxu0 %v930
    %1431 = vmatprep.subr.bf16.mxu0 %v927
    %1432 = vmatpush1.bf16.msra.mxu0 %v926
    %1433 = vmatprep.subr.bf16.mxu0 %v923
    %1434 = vmatpush1.bf16.msra.mxu0 %v922
    %1435 = vmatprep.subr.bf16.mxu0 0
    %1436 = vmatpush2.bf16.msra.mxu0 0
    %1437 = vmatprep.subr.bf16.mxu0 0
    %1438 = vmatpush2.bf16.msra.mxu0 0
    %1439 = vmatprep.subr.bf16.mxu0 0
    %1440 = vmatpush2.bf16.msra.mxu0 0
    %1441 = vmatprep.subr.bf16.mxu0 0
    %1442 = vmatpush2.bf16.msra.mxu0 0
    %1443 = vmatprep.subr.bf16.mxu0 0
    %1444 = vmatpush2.bf16.msra.mxu0 0
    %1445 = vmatprep.subr.bf16.mxu0 0
    %1446 = vmatpush2.bf16.msra.mxu0 0
    %1447 = vmatprep.subr.bf16.mxu0 0
    %1448 = vmatpush2.bf16.msra.mxu0 0
    %1449 = vmatprep.subr.bf16.mxu0 0
    %1450 = vmatpush2.bf16.msra.mxu0 0
    %1451 = vmatprep.mubr.bf16.mxu0 0
    %1452 = vmatmul.mubr.bf16.gmra.mxu0 %v1289
    %v1453 = vpop.f32.mrf.mxu0
    %v1454 = vadd.f32 %v1368, %v1453
    %v1455 = vpop.f32.mrf.mxu0
    %v1456 = vadd.f32 %v1370, %v1455
    %v1457 = vpop.f32.mrf.mxu0
    %v1458 = vadd.f32 %v1372, %v1457
    %v1459 = vpop.f32.mrf.mxu0
    %v1460 = vadd.f32 %v1374, %v1459
    %1461 = vdwg.mxu0
    %v1462 = vadd.f32 %v1411, %v235
    %v1463 = vadd.f32 %v1413, %v239
    %v1464 = vadd.f32 %v1454, %v243
    %v1465 = vadd.f32 %v1456, %v247
    %v1466 = vadd.f32 %v1415, %v235
    %v1467 = vadd.f32 %v1417, %v239
    %v1468 = vadd.f32 %v1458, %v243
    %v1469 = vadd.f32 %v1460, %v247
    %v1470 = vxor.u32 %v1462, 2147483648
    %v1471 = vxor.u32 %v1463, 2147483648
    %v1472 = vxor.u32 %v1466, 2147483648
    %v1473 = vxor.u32 %v1467, 2147483648
    %v1474 = vmul.f32 %v1470, 1.442695
    %v1475 = vpow.pop %v1474
    %v1476 = vmul.f32 %v1471, 1.442695
    %v1477 = vpow.pop %v1476
    %v1478 = vmul.f32 %v1472, 1.442695
    %v1479 = vpow.pop %v1478
    %v1480 = vmul.f32 %v1473, 1.442695
    %v1481 = vpow.pop %v1480
    %v1482 = vadd.f32 %v1475, 1.0
    %v1483 = vadd.f32 %v1477, 1.0
    %v1484 = vadd.f32 %v1479, 1.0
    %v1485 = vadd.f32 %v1481, 1.0
    %v1486 = vrcp.pop %v1482
    %v1487 = vmul.f32 1.0, %v1486
    %v1488 = vrcp.pop %v1483
    %v1489 = vmul.f32 1.0, %v1488
    %v1490 = vrcp.pop %v1484
    %v1491 = vmul.f32 1.0, %v1490
    %v1492 = vrcp.pop %v1485
    %v1493 = vmul.f32 1.0, %v1492
    %v1494 = vtanh.pop %v1464
    %v1495 = vtanh.pop %v1468
    %v1496 = vxor.u32 %v1465, 2147483648
    %v1497 = vxor.u32 %v1469, 2147483648
    %v1498 = vmul.f32 %v1496, 1.442695
    %v1499 = vpow.pop %v1498
    %v1500 = vmul.f32 %v1497, 1.442695
    %v1501 = vpow.pop %v1500
    %v1502 = vadd.f32 %v1499, 1.0
    %v1503 = vadd.f32 %v1501, 1.0
    %v1504 = vrcp.pop %v1502
    %v1505 = vmul.f32 1.0, %v1504
    %v1506 = vrcp.pop %v1503
    %v1507 = vmul.f32 1.0, %v1506
    %v1508 = vmul.f32 %v1489, %v1120
    %v1509 = vmul.f32 %v1493, %v1121
    %v1510 = vmul.f32 %v1487, %v1494
    %v1511 = vmul.f32 %v1491, %v1495
    %v1512 = vadd.f32 %v1508, %v1510
    %v1513 = vadd.f32 %v1509, %v1511
    %v1514 = vtanh.pop %v1512
    %v1515 = vtanh.pop %v1513
    %v1516 = vmul.f32 %v1505, %v1514
    %v1517 = vmul.f32 %v1507, %v1515
    %v1518 = vpack.c.bf16 %v1517, %v1516
    %v1520 = vunpack.c.l.b16 %v1518
    %v1521 = vunpack.c.h.b16 %v1518
    %v1522 = vpack.c.b16 %v1520, %v1520
    %v1523 = vpack.c.b16 %v1521, %v1521
    %s1526 = scalar_lea.vmem [#allocation15], 8
    %1527 = vst [vmem:[%s1526] sm:$0xf] %v1522
    %1528 = vst [vmem:[%s1526 + $0x4] sm:$0xf] %v1523
    %s1529 = smul.u32 4, 4
    %s1530 = smul.addr %s1529, 8
    %s1531 = scalar_lea.vmem [#allocation4], %s1530
    %v1532 = vld [vmem:[%s1531] sm:$0xff]
    %v1533 = vld [vmem:[%s1531 + $0x8] sm:$0xff]
    %v1534 = vld [vmem:[%s1531 + $0x10] sm:$0xff]
    %v1535 = vld [vmem:[%s1531 + $0x18] sm:$0xff]
    %v1536 = vld [vmem:[%s1531 + $0x20] sm:$0xff]
    %v1537 = vld [vmem:[%s1531 + $0x28] sm:$0xff]
    %v1538 = vld [vmem:[%s1531 + $0x30] sm:$0xff]
    %v1539 = vld [vmem:[%s1531 + $0x38] sm:$0xff]
    %1540 = vmatprep.subr.bf16.mxu0 %v399
    %1541 = vmatpush1.bf16.msra.mxu0 %v398
    %1542 = vmatprep.subr.bf16.mxu0 %v395
    %1543 = vmatpush1.bf16.msra.mxu0 %v394
    %1544 = vmatprep.subr.bf16.mxu0 %v391
    %1545 = vmatpush1.bf16.msra.mxu0 %v390
    %1546 = vmatprep.subr.bf16.mxu0 %v387
    %1547 = vmatpush1.bf16.msra.mxu0 %v386
    %1548 = vmatprep.subr.bf16.mxu0 %v383
    %1549 = vmatpush1.bf16.msra.mxu0 %v382
    %1550 = vmatprep.subr.bf16.mxu0 %v379
    %1551 = vmatpush1.bf16.msra.mxu0 %v378
    %1552 = vmatprep.subr.bf16.mxu0 %v375
    %1553 = vmatpush1.bf16.msra.mxu0 %v374
    %1554 = vmatprep.subr.bf16.mxu0 %v371
    %1555 = vmatpush1.bf16.msra.mxu0 %v370
    %1556 = vmatprep.subr.bf16.mxu0 0
    %1557 = vmatpush2.bf16.msra.mxu0 0
    %1558 = vmatprep.subr.bf16.mxu0 0
    %1559 = vmatpush2.bf16.msra.mxu0 0
    %1560 = vmatprep.subr.bf16.mxu0 0
    %1561 = vmatpush2.bf16.msra.mxu0 0
    %1562 = vmatprep.subr.bf16.mxu0 0
    %1563 = vmatpush2.bf16.msra.mxu0 0
    %1564 = vmatprep.subr.bf16.mxu0 0
    %1565 = vmatpush2.bf16.msra.mxu0 0
    %1566 = vmatprep.subr.bf16.mxu0 0
    %1567 = vmatpush2.bf16.msra.mxu0 0
    %1568 = vmatprep.subr.bf16.mxu0 0
    %1569 = vmatpush2.bf16.msra.mxu0 0
    %1570 = vmatprep.subr.bf16.mxu0 0
    %1571 = vmatpush2.bf16.msra.mxu0 0
    %1572 = vmatprep.mubr.bf16.mxu0 0
    %1573 = vmatmul.mubr.bf16.gmra.mxu0 %v1289
    %v1574 = vpop.f32.mrf.mxu0
    %v1575 = vadd.f32 0.0, %v1574
    %v1576 = vpop.f32.mrf.mxu0
    %v1577 = vadd.f32 0.0, %v1576
    %v1578 = vpop.f32.mrf.mxu0
    %v1579 = vadd.f32 0.0, %v1578
    %v1580 = vpop.f32.mrf.mxu0
    %v1581 = vadd.f32 0.0, %v1580
    %1582 = vdwg.mxu0
    %1583 = vmatprep.subr.bf16.mxu0 %v401
    %1584 = vmatpush1.bf16.msra.mxu0 %v400
    %1585 = vmatprep.subr.bf16.mxu0 %v397
    %1586 = vmatpush1.bf16.msra.mxu0 %v396
    %1587 = vmatprep.subr.bf16.mxu0 %v393
    %1588 = vmatpush1.bf16.msra.mxu0 %v392
    %1589 = vmatprep.subr.bf16.mxu0 %v389
    %1590 = vmatpush1.bf16.msra.mxu0 %v388
    %1591 = vmatprep.subr.bf16.mxu0 %v385
    %1592 = vmatpush1.bf16.msra.mxu0 %v384
    %1593 = vmatprep.subr.bf16.mxu0 %v381
    %1594 = vmatpush1.bf16.msra.mxu0 %v380
    %1595 = vmatprep.subr.bf16.mxu0 %v377
    %1596 = vmatpush1.bf16.msra.mxu0 %v376
    %1597 = vmatprep.subr.bf16.mxu0 %v373
    %1598 = vmatpush1.bf16.msra.mxu0 %v372
    %1599 = vmatprep.subr.bf16.mxu0 0
    %1600 = vmatpush2.bf16.msra.mxu0 0
    %1601 = vmatprep.subr.bf16.mxu0 0
    %1602 = vmatpush2.bf16.msra.mxu0 0
    %1603 = vmatprep.subr.bf16.mxu0 0
    %1604 = vmatpush2.bf16.msra.mxu0 0
    %1605 = vmatprep.subr.bf16.mxu0 0
    %1606 = vmatpush2.bf16.msra.mxu0 0
    %1607 = vmatprep.subr.bf16.mxu0 0
    %1608 = vmatpush2.bf16.msra.mxu0 0
    %1609 = vmatprep.subr.bf16.mxu0 0
    %1610 = vmatpush2.bf16.msra.mxu0 0
    %1611 = vmatprep.subr.bf16.mxu0 0
    %1612 = vmatpush2.bf16.msra.mxu0 0
    %1613 = vmatprep.subr.bf16.mxu0 0
    %1614 = vmatpush2.bf16.msra.mxu0 0
    %1615 = vmatprep.mubr.bf16.mxu0 0
    %1616 = vmatmul.mubr.bf16.gmra.mxu0 %v1289
    %v1617 = vpop.f32.mrf.mxu0
    %v1618 = vadd.f32 0.0, %v1617
    %v1619 = vpop.f32.mrf.mxu0
    %v1620 = vadd.f32 0.0, %v1619
    %v1621 = vpop.f32.mrf.mxu0
    %v1622 = vadd.f32 0.0, %v1621
    %v1623 = vpop.f32.mrf.mxu0
    %v1624 = vadd.f32 0.0, %v1623
    %1625 = vdwg.mxu0
    %v1626 = vadd.f32 %v1532, %v1575
    %v1627 = vadd.f32 %v1533, %v1577
    %v1628 = vadd.f32 %v1534, %v1618
    %v1629 = vadd.f32 %v1535, %v1620
    %v1630 = vadd.f32 %v1536, %v1579
    %v1631 = vadd.f32 %v1537, %v1581
    %v1632 = vadd.f32 %v1538, %v1622
    %v1633 = vadd.f32 %v1539, %v1624
    %v1634 = vxor.u32 %v1626, 2147483648
    %v1635 = vxor.u32 %v1627, 2147483648
    %v1636 = vxor.u32 %v1630, 2147483648
    %v1637 = vxor.u32 %v1631, 2147483648
    %v1638 = vmul.f32 %v1634, 1.442695
    %v1639 = vpow.pop %v1638
    %v1640 = vmul.f32 %v1635, 1.442695
    %v1641 = vpow.pop %v1640
    %v1642 = vmul.f32 %v1636, 1.442695
    %v1643 = vpow.pop %v1642
    %v1644 = vmul.f32 %v1637, 1.442695
    %v1645 = vpow.pop %v1644
    %v1646 = vadd.f32 %v1639, 1.0
    %v1647 = vadd.f32 %v1641, 1.0
    %v1648 = vadd.f32 %v1643, 1.0
    %v1649 = vadd.f32 %v1645, 1.0
    %v1650 = vrcp.pop %v1646
    %v1651 = vmul.f32 1.0, %v1650
    %v1652 = vrcp.pop %v1647
    %v1653 = vmul.f32 1.0, %v1652
    %v1654 = vrcp.pop %v1648
    %v1655 = vmul.f32 1.0, %v1654
    %v1656 = vrcp.pop %v1649
    %v1657 = vmul.f32 1.0, %v1656
    %v1658 = vtanh.pop %v1628
    %v1659 = vtanh.pop %v1632
    %v1660 = vxor.u32 %v1629, 2147483648
    %v1661 = vxor.u32 %v1633, 2147483648
    %v1662 = vmul.f32 %v1660, 1.442695
    %v1663 = vpow.pop %v1662
    %v1664 = vmul.f32 %v1661, 1.442695
    %v1665 = vpow.pop %v1664
    %v1666 = vadd.f32 %v1663, 1.0
    %v1667 = vadd.f32 %v1665, 1.0
    %v1668 = vrcp.pop %v1666
    %v1669 = vmul.f32 1.0, %v1668
    %v1670 = vrcp.pop %v1667
    %v1671 = vmul.f32 1.0, %v1670
    %v1672 = vmul.f32 %v1653, %v1283
    %v1673 = vmul.f32 %v1657, %v1284
    %v1674 = vmul.f32 %v1651, %v1658
    %v1675 = vmul.f32 %v1655, %v1659
    %v1676 = vadd.f32 %v1672, %v1674
    %v1677 = vadd.f32 %v1673, %v1675
    %v1678 = vtanh.pop %v1676
    %v1679 = vtanh.pop %v1677
    %v1680 = vmul.f32 %v1669, %v1678
    %v1681 = vmul.f32 %v1671, %v1679
    %v1682 = vpack.c.bf16 %v1681, %v1680
    %1683 = vmatprep.subr.bf16.mxu0 %v703
    %1684 = vmatpush1.bf16.msra.mxu0 %v702
    %1685 = vmatprep.subr.bf16.mxu0 %v699
    %1686 = vmatpush1.bf16.msra.mxu0 %v698
    %1687 = vmatprep.subr.bf16.mxu0 %v695
    %1688 = vmatpush1.bf16.msra.mxu0 %v694
    %1689 = vmatprep.subr.bf16.mxu0 %v691
    %1690 = vmatpush1.bf16.msra.mxu0 %v690
    %1691 = vmatprep.subr.bf16.mxu0 %v687
    %1692 = vmatpush1.bf16.msra.mxu0 %v686
    %1693 = vmatprep.subr.bf16.mxu0 %v683
    %1694 = vmatpush1.bf16.msra.mxu0 %v682
    %1695 = vmatprep.subr.bf16.mxu0 %v679
    %1696 = vmatpush1.bf16.msra.mxu0 %v678
    %1697 = vmatprep.subr.bf16.mxu0 %v675
    %1698 = vmatpush1.bf16.msra.mxu0 %v674
    %1699 = vmatprep.subr.bf16.mxu0 0
    %1700 = vmatpush2.bf16.msra.mxu0 0
    %1701 = vmatprep.subr.bf16.mxu0 0
    %1702 = vmatpush2.bf16.msra.mxu0 0
    %1703 = vmatprep.subr.bf16.mxu0 0
    %1704 = vmatpush2.bf16.msra.mxu0 0
    %1705 = vmatprep.subr.bf16.mxu0 0
    %1706 = vmatpush2.bf16.msra.mxu0 0
    %1707 = vmatprep.subr.bf16.mxu0 0
    %1708 = vmatpush2.bf16.msra.mxu0 0
    %1709 = vmatprep.subr.bf16.mxu0 0
    %1710 = vmatpush2.bf16.msra.mxu0 0
    %1711 = vmatprep.subr.bf16.mxu0 0
    %1712 = vmatpush2.bf16.msra.mxu0 0
    %1713 = vmatprep.subr.bf16.mxu0 0
    %1714 = vmatpush2.bf16.msra.mxu0 0
    %1715 = vmatprep.mubr.bf16.mxu0 0
    %1716 = vmatmul.mubr.bf16.gmra.mxu0 %v1518
    %v1717 = vpop.f32.mrf.mxu0
    %v1718 = vadd.f32 0.0, %v1717
    %v1719 = vpop.f32.mrf.mxu0
    %v1720 = vadd.f32 0.0, %v1719
    %v1721 = vpop.f32.mrf.mxu0
    %v1722 = vadd.f32 0.0, %v1721
    %v1723 = vpop.f32.mrf.mxu0
    %v1724 = vadd.f32 0.0, %v1723
    %1725 = vdwg.mxu0
    %1726 = vmatprep.subr.bf16.mxu0 %v705
    %1727 = vmatpush1.bf16.msra.mxu0 %v704
    %1728 = vmatprep.subr.bf16.mxu0 %v701
    %1729 = vmatpush1.bf16.msra.mxu0 %v700
    %1730 = vmatprep.subr.bf16.mxu0 %v697
    %1731 = vmatpush1.bf16.msra.mxu0 %v696
    %1732 = vmatprep.subr.bf16.mxu0 %v693
    %1733 = vmatpush1.bf16.msra.mxu0 %v692
    %1734 = vmatprep.subr.bf16.mxu0 %v689
    %1735 = vmatpush1.bf16.msra.mxu0 %v688
    %1736 = vmatprep.subr.bf16.mxu0 %v685
    %1737 = vmatpush1.bf16.msra.mxu0 %v684
    %1738 = vmatprep.subr.bf16.mxu0 %v681
    %1739 = vmatpush1.bf16.msra.mxu0 %v680
    %1740 = vmatprep.subr.bf16.mxu0 %v677
    %1741 = vmatpush1.bf16.msra.mxu0 %v676
    %1742 = vmatprep.subr.bf16.mxu0 0
    %1743 = vmatpush2.bf16.msra.mxu0 0
    %1744 = vmatprep.subr.bf16.mxu0 0
    %1745 = vmatpush2.bf16.msra.mxu0 0
    %1746 = vmatprep.subr.bf16.mxu0 0
    %1747 = vmatpush2.bf16.msra.mxu0 0
    %1748 = vmatprep.subr.bf16.mxu0 0
    %1749 = vmatpush2.bf16.msra.mxu0 0
    %1750 = vmatprep.subr.bf16.mxu0 0
    %1751 = vmatpush2.bf16.msra.mxu0 0
    %1752 = vmatprep.subr.bf16.mxu0 0
    %1753 = vmatpush2.bf16.msra.mxu0 0
    %1754 = vmatprep.subr.bf16.mxu0 0
    %1755 = vmatpush2.bf16.msra.mxu0 0
    %1756 = vmatprep.subr.bf16.mxu0 0
    %1757 = vmatpush2.bf16.msra.mxu0 0
    %1758 = vmatprep.mubr.bf16.mxu0 0
    %1759 = vmatmul.mubr.bf16.gmra.mxu0 %v1518
    %v1760 = vpop.f32.mrf.mxu0
    %v1761 = vadd.f32 0.0, %v1760
    %v1762 = vpop.f32.mrf.mxu0
    %v1763 = vadd.f32 0.0, %v1762
    %v1764 = vpop.f32.mrf.mxu0
    %v1765 = vadd.f32 0.0, %v1764
    %v1766 = vpop.f32.mrf.mxu0
    %v1767 = vadd.f32 0.0, %v1766
    %1768 = vdwg.mxu0
    %1769 = vmatprep.subr.bf16.mxu0 %v949
    %1770 = vmatpush1.bf16.msra.mxu0 %v948
    %1771 = vmatprep.subr.bf16.mxu0 %v945
    %1772 = vmatpush1.bf16.msra.mxu0 %v944
    %1773 = vmatprep.subr.bf16.mxu0 %v941
    %1774 = vmatpush1.bf16.msra.mxu0 %v940
    %1775 = vmatprep.subr.bf16.mxu0 %v937
    %1776 = vmatpush1.bf16.msra.mxu0 %v936
    %1777 = vmatprep.subr.bf16.mxu0 %v933
    %1778 = vmatpush1.bf16.msra.mxu0 %v932
    %1779 = vmatprep.subr.bf16.mxu0 %v929
    %1780 = vmatpush1.bf16.msra.mxu0 %v928
    %1781 = vmatprep.subr.bf16.mxu0 %v925
    %1782 = vmatpush1.bf16.msra.mxu0 %v924
    %1783 = vmatprep.subr.bf16.mxu0 %v921
    %1784 = vmatpush1.bf16.msra.mxu0 %v920
    %1785 = vmatprep.subr.bf16.mxu0 0
    %1786 = vmatpush2.bf16.msra.mxu0 0
    %1787 = vmatprep.subr.bf16.mxu0 0
    %1788 = vmatpush2.bf16.msra.mxu0 0
    %1789 = vmatprep.subr.bf16.mxu0 0
    %1790 = vmatpush2.bf16.msra.mxu0 0
    %1791 = vmatprep.subr.bf16.mxu0 0
    %1792 = vmatpush2.bf16.msra.mxu0 0
    %1793 = vmatprep.subr.bf16.mxu0 0
    %1794 = vmatpush2.bf16.msra.mxu0 0
    %1795 = vmatprep.subr.bf16.mxu0 0
    %1796 = vmatpush2.bf16.msra.mxu0 0
    %1797 = vmatprep.subr.bf16.mxu0 0
    %1798 = vmatpush2.bf16.msra.mxu0 0
    %1799 = vmatprep.subr.bf16.mxu0 0
    %1800 = vmatpush2.bf16.msra.mxu0 0
    %1801 = vmatprep.mubr.bf16.mxu0 0
    %1802 = vmatmul.mubr.bf16.gmra.mxu0 %v1682
    %v1803 = vpop.f32.mrf.mxu0
    %v1804 = vadd.f32 %v1718, %v1803
    %v1805 = vpop.f32.mrf.mxu0
    %v1806 = vadd.f32 %v1720, %v1805
    %v1807 = vpop.f32.mrf.mxu0
    %v1808 = vadd.f32 %v1722, %v1807
    %v1809 = vpop.f32.mrf.mxu0
    %v1810 = vadd.f32 %v1724, %v1809
    %1811 = vdwg.mxu0
    %1812 = vmatprep.subr.bf16.mxu0 %v951
    %1813 = vmatpush1.bf16.msra.mxu0 %v950
    %1814 = vmatprep.subr.bf16.mxu0 %v947
    %1815 = vmatpush1.bf16.msra.mxu0 %v946
    %1816 = vmatprep.subr.bf16.mxu0 %v943
    %1817 = vmatpush1.bf16.msra.mxu0 %v942
    %1818 = vmatprep.subr.bf16.mxu0 %v939
    %1819 = vmatpush1.bf16.msra.mxu0 %v938
    %1820 = vmatprep.subr.bf16.mxu0 %v935
    %1821 = vmatpush1.bf16.msra.mxu0 %v934
    %1822 = vmatprep.subr.bf16.mxu0 %v931
    %1823 = vmatpush1.bf16.msra.mxu0 %v930
    %1824 = vmatprep.subr.bf16.mxu0 %v927
    %1825 = vmatpush1.bf16.msra.mxu0 %v926
    %1826 = vmatprep.subr.bf16.mxu0 %v923
    %1827 = vmatpush1.bf16.msra.mxu0 %v922
    %1828 = vmatprep.subr.bf16.mxu0 0
    %1829 = vmatpush2.bf16.msra.mxu0 0
    %1830 = vmatprep.subr.bf16.mxu0 0
    %1831 = vmatpush2.bf16.msra.mxu0 0
    %1832 = vmatprep.subr.bf16.mxu0 0
    %1833 = vmatpush2.bf16.msra.mxu0 0
    %1834 = vmatprep.subr.bf16.mxu0 0
    %1835 = vmatpush2.bf16.msra.mxu0 0
    %1836 = vmatprep.subr.bf16.mxu0 0
    %1837 = vmatpush2.bf16.msra.mxu0 0
    %1838 = vmatprep.subr.bf16.mxu0 0
    %1839 = vmatpush2.bf16.msra.mxu0 0
    %1840 = vmatprep.subr.bf16.mxu0 0
    %1841 = vmatpush2.bf16.msra.mxu0 0
    %1842 = vmatprep.subr.bf16.mxu0 0
    %1843 = vmatpush2.bf16.msra.mxu0 0
    %1844 = vmatprep.mubr.bf16.mxu0 0
    %1845 = vmatmul.mubr.bf16.gmra.mxu0 %v1682
    %v1846 = vpop.f32.mrf.mxu0
    %v1847 = vadd.f32 %v1761, %v1846
    %v1848 = vpop.f32.mrf.mxu0
    %v1849 = vadd.f32 %v1763, %v1848
    %v1850 = vpop.f32.mrf.mxu0
    %v1851 = vadd.f32 %v1765, %v1850
    %v1852 = vpop.f32.mrf.mxu0
    %v1853 = vadd.f32 %v1767, %v1852
    %1854 = vdwg.mxu0
    %v1855 = vadd.f32 %v1804, %v235
    %v1856 = vadd.f32 %v1806, %v239
    %v1857 = vadd.f32 %v1847, %v243
    %v1858 = vadd.f32 %v1849, %v247
    %v1859 = vadd.f32 %v1808, %v235
    %v1860 = vadd.f32 %v1810, %v239
    %v1861 = vadd.f32 %v1851, %v243
    %v1862 = vadd.f32 %v1853, %v247
    %v1863 = vxor.u32 %v1855, 2147483648
    %v1864 = vxor.u32 %v1856, 2147483648
    %v1865 = vxor.u32 %v1859, 2147483648
    %v1866 = vxor.u32 %v1860, 2147483648
    %v1867 = vmul.f32 %v1863, 1.442695
    %v1868 = vpow.pop %v1867
    %v1869 = vmul.f32 %v1864, 1.442695
    %v1870 = vpow.pop %v1869
    %v1871 = vmul.f32 %v1865, 1.442695
    %v1872 = vpow.pop %v1871
    %v1873 = vmul.f32 %v1866, 1.442695
    %v1874 = vpow.pop %v1873
    %v1875 = vadd.f32 %v1868, 1.0
    %v1876 = vadd.f32 %v1870, 1.0
    %v1877 = vadd.f32 %v1872, 1.0
    %v1878 = vadd.f32 %v1874, 1.0
    %v1879 = vrcp.pop %v1875
    %v1880 = vmul.f32 1.0, %v1879
    %v1881 = vrcp.pop %v1876
    %v1882 = vmul.f32 1.0, %v1881
    %v1883 = vrcp.pop %v1877
    %v1884 = vmul.f32 1.0, %v1883
    %v1885 = vrcp.pop %v1878
    %v1886 = vmul.f32 1.0, %v1885
    %v1887 = vtanh.pop %v1857
    %v1888 = vtanh.pop %v1861
    %v1889 = vxor.u32 %v1858, 2147483648
    %v1890 = vxor.u32 %v1862, 2147483648
    %v1891 = vmul.f32 %v1889, 1.442695
    %v1892 = vpow.pop %v1891
    %v1893 = vmul.f32 %v1890, 1.442695
    %v1894 = vpow.pop %v1893
    %v1895 = vadd.f32 %v1892, 1.0
    %v1896 = vadd.f32 %v1894, 1.0
    %v1897 = vrcp.pop %v1895
    %v1898 = vmul.f32 1.0, %v1897
    %v1899 = vrcp.pop %v1896
    %v1900 = vmul.f32 1.0, %v1899
    %v1901 = vmul.f32 %v1882, %v1512
    %v1902 = vmul.f32 %v1886, %v1513
    %v1903 = vmul.f32 %v1880, %v1887
    %v1904 = vmul.f32 %v1884, %v1888
    %v1905 = vadd.f32 %v1901, %v1903
    %v1906 = vadd.f32 %v1902, %v1904
    %v1907 = vtanh.pop %v1905
    %v1908 = vtanh.pop %v1906
    %v1909 = vmul.f32 %v1898, %v1907
    %v1910 = vmul.f32 %v1900, %v1908
    %v1911 = vpack.c.bf16 %v1910, %v1909
    %v1913 = vunpack.c.l.b16 %v1911
    %v1914 = vunpack.c.h.b16 %v1911
    %v1915 = vpack.c.b16 %v1913, %v1913
    %v1916 = vpack.c.b16 %v1914, %v1914
    %s1919 = scalar_lea.vmem [#allocation15], 16
    %1920 = vst [vmem:[%s1919] sm:$0xf] %v1915
    %1921 = vst [vmem:[%s1919 + $0x4] sm:$0xf] %v1916
    %s1922 = smul.u32 6, 4
    %s1923 = smul.addr %s1922, 8
    %s1924 = scalar_lea.vmem [#allocation4], %s1923
    %v1925 = vld [vmem:[%s1924] sm:$0xff]
    %v1926 = vld [vmem:[%s1924 + $0x8] sm:$0xff]
    %v1927 = vld [vmem:[%s1924 + $0x10] sm:$0xff]
    %v1928 = vld [vmem:[%s1924 + $0x18] sm:$0xff]
    %v1929 = vld [vmem:[%s1924 + $0x20] sm:$0xff]
    %v1930 = vld [vmem:[%s1924 + $0x28] sm:$0xff]
    %v1931 = vld [vmem:[%s1924 + $0x30] sm:$0xff]
    %v1932 = vld [vmem:[%s1924 + $0x38] sm:$0xff]
    %1933 = vmatprep.subr.bf16.mxu0 %v399
    %1934 = vmatpush1.bf16.msra.mxu0 %v398
    %1935 = vmatprep.subr.bf16.mxu0 %v395
    %1936 = vmatpush1.bf16.msra.mxu0 %v394
    %1937 = vmatprep.subr.bf16.mxu0 %v391
    %1938 = vmatpush1.bf16.msra.mxu0 %v390
    %1939 = vmatprep.subr.bf16.mxu0 %v387
    %1940 = vmatpush1.bf16.msra.mxu0 %v386
    %1941 = vmatprep.subr.bf16.mxu0 %v383
    %1942 = vmatpush1.bf16.msra.mxu0 %v382
    %1943 = vmatprep.subr.bf16.mxu0 %v379
    %1944 = vmatpush1.bf16.msra.mxu0 %v378
    %1945 = vmatprep.subr.bf16.mxu0 %v375
    %1946 = vmatpush1.bf16.msra.mxu0 %v374
    %1947 = vmatprep.subr.bf16.mxu0 %v371
    %1948 = vmatpush1.bf16.msra.mxu0 %v370
    %1949 = vmatprep.subr.bf16.mxu0 0
    %1950 = vmatpush2.bf16.msra.mxu0 0
    %1951 = vmatprep.subr.bf16.mxu0 0
    %1952 = vmatpush2.bf16.msra.mxu0 0
    %1953 = vmatprep.subr.bf16.mxu0 0
    %1954 = vmatpush2.bf16.msra.mxu0 0
    %1955 = vmatprep.subr.bf16.mxu0 0
    %1956 = vmatpush2.bf16.msra.mxu0 0
    %1957 = vmatprep.subr.bf16.mxu0 0
    %1958 = vmatpush2.bf16.msra.mxu0 0
    %1959 = vmatprep.subr.bf16.mxu0 0
    %1960 = vmatpush2.bf16.msra.mxu0 0
    %1961 = vmatprep.subr.bf16.mxu0 0
    %1962 = vmatpush2.bf16.msra.mxu0 0
    %1963 = vmatprep.subr.bf16.mxu0 0
    %1964 = vmatpush2.bf16.msra.mxu0 0
    %1965 = vmatprep.mubr.bf16.mxu0 0
    %1966 = vmatmul.mubr.bf16.gmra.mxu0 %v1682
    %v1967 = vpop.f32.mrf.mxu0
    %v1968 = vadd.f32 0.0, %v1967
    %v1969 = vpop.f32.mrf.mxu0
    %v1970 = vadd.f32 0.0, %v1969
    %v1971 = vpop.f32.mrf.mxu0
    %v1972 = vadd.f32 0.0, %v1971
    %v1973 = vpop.f32.mrf.mxu0
    %v1974 = vadd.f32 0.0, %v1973
    %1975 = vdwg.mxu0
    %1976 = vmatprep.subr.bf16.mxu0 %v401
    %1977 = vmatpush1.bf16.msra.mxu0 %v400
    %1978 = vmatprep.subr.bf16.mxu0 %v397
    %1979 = vmatpush1.bf16.msra.mxu0 %v396
    %1980 = vmatprep.subr.bf16.mxu0 %v393
    %1981 = vmatpush1.bf16.msra.mxu0 %v392
    %1982 = vmatprep.subr.bf16.mxu0 %v389
    %1983 = vmatpush1.bf16.msra.mxu0 %v388
    %1984 = vmatprep.subr.bf16.mxu0 %v385
    %1985 = vmatpush1.bf16.msra.mxu0 %v384
    %1986 = vmatprep.subr.bf16.mxu0 %v381
    %1987 = vmatpush1.bf16.msra.mxu0 %v380
    %1988 = vmatprep.subr.bf16.mxu0 %v377
    %1989 = vmatpush1.bf16.msra.mxu0 %v376
    %1990 = vmatprep.subr.bf16.mxu0 %v373
    %1991 = vmatpush1.bf16.msra.mxu0 %v372
    %1992 = vmatprep.subr.bf16.mxu0 0
    %1993 = vmatpush2.bf16.msra.mxu0 0
    %1994 = vmatprep.subr.bf16.mxu0 0
    %1995 = vmatpush2.bf16.msra.mxu0 0
    %1996 = vmatprep.subr.bf16.mxu0 0
    %1997 = vmatpush2.bf16.msra.mxu0 0
    %1998 = vmatprep.subr.bf16.mxu0 0
    %1999 = vmatpush2.bf16.msra.mxu0 0
    %2000 = vmatprep.subr.bf16.mxu0 0
    %2001 = vmatpush2.bf16.msra.mxu0 0
    %2002 = vmatprep.subr.bf16.mxu0 0
    %2003 = vmatpush2.bf16.msra.mxu0 0
    %2004 = vmatprep.subr.bf16.mxu0 0
    %2005 = vmatpush2.bf16.msra.mxu0 0
    %2006 = vmatprep.subr.bf16.mxu0 0
    %2007 = vmatpush2.bf16.msra.mxu0 0
    %2008 = vmatprep.mubr.bf16.mxu0 0
    %2009 = vmatmul.mubr.bf16.gmra.mxu0 %v1682
    %v2010 = vpop.f32.mrf.mxu0
    %v2011 = vadd.f32 0.0, %v2010
    %v2012 = vpop.f32.mrf.mxu0
    %v2013 = vadd.f32 0.0, %v2012
    %v2014 = vpop.f32.mrf.mxu0
    %v2015 = vadd.f32 0.0, %v2014
    %v2016 = vpop.f32.mrf.mxu0
    %v2017 = vadd.f32 0.0, %v2016
    %2018 = vdwg.mxu0
    %v2019 = vadd.f32 %v1925, %v1968
    %v2020 = vadd.f32 %v1926, %v1970
    %v2021 = vadd.f32 %v1927, %v2011
    %v2022 = vadd.f32 %v1928, %v2013
    %v2023 = vadd.f32 %v1929, %v1972
    %v2024 = vadd.f32 %v1930, %v1974
    %v2025 = vadd.f32 %v1931, %v2015
    %v2026 = vadd.f32 %v1932, %v2017
    %v2027 = vxor.u32 %v2019, 2147483648
    %v2028 = vxor.u32 %v2020, 2147483648
    %v2029 = vxor.u32 %v2023, 2147483648
    %v2030 = vxor.u32 %v2024, 2147483648
    %v2031 = vmul.f32 %v2027, 1.442695
    %v2032 = vpow.pop %v2031
    %v2033 = vmul.f32 %v2028, 1.442695
    %v2034 = vpow.pop %v2033
    %v2035 = vmul.f32 %v2029, 1.442695
    %v2036 = vpow.pop %v2035
    %v2037 = vmul.f32 %v2030, 1.442695
    %v2038 = vpow.pop %v2037
    %v2039 = vadd.f32 %v2032, 1.0
    %v2040 = vadd.f32 %v2034, 1.0
    %v2041 = vadd.f32 %v2036, 1.0
    %v2042 = vadd.f32 %v2038, 1.0
    %v2043 = vrcp.pop %v2039
    %v2044 = vmul.f32 1.0, %v2043
    %v2045 = vrcp.pop %v2040
    %v2046 = vmul.f32 1.0, %v2045
    %v2047 = vrcp.pop %v2041
    %v2048 = vmul.f32 1.0, %v2047
    %v2049 = vrcp.pop %v2042
    %v2050 = vmul.f32 1.0, %v2049
    %v2051 = vtanh.pop %v2021
    %v2052 = vtanh.pop %v2025
    %v2053 = vxor.u32 %v2022, 2147483648
    %v2054 = vxor.u32 %v2026, 2147483648
    %v2055 = vmul.f32 %v2053, 1.442695
    %v2056 = vpow.pop %v2055
    %v2057 = vmul.f32 %v2054, 1.442695
    %v2058 = vpow.pop %v2057
    %v2059 = vadd.f32 %v2056, 1.0
    %v2060 = vadd.f32 %v2058, 1.0
    %v2061 = vrcp.pop %v2059
    %v2062 = vmul.f32 1.0, %v2061
    %v2063 = vrcp.pop %v2060
    %v2064 = vmul.f32 1.0, %v2063
    %v2065 = vmul.f32 %v2046, %v1676
    %v2066 = vmul.f32 %v2050, %v1677
    %v2067 = vmul.f32 %v2044, %v2051
    %v2068 = vmul.f32 %v2048, %v2052
    %v2069 = vadd.f32 %v2065, %v2067
    %v2070 = vadd.f32 %v2066, %v2068
    %v2071 = vtanh.pop %v2069
    %v2072 = vtanh.pop %v2070
    %v2073 = vmul.f32 %v2062, %v2071
    %v2074 = vmul.f32 %v2064, %v2072
    %v2075 = vpack.c.bf16 %v2074, %v2073
    %2076 = vmatprep.subr.bf16.mxu0 %v703
    %2077 = vmatpush1.bf16.msra.mxu0 %v702
    %2078 = vmatprep.subr.bf16.mxu0 %v699
    %2079 = vmatpush1.bf16.msra.mxu0 %v698
    %2080 = vmatprep.subr.bf16.mxu0 %v695
    %2081 = vmatpush1.bf16.msra.mxu0 %v694
    %2082 = vmatprep.subr.bf16.mxu0 %v691
    %2083 = vmatpush1.bf16.msra.mxu0 %v690
    %2084 = vmatprep.subr.bf16.mxu0 %v687
    %2085 = vmatpush1.bf16.msra.mxu0 %v686
    %2086 = vmatprep.subr.bf16.mxu0 %v683
    %2087 = vmatpush1.bf16.msra.mxu0 %v682
    %2088 = vmatprep.subr.bf16.mxu0 %v679
    %2089 = vmatpush1.bf16.msra.mxu0 %v678
    %2090 = vmatprep.subr.bf16.mxu0 %v675
    %2091 = vmatpush1.bf16.msra.mxu0 %v674
    %2092 = vmatprep.subr.bf16.mxu0 0
    %2093 = vmatpush2.bf16.msra.mxu0 0
    %2094 = vmatprep.subr.bf16.mxu0 0
    %2095 = vmatpush2.bf16.msra.mxu0 0
    %2096 = vmatprep.subr.bf16.mxu0 0
    %2097 = vmatpush2.bf16.msra.mxu0 0
    %2098 = vmatprep.subr.bf16.mxu0 0
    %2099 = vmatpush2.bf16.msra.mxu0 0
    %2100 = vmatprep.subr.bf16.mxu0 0
    %2101 = vmatpush2.bf16.msra.mxu0 0
    %2102 = vmatprep.subr.bf16.mxu0 0
    %2103 = vmatpush2.bf16.msra.mxu0 0
    %2104 = vmatprep.subr.bf16.mxu0 0
    %2105 = vmatpush2.bf16.msra.mxu0 0
    %2106 = vmatprep.subr.bf16.mxu0 0
    %2107 = vmatpush2.bf16.msra.mxu0 0
    %2108 = vmatprep.mubr.bf16.mxu0 0
    %2109 = vmatmul.mubr.bf16.gmra.mxu0 %v1911
    %v2110 = vpop.f32.mrf.mxu0
    %v2111 = vadd.f32 0.0, %v2110
    %v2112 = vpop.f32.mrf.mxu0
    %v2113 = vadd.f32 0.0, %v2112
    %v2114 = vpop.f32.mrf.mxu0
    %v2115 = vadd.f32 0.0, %v2114
    %v2116 = vpop.f32.mrf.mxu0
    %v2117 = vadd.f32 0.0, %v2116
    %2118 = vdwg.mxu0
    %2119 = vmatprep.subr.bf16.mxu0 %v705
    %2120 = vmatpush1.bf16.msra.mxu0 %v704
    %2121 = vmatprep.subr.bf16.mxu0 %v701
    %2122 = vmatpush1.bf16.msra.mxu0 %v700
    %2123 = vmatprep.subr.bf16.mxu0 %v697
    %2124 = vmatpush1.bf16.msra.mxu0 %v696
    %2125 = vmatprep.subr.bf16.mxu0 %v693
    %2126 = vmatpush1.bf16.msra.mxu0 %v692
    %2127 = vmatprep.subr.bf16.mxu0 %v689
    %2128 = vmatpush1.bf16.msra.mxu0 %v688
    %2129 = vmatprep.subr.bf16.mxu0 %v685
    %2130 = vmatpush1.bf16.msra.mxu0 %v684
    %2131 = vmatprep.subr.bf16.mxu0 %v681
    %2132 = vmatpush1.bf16.msra.mxu0 %v680
    %2133 = vmatprep.subr.bf16.mxu0 %v677
    %2134 = vmatpush1.bf16.msra.mxu0 %v676
    %2135 = vmatprep.subr.bf16.mxu0 0
    %2136 = vmatpush2.bf16.msra.mxu0 0
    %2137 = vmatprep.subr.bf16.mxu0 0
    %2138 = vmatpush2.bf16.msra.mxu0 0
    %2139 = vmatprep.subr.bf16.mxu0 0
    %2140 = vmatpush2.bf16.msra.mxu0 0
    %2141 = vmatprep.subr.bf16.mxu0 0
    %2142 = vmatpush2.bf16.msra.mxu0 0
    %2143 = vmatprep.subr.bf16.mxu0 0
    %2144 = vmatpush2.bf16.msra.mxu0 0
    %2145 = vmatprep.subr.bf16.mxu0 0
    %2146 = vmatpush2.bf16.msra.mxu0 0
    %2147 = vmatprep.subr.bf16.mxu0 0
    %2148 = vmatpush2.bf16.msra.mxu0 0
    %2149 = vmatprep.subr.bf16.mxu0 0
    %2150 = vmatpush2.bf16.msra.mxu0 0
    %2151 = vmatprep.mubr.bf16.mxu0 0
    %2152 = vmatmul.mubr.bf16.gmra.mxu0 %v1911
    %v2153 = vpop.f32.mrf.mxu0
    %v2154 = vadd.f32 0.0, %v2153
    %v2155 = vpop.f32.mrf.mxu0
    %v2156 = vadd.f32 0.0, %v2155
    %v2157 = vpop.f32.mrf.mxu0
    %v2158 = vadd.f32 0.0, %v2157
    %v2159 = vpop.f32.mrf.mxu0
    %v2160 = vadd.f32 0.0, %v2159
    %2161 = vdwg.mxu0
    %2162 = vmatprep.subr.bf16.mxu0 %v949
    %2163 = vmatpush1.bf16.msra.mxu0 %v948
    %2164 = vmatprep.subr.bf16.mxu0 %v945
    %2165 = vmatpush1.bf16.msra.mxu0 %v944
    %2166 = vmatprep.subr.bf16.mxu0 %v941
    %2167 = vmatpush1.bf16.msra.mxu0 %v940
    %2168 = vmatprep.subr.bf16.mxu0 %v937
    %2169 = vmatpush1.bf16.msra.mxu0 %v936
    %2170 = vmatprep.subr.bf16.mxu0 %v933
    %2171 = vmatpush1.bf16.msra.mxu0 %v932
    %2172 = vmatprep.subr.bf16.mxu0 %v929
    %2173 = vmatpush1.bf16.msra.mxu0 %v928
    %2174 = vmatprep.subr.bf16.mxu0 %v925
    %2175 = vmatpush1.bf16.msra.mxu0 %v924
    %2176 = vmatprep.subr.bf16.mxu0 %v921
    %2177 = vmatpush1.bf16.msra.mxu0 %v920
    %2178 = vmatprep.subr.bf16.mxu0 0
    %2179 = vmatpush2.bf16.msra.mxu0 0
    %2180 = vmatprep.subr.bf16.mxu0 0
    %2181 = vmatpush2.bf16.msra.mxu0 0
    %2182 = vmatprep.subr.bf16.mxu0 0
    %2183 = vmatpush2.bf16.msra.mxu0 0
    %2184 = vmatprep.subr.bf16.mxu0 0
    %2185 = vmatpush2.bf16.msra.mxu0 0
    %2186 = vmatprep.subr.bf16.mxu0 0
    %2187 = vmatpush2.bf16.msra.mxu0 0
    %2188 = vmatprep.subr.bf16.mxu0 0
    %2189 = vmatpush2.bf16.msra.mxu0 0
    %2190 = vmatprep.subr.bf16.mxu0 0
    %2191 = vmatpush2.bf16.msra.mxu0 0
    %2192 = vmatprep.subr.bf16.mxu0 0
    %2193 = vmatpush2.bf16.msra.mxu0 0
    %2194 = vmatprep.mubr.bf16.mxu0 0
    %2195 = vmatmul.mubr.bf16.gmra.mxu0 %v2075
    %v2196 = vpop.f32.mrf.mxu0
    %v2197 = vadd.f32 %v2111, %v2196
    %v2198 = vpop.f32.mrf.mxu0
    %v2199 = vadd.f32 %v2113, %v2198
    %v2200 = vpop.f32.mrf.mxu0
    %v2201 = vadd.f32 %v2115, %v2200
    %v2202 = vpop.f32.mrf.mxu0
    %v2203 = vadd.f32 %v2117, %v2202
    %2204 = vdwg.mxu0
    %2205 = vmatprep.subr.bf16.mxu0 %v951
    %2206 = vmatpush1.bf16.msra.mxu0 %v950
    %2207 = vmatprep.subr.bf16.mxu0 %v947
    %2208 = vmatpush1.bf16.msra.mxu0 %v946
    %2209 = vmatprep.subr.bf16.mxu0 %v943
    %2210 = vmatpush1.bf16.msra.mxu0 %v942
    %2211 = vmatprep.subr.bf16.mxu0 %v939
    %2212 = vmatpush1.bf16.msra.mxu0 %v938
    %2213 = vmatprep.subr.bf16.mxu0 %v935
    %2214 = vmatpush1.bf16.msra.mxu0 %v934
    %2215 = vmatprep.subr.bf16.mxu0 %v931
    %2216 = vmatpush1.bf16.msra.mxu0 %v930
    %2217 = vmatprep.subr.bf16.mxu0 %v927
    %2218 = vmatpush1.bf16.msra.mxu0 %v926
    %2219 = vmatprep.subr.bf16.mxu0 %v923
    %2220 = vmatpush1.bf16.msra.mxu0 %v922
    %2221 = vmatprep.subr.bf16.mxu0 0
    %2222 = vmatpush2.bf16.msra.mxu0 0
    %2223 = vmatprep.subr.bf16.mxu0 0
    %2224 = vmatpush2.bf16.msra.mxu0 0
    %2225 = vmatprep.subr.bf16.mxu0 0
    %2226 = vmatpush2.bf16.msra.mxu0 0
    %2227 = vmatprep.subr.bf16.mxu0 0
    %2228 = vmatpush2.bf16.msra.mxu0 0
    %2229 = vmatprep.subr.bf16.mxu0 0
    %2230 = vmatpush2.bf16.msra.mxu0 0
    %2231 = vmatprep.subr.bf16.mxu0 0
    %2232 = vmatpush2.bf16.msra.mxu0 0
    %2233 = vmatprep.subr.bf16.mxu0 0
    %2234 = vmatpush2.bf16.msra.mxu0 0
    %2235 = vmatprep.subr.bf16.mxu0 0
    %2236 = vmatpush2.bf16.msra.mxu0 0
    %2237 = vmatprep.mubr.bf16.mxu0 0
    %2238 = vmatmul.mubr.bf16.gmra.mxu0 %v2075
    %v2239 = vpop.f32.mrf.mxu0
    %v2240 = vadd.f32 %v2154, %v2239
    %v2241 = vpop.f32.mrf.mxu0
    %v2242 = vadd.f32 %v2156, %v2241
    %v2243 = vpop.f32.mrf.mxu0
    %v2244 = vadd.f32 %v2158, %v2243
    %v2245 = vpop.f32.mrf.mxu0
    %v2246 = vadd.f32 %v2160, %v2245
    %2247 = vdwg.mxu0
    %v2248 = vadd.f32 %v2197, %v235
    %v2249 = vadd.f32 %v2199, %v239
    %v2250 = vadd.f32 %v2240, %v243
    %v2251 = vadd.f32 %v2242, %v247
    %v2252 = vadd.f32 %v2201, %v235
    %v2253 = vadd.f32 %v2203, %v239
    %v2254 = vadd.f32 %v2244, %v243
    %v2255 = vadd.f32 %v2246, %v247
    %v2256 = vxor.u32 %v2248, 2147483648
    %v2257 = vxor.u32 %v2249, 2147483648
    %v2258 = vxor.u32 %v2252, 2147483648
    %v2259 = vxor.u32 %v2253, 2147483648
    %v2260 = vmul.f32 %v2256, 1.442695
    %v2261 = vpow.pop %v2260
    %v2262 = vmul.f32 %v2257, 1.442695
    %v2263 = vpow.pop %v2262
    %v2264 = vmul.f32 %v2258, 1.442695
    %v2265 = vpow.pop %v2264
    %v2266 = vmul.f32 %v2259, 1.442695
    %v2267 = vpow.pop %v2266
    %v2268 = vadd.f32 %v2261, 1.0
    %v2269 = vadd.f32 %v2263, 1.0
    %v2270 = vadd.f32 %v2265, 1.0
    %v2271 = vadd.f32 %v2267, 1.0
    %v2272 = vrcp.pop %v2268
    %v2273 = vmul.f32 1.0, %v2272
    %v2274 = vrcp.pop %v2269
    %v2275 = vmul.f32 1.0, %v2274
    %v2276 = vrcp.pop %v2270
    %v2277 = vmul.f32 1.0, %v2276
    %v2278 = vrcp.pop %v2271
    %v2279 = vmul.f32 1.0, %v2278
    %v2280 = vtanh.pop %v2250
    %v2281 = vtanh.pop %v2254
    %v2282 = vxor.u32 %v2251, 2147483648
    %v2283 = vxor.u32 %v2255, 2147483648
    %v2284 = vmul.f32 %v2282, 1.442695
    %v2285 = vpow.pop %v2284
    %v2286 = vmul.f32 %v2283, 1.442695
    %v2287 = vpow.pop %v2286
    %v2288 = vadd.f32 %v2285, 1.0
    %v2289 = vadd.f32 %v2287, 1.0
    %v2290 = vrcp.pop %v2288
    %v2291 = vmul.f32 1.0, %v2290
    %v2292 = vrcp.pop %v2289
    %v2293 = vmul.f32 1.0, %v2292
    %v2294 = vmul.f32 %v2275, %v1905
    %v2295 = vmul.f32 %v2279, %v1906
    %v2296 = vmul.f32 %v2273, %v2280
    %v2297 = vmul.f32 %v2277, %v2281
    %v2298 = vadd.f32 %v2294, %v2296
    %v2299 = vadd.f32 %v2295, %v2297
    %v2300 = vtanh.pop %v2298
    %v2301 = vtanh.pop %v2299
    %v2302 = vmul.f32 %v2291, %v2300
    %v2303 = vmul.f32 %v2293, %v2301
    %v2304 = vpack.c.bf16 %v2303, %v2302
    %v2306 = vunpack.c.l.b16 %v2304
    %v2307 = vunpack.c.h.b16 %v2304
    %v2308 = vpack.c.b16 %v2306, %v2306
    %v2309 = vpack.c.b16 %v2307, %v2307
    %s2312 = scalar_lea.vmem [#allocation15], 24
    %2313 = vst [vmem:[%s2312] sm:$0xf] %v2308
    %2314 = vst [vmem:[%s2312 + $0x4] sm:$0xf] %v2309
    %s2315 = smul.u32 8, 4
    %s2316 = smul.addr %s2315, 8
    %s2317 = scalar_lea.vmem [#allocation4], %s2316
    %v2318 = vld [vmem:[%s2317] sm:$0xff]
    %v2319 = vld [vmem:[%s2317 + $0x8] sm:$0xff]
    %v2320 = vld [vmem:[%s2317 + $0x10] sm:$0xff]
    %v2321 = vld [vmem:[%s2317 + $0x18] sm:$0xff]
    %v2322 = vld [vmem:[%s2317 + $0x20] sm:$0xff]
    %v2323 = vld [vmem:[%s2317 + $0x28] sm:$0xff]
    %v2324 = vld [vmem:[%s2317 + $0x30] sm:$0xff]
    %v2325 = vld [vmem:[%s2317 + $0x38] sm:$0xff]
    %2326 = vmatprep.subr.bf16.mxu0 %v399
    %2327 = vmatpush1.bf16.msra.mxu0 %v398
    %2328 = vmatprep.subr.bf16.mxu0 %v395
    %2329 = vmatpush1.bf16.msra.mxu0 %v394
    %2330 = vmatprep.subr.bf16.mxu0 %v391
    %2331 = vmatpush1.bf16.msra.mxu0 %v390
    %2332 = vmatprep.subr.bf16.mxu0 %v387
    %2333 = vmatpush1.bf16.msra.mxu0 %v386
    %2334 = vmatprep.subr.bf16.mxu0 %v383
    %2335 = vmatpush1.bf16.msra.mxu0 %v382
    %2336 = vmatprep.subr.bf16.mxu0 %v379
    %2337 = vmatpush1.bf16.msra.mxu0 %v378
    %2338 = vmatprep.subr.bf16.mxu0 %v375
    %2339 = vmatpush1.bf16.msra.mxu0 %v374
    %2340 = vmatprep.subr.bf16.mxu0 %v371
    %2341 = vmatpush1.bf16.msra.mxu0 %v370
    %2342 = vmatprep.subr.bf16.mxu0 0
    %2343 = vmatpush2.bf16.msra.mxu0 0
    %2344 = vmatprep.subr.bf16.mxu0 0
    %2345 = vmatpush2.bf16.msra.mxu0 0
    %2346 = vmatprep.subr.bf16.mxu0 0
    %2347 = vmatpush2.bf16.msra.mxu0 0
    %2348 = vmatprep.subr.bf16.mxu0 0
    %2349 = vmatpush2.bf16.msra.mxu0 0
    %2350 = vmatprep.subr.bf16.mxu0 0
    %2351 = vmatpush2.bf16.msra.mxu0 0
    %2352 = vmatprep.subr.bf16.mxu0 0
    %2353 = vmatpush2.bf16.msra.mxu0 0
    %2354 = vmatprep.subr.bf16.mxu0 0
    %2355 = vmatpush2.bf16.msra.mxu0 0
    %2356 = vmatprep.subr.bf16.mxu0 0
    %2357 = vmatpush2.bf16.msra.mxu0 0
    %2358 = vmatprep.mubr.bf16.mxu0 0
    %2359 = vmatmul.mubr.bf16.gmra.mxu0 %v2075
    %v2360 = vpop.f32.mrf.mxu0
    %v2361 = vadd.f32 0.0, %v2360
    %v2362 = vpop.f32.mrf.mxu0
    %v2363 = vadd.f32 0.0, %v2362
    %v2364 = vpop.f32.mrf.mxu0
    %v2365 = vadd.f32 0.0, %v2364
    %v2366 = vpop.f32.mrf.mxu0
    %v2367 = vadd.f32 0.0, %v2366
    %2368 = vdwg.mxu0
    %2369 = vmatprep.subr.bf16.mxu0 %v401
    %2370 = vmatpush1.bf16.msra.mxu0 %v400
    %2371 = vmatprep.subr.bf16.mxu0 %v397
    %2372 = vmatpush1.bf16.msra.mxu0 %v396
    %2373 = vmatprep.subr.bf16.mxu0 %v393
    %2374 = vmatpush1.bf16.msra.mxu0 %v392
    %2375 = vmatprep.subr.bf16.mxu0 %v389
    %2376 = vmatpush1.bf16.msra.mxu0 %v388
    %2377 = vmatprep.subr.bf16.mxu0 %v385
    %2378 = vmatpush1.bf16.msra.mxu0 %v384
    %2379 = vmatprep.subr.bf16.mxu0 %v381
    %2380 = vmatpush1.bf16.msra.mxu0 %v380
    %2381 = vmatprep.subr.bf16.mxu0 %v377
    %2382 = vmatpush1.bf16.msra.mxu0 %v376
    %2383 = vmatprep.subr.bf16.mxu0 %v373
    %2384 = vmatpush1.bf16.msra.mxu0 %v372
    %2385 = vmatprep.subr.bf16.mxu0 0
    %2386 = vmatpush2.bf16.msra.mxu0 0
    %2387 = vmatprep.subr.bf16.mxu0 0
    %2388 = vmatpush2.bf16.msra.mxu0 0
    %2389 = vmatprep.subr.bf16.mxu0 0
    %2390 = vmatpush2.bf16.msra.mxu0 0
    %2391 = vmatprep.subr.bf16.mxu0 0
    %2392 = vmatpush2.bf16.msra.mxu0 0
    %2393 = vmatprep.subr.bf16.mxu0 0
    %2394 = vmatpush2.bf16.msra.mxu0 0
    %2395 = vmatprep.subr.bf16.mxu0 0
    %2396 = vmatpush2.bf16.msra.mxu0 0
    %2397 = vmatprep.subr.bf16.mxu0 0
    %2398 = vmatpush2.bf16.msra.mxu0 0
    %2399 = vmatprep.subr.bf16.mxu0 0
    %2400 = vmatpush2.bf16.msra.mxu0 0
    %2401 = vmatprep.mubr.bf16.mxu0 0
    %2402 = vmatmul.mubr.bf16.gmra.mxu0 %v2075
    %v2403 = vpop.f32.mrf.mxu0
    %v2404 = vadd.f32 0.0, %v2403
    %v2405 = vpop.f32.mrf.mxu0
    %v2406 = vadd.f32 0.0, %v2405
    %v2407 = vpop.f32.mrf.mxu0
    %v2408 = vadd.f32 0.0, %v2407
    %v2409 = vpop.f32.mrf.mxu0
    %v2410 = vadd.f32 0.0, %v2409
    %2411 = vdwg.mxu0
    %v2412 = vadd.f32 %v2318, %v2361
    %v2413 = vadd.f32 %v2319, %v2363
    %v2414 = vadd.f32 %v2320, %v2404
    %v2415 = vadd.f32 %v2321, %v2406
    %v2416 = vadd.f32 %v2322, %v2365
    %v2417 = vadd.f32 %v2323, %v2367
    %v2418 = vadd.f32 %v2324, %v2408
    %v2419 = vadd.f32 %v2325, %v2410
    %v2420 = vxor.u32 %v2412, 2147483648
    %v2421 = vxor.u32 %v2413, 2147483648
    %v2422 = vxor.u32 %v2416, 2147483648
    %v2423 = vxor.u32 %v2417, 2147483648
    %v2424 = vmul.f32 %v2420, 1.442695
    %v2425 = vpow.pop %v2424
    %v2426 = vmul.f32 %v2421, 1.442695
    %v2427 = vpow.pop %v2426
    %v2428 = vmul.f32 %v2422, 1.442695
    %v2429 = vpow.pop %v2428
    %v2430 = vmul.f32 %v2423, 1.442695
    %v2431 = vpow.pop %v2430
    %v2432 = vadd.f32 %v2425, 1.0
    %v2433 = vadd.f32 %v2427, 1.0
    %v2434 = vadd.f32 %v2429, 1.0
    %v2435 = vadd.f32 %v2431, 1.0
    %v2436 = vrcp.pop %v2432
    %v2437 = vmul.f32 1.0, %v2436
    %v2438 = vrcp.pop %v2433
    %v2439 = vmul.f32 1.0, %v2438
    %v2440 = vrcp.pop %v2434
    %v2441 = vmul.f32 1.0, %v2440
    %v2442 = vrcp.pop %v2435
    %v2443 = vmul.f32 1.0, %v2442
    %v2444 = vtanh.pop %v2414
    %v2445 = vtanh.pop %v2418
    %v2446 = vxor.u32 %v2415, 2147483648
    %v2447 = vxor.u32 %v2419, 2147483648
    %v2448 = vmul.f32 %v2446, 1.442695
    %v2449 = vpow.pop %v2448
    %v2450 = vmul.f32 %v2447, 1.442695
    %v2451 = vpow.pop %v2450
    %v2452 = vadd.f32 %v2449, 1.0
    %v2453 = vadd.f32 %v2451, 1.0
    %v2454 = vrcp.pop %v2452
    %v2455 = vmul.f32 1.0, %v2454
    %v2456 = vrcp.pop %v2453
    %v2457 = vmul.f32 1.0, %v2456
    %v2458 = vmul.f32 %v2439, %v2069
    %v2459 = vmul.f32 %v2443, %v2070
    %v2460 = vmul.f32 %v2437, %v2444
    %v2461 = vmul.f32 %v2441, %v2445
    %v2462 = vadd.f32 %v2458, %v2460
    %v2463 = vadd.f32 %v2459, %v2461
    %v2464 = vtanh.pop %v2462
    %v2465 = vtanh.pop %v2463
    %v2466 = vmul.f32 %v2455, %v2464
    %v2467 = vmul.f32 %v2457, %v2465
    %v2468 = vpack.c.bf16 %v2467, %v2466
    %2469 = vmatprep.subr.bf16.mxu0 %v703
    %2470 = vmatpush1.bf16.msra.mxu0 %v702
    %2471 = vmatprep.subr.bf16.mxu0 %v699
    %2472 = vmatpush1.bf16.msra.mxu0 %v698
    %2473 = vmatprep.subr.bf16.mxu0 %v695
    %2474 = vmatpush1.bf16.msra.mxu0 %v694
    %2475 = vmatprep.subr.bf16.mxu0 %v691
    %2476 = vmatpush1.bf16.msra.mxu0 %v690
    %2477 = vmatprep.subr.bf16.mxu0 %v687
    %2478 = vmatpush1.bf16.msra.mxu0 %v686
    %2479 = vmatprep.subr.bf16.mxu0 %v683
    %2480 = vmatpush1.bf16.msra.mxu0 %v682
    %2481 = vmatprep.subr.bf16.mxu0 %v679
    %2482 = vmatpush1.bf16.msra.mxu0 %v678
    %2483 = vmatprep.subr.bf16.mxu0 %v675
    %2484 = vmatpush1.bf16.msra.mxu0 %v674
    %2485 = vmatprep.subr.bf16.mxu0 0
    %2486 = vmatpush2.bf16.msra.mxu0 0
    %2487 = vmatprep.subr.bf16.mxu0 0
    %2488 = vmatpush2.bf16.msra.mxu0 0
    %2489 = vmatprep.subr.bf16.mxu0 0
    %2490 = vmatpush2.bf16.msra.mxu0 0
    %2491 = vmatprep.subr.bf16.mxu0 0
    %2492 = vmatpush2.bf16.msra.mxu0 0
    %2493 = vmatprep.subr.bf16.mxu0 0
    %2494 = vmatpush2.bf16.msra.mxu0 0
    %2495 = vmatprep.subr.bf16.mxu0 0
    %2496 = vmatpush2.bf16.msra.mxu0 0
    %2497 = vmatprep.subr.bf16.mxu0 0
    %2498 = vmatpush2.bf16.msra.mxu0 0
    %2499 = vmatprep.subr.bf16.mxu0 0
    %2500 = vmatpush2.bf16.msra.mxu0 0
    %2501 = vmatprep.mubr.bf16.mxu0 0
    %2502 = vmatmul.mubr.bf16.gmra.mxu0 %v2304
    %v2503 = vpop.f32.mrf.mxu0
    %v2504 = vadd.f32 0.0, %v2503
    %v2505 = vpop.f32.mrf.mxu0
    %v2506 = vadd.f32 0.0, %v2505
    %v2507 = vpop.f32.mrf.mxu0
    %v2508 = vadd.f32 0.0, %v2507
    %v2509 = vpop.f32.mrf.mxu0
    %v2510 = vadd.f32 0.0, %v2509
    %2511 = vdwg.mxu0
    %2512 = vmatprep.subr.bf16.mxu0 %v705
    %2513 = vmatpush1.bf16.msra.mxu0 %v704
    %2514 = vmatprep.subr.bf16.mxu0 %v701
    %2515 = vmatpush1.bf16.msra.mxu0 %v700
    %2516 = vmatprep.subr.bf16.mxu0 %v697
    %2517 = vmatpush1.bf16.msra.mxu0 %v696
    %2518 = vmatprep.subr.bf16.mxu0 %v693
    %2519 = vmatpush1.bf16.msra.mxu0 %v692
    %2520 = vmatprep.subr.bf16.mxu0 %v689
    %2521 = vmatpush1.bf16.msra.mxu0 %v688
    %2522 = vmatprep.subr.bf16.mxu0 %v685
    %2523 = vmatpush1.bf16.msra.mxu0 %v684
    %2524 = vmatprep.subr.bf16.mxu0 %v681
    %2525 = vmatpush1.bf16.msra.mxu0 %v680
    %2526 = vmatprep.subr.bf16.mxu0 %v677
    %2527 = vmatpush1.bf16.msra.mxu0 %v676
    %2528 = vmatprep.subr.bf16.mxu0 0
    %2529 = vmatpush2.bf16.msra.mxu0 0
    %2530 = vmatprep.subr.bf16.mxu0 0
    %2531 = vmatpush2.bf16.msra.mxu0 0
    %2532 = vmatprep.subr.bf16.mxu0 0
    %2533 = vmatpush2.bf16.msra.mxu0 0
    %2534 = vmatprep.subr.bf16.mxu0 0
    %2535 = vmatpush2.bf16.msra.mxu0 0
    %2536 = vmatprep.subr.bf16.mxu0 0
    %2537 = vmatpush2.bf16.msra.mxu0 0
    %2538 = vmatprep.subr.bf16.mxu0 0
    %2539 = vmatpush2.bf16.msra.mxu0 0
    %2540 = vmatprep.subr.bf16.mxu0 0
    %2541 = vmatpush2.bf16.msra.mxu0 0
    %2542 = vmatprep.subr.bf16.mxu0 0
    %2543 = vmatpush2.bf16.msra.mxu0 0
    %2544 = vmatprep.mubr.bf16.mxu0 0
    %2545 = vmatmul.mubr.bf16.gmra.mxu0 %v2304
    %v2546 = vpop.f32.mrf.mxu0
    %v2547 = vadd.f32 0.0, %v2546
    %v2548 = vpop.f32.mrf.mxu0
    %v2549 = vadd.f32 0.0, %v2548
    %v2550 = vpop.f32.mrf.mxu0
    %v2551 = vadd.f32 0.0, %v2550
    %v2552 = vpop.f32.mrf.mxu0
    %v2553 = vadd.f32 0.0, %v2552
    %2554 = vdwg.mxu0
    %2555 = vmatprep.subr.bf16.mxu0 %v949
    %2556 = vmatpush1.bf16.msra.mxu0 %v948
    %2557 = vmatprep.subr.bf16.mxu0 %v945
    %2558 = vmatpush1.bf16.msra.mxu0 %v944
    %2559 = vmatprep.subr.bf16.mxu0 %v941
    %2560 = vmatpush1.bf16.msra.mxu0 %v940
    %2561 = vmatprep.subr.bf16.mxu0 %v937
    %2562 = vmatpush1.bf16.msra.mxu0 %v936
    %2563 = vmatprep.subr.bf16.mxu0 %v933
    %2564 = vmatpush1.bf16.msra.mxu0 %v932
    %2565 = vmatprep.subr.bf16.mxu0 %v929
    %2566 = vmatpush1.bf16.msra.mxu0 %v928
    %2567 = vmatprep.subr.bf16.mxu0 %v925
    %2568 = vmatpush1.bf16.msra.mxu0 %v924
    %2569 = vmatprep.subr.bf16.mxu0 %v921
    %2570 = vmatpush1.bf16.msra.mxu0 %v920
    %2571 = vmatprep.subr.bf16.mxu0 0
    %2572 = vmatpush2.bf16.msra.mxu0 0
    %2573 = vmatprep.subr.bf16.mxu0 0
    %2574 = vmatpush2.bf16.msra.mxu0 0
    %2575 = vmatprep.subr.bf16.mxu0 0
    %2576 = vmatpush2.bf16.msra.mxu0 0
    %2577 = vmatprep.subr.bf16.mxu0 0
    %2578 = vmatpush2.bf16.msra.mxu0 0
    %2579 = vmatprep.subr.bf16.mxu0 0
    %2580 = vmatpush2.bf16.msra.mxu0 0
    %2581 = vmatprep.subr.bf16.mxu0 0
    %2582 = vmatpush2.bf16.msra.mxu0 0
    %2583 = vmatprep.subr.bf16.mxu0 0
    %2584 = vmatpush2.bf16.msra.mxu0 0
    %2585 = vmatprep.subr.bf16.mxu0 0
    %2586 = vmatpush2.bf16.msra.mxu0 0
    %2587 = vmatprep.mubr.bf16.mxu0 0
    %2588 = vmatmul.mubr.bf16.gmra.mxu0 %v2468
    %v2589 = vpop.f32.mrf.mxu0
    %v2590 = vadd.f32 %v2504, %v2589
    %v2591 = vpop.f32.mrf.mxu0
    %v2592 = vadd.f32 %v2506, %v2591
    %v2593 = vpop.f32.mrf.mxu0
    %v2594 = vadd.f32 %v2508, %v2593
    %v2595 = vpop.f32.mrf.mxu0
    %v2596 = vadd.f32 %v2510, %v2595
    %2597 = vdwg.mxu0
    %2598 = vmatprep.subr.bf16.mxu0 %v951
    %2599 = vmatpush1.bf16.msra.mxu0 %v950
    %2600 = vmatprep.subr.bf16.mxu0 %v947
    %2601 = vmatpush1.bf16.msra.mxu0 %v946
    %2602 = vmatprep.subr.bf16.mxu0 %v943
    %2603 = vmatpush1.bf16.msra.mxu0 %v942
    %2604 = vmatprep.subr.bf16.mxu0 %v939
    %2605 = vmatpush1.bf16.msra.mxu0 %v938
    %2606 = vmatprep.subr.bf16.mxu0 %v935
    %2607 = vmatpush1.bf16.msra.mxu0 %v934
    %2608 = vmatprep.subr.bf16.mxu0 %v931
    %2609 = vmatpush1.bf16.msra.mxu0 %v930
    %2610 = vmatprep.subr.bf16.mxu0 %v927
    %2611 = vmatpush1.bf16.msra.mxu0 %v926
    %2612 = vmatprep.subr.bf16.mxu0 %v923
    %2613 = vmatpush1.bf16.msra.mxu0 %v922
    %2614 = vmatprep.subr.bf16.mxu0 0
    %2615 = vmatpush2.bf16.msra.mxu0 0
    %2616 = vmatprep.subr.bf16.mxu0 0
    %2617 = vmatpush2.bf16.msra.mxu0 0
    %2618 = vmatprep.subr.bf16.mxu0 0
    %2619 = vmatpush2.bf16.msra.mxu0 0
    %2620 = vmatprep.subr.bf16.mxu0 0
    %2621 = vmatpush2.bf16.msra.mxu0 0
    %2622 = vmatprep.subr.bf16.mxu0 0
    %2623 = vmatpush2.bf16.msra.mxu0 0
    %2624 = vmatprep.subr.bf16.mxu0 0
    %2625 = vmatpush2.bf16.msra.mxu0 0
    %2626 = vmatprep.subr.bf16.mxu0 0
    %2627 = vmatpush2.bf16.msra.mxu0 0
    %2628 = vmatprep.subr.bf16.mxu0 0
    %2629 = vmatpush2.bf16.msra.mxu0 0
    %2630 = vmatprep.mubr.bf16.mxu0 0
    %2631 = vmatmul.mubr.bf16.gmra.mxu0 %v2468
    %v2632 = vpop.f32.mrf.mxu0
    %v2633 = vadd.f32 %v2547, %v2632
    %v2634 = vpop.f32.mrf.mxu0
    %v2635 = vadd.f32 %v2549, %v2634
    %v2636 = vpop.f32.mrf.mxu0
    %v2637 = vadd.f32 %v2551, %v2636
    %v2638 = vpop.f32.mrf.mxu0
    %v2639 = vadd.f32 %v2553, %v2638
    %2640 = vdwg.mxu0
    %v2641 = vadd.f32 %v2590, %v235
    %v2642 = vadd.f32 %v2592, %v239
    %v2643 = vadd.f32 %v2633, %v243
    %v2644 = vadd.f32 %v2635, %v247
    %v2645 = vadd.f32 %v2594, %v235
    %v2646 = vadd.f32 %v2596, %v239
    %v2647 = vadd.f32 %v2637, %v243
    %v2648 = vadd.f32 %v2639, %v247
    %v2649 = vxor.u32 %v2641, 2147483648
    %v2650 = vxor.u32 %v2642, 2147483648
    %v2651 = vxor.u32 %v2645, 2147483648
    %v2652 = vxor.u32 %v2646, 2147483648
    %v2653 = vmul.f32 %v2649, 1.442695
    %v2654 = vpow.pop %v2653
    %v2655 = vmul.f32 %v2650, 1.442695
    %v2656 = vpow.pop %v2655
    %v2657 = vmul.f32 %v2651, 1.442695
    %v2658 = vpow.pop %v2657
    %v2659 = vmul.f32 %v2652, 1.442695
    %v2660 = vpow.pop %v2659
    %v2661 = vadd.f32 %v2654, 1.0
    %v2662 = vadd.f32 %v2656, 1.0
    %v2663 = vadd.f32 %v2658, 1.0
    %v2664 = vadd.f32 %v2660, 1.0
    %v2665 = vrcp.pop %v2661
    %v2666 = vmul.f32 1.0, %v2665
    %v2667 = vrcp.pop %v2662
    %v2668 = vmul.f32 1.0, %v2667
    %v2669 = vrcp.pop %v2663
    %v2670 = vmul.f32 1.0, %v2669
    %v2671 = vrcp.pop %v2664
    %v2672 = vmul.f32 1.0, %v2671
    %v2673 = vtanh.pop %v2643
    %v2674 = vtanh.pop %v2647
    %v2675 = vxor.u32 %v2644, 2147483648
    %v2676 = vxor.u32 %v2648, 2147483648
    %v2677 = vmul.f32 %v2675, 1.442695
    %v2678 = vpow.pop %v2677
    %v2679 = vmul.f32 %v2676, 1.442695
    %v2680 = vpow.pop %v2679
    %v2681 = vadd.f32 %v2678, 1.0
    %v2682 = vadd.f32 %v2680, 1.0
    %v2683 = vrcp.pop %v2681
    %v2684 = vmul.f32 1.0, %v2683
    %v2685 = vrcp.pop %v2682
    %v2686 = vmul.f32 1.0, %v2685
    %v2687 = vmul.f32 %v2668, %v2298
    %v2688 = vmul.f32 %v2672, %v2299
    %v2689 = vmul.f32 %v2666, %v2673
    %v2690 = vmul.f32 %v2670, %v2674
    %v2691 = vadd.f32 %v2687, %v2689
    %v2692 = vadd.f32 %v2688, %v2690
    %v2693 = vtanh.pop %v2691
    %v2694 = vtanh.pop %v2692
    %v2695 = vmul.f32 %v2684, %v2693
    %v2696 = vmul.f32 %v2686, %v2694
    %v2697 = vpack.c.bf16 %v2696, %v2695
    %v2699 = vunpack.c.l.b16 %v2697
    %v2700 = vunpack.c.h.b16 %v2697
    %v2701 = vpack.c.b16 %v2699, %v2699
    %v2702 = vpack.c.b16 %v2700, %v2700
    %s2705 = scalar_lea.vmem [#allocation15], 32
    %2706 = vst [vmem:[%s2705] sm:$0xf] %v2701
    %2707 = vst [vmem:[%s2705 + $0x4] sm:$0xf] %v2702
    %s2708 = smul.u32 10, 4
    %s2709 = smul.addr %s2708, 8
    %s2710 = scalar_lea.vmem [#allocation4], %s2709
    %v2711 = vld [vmem:[%s2710] sm:$0xff]
    %v2712 = vld [vmem:[%s2710 + $0x8] sm:$0xff]
    %v2713 = vld [vmem:[%s2710 + $0x10] sm:$0xff]
    %v2714 = vld [vmem:[%s2710 + $0x18] sm:$0xff]
    %v2715 = vld [vmem:[%s2710 + $0x20] sm:$0xff]
    %v2716 = vld [vmem:[%s2710 + $0x28] sm:$0xff]
    %v2717 = vld [vmem:[%s2710 + $0x30] sm:$0xff]
    %v2718 = vld [vmem:[%s2710 + $0x38] sm:$0xff]
    %2719 = vmatprep.subr.bf16.mxu0 %v399
    %2720 = vmatpush1.bf16.msra.mxu0 %v398
    %2721 = vmatprep.subr.bf16.mxu0 %v395
    %2722 = vmatpush1.bf16.msra.mxu0 %v394
    %2723 = vmatprep.subr.bf16.mxu0 %v391
    %2724 = vmatpush1.bf16.msra.mxu0 %v390
    %2725 = vmatprep.subr.bf16.mxu0 %v387
    %2726 = vmatpush1.bf16.msra.mxu0 %v386
    %2727 = vmatprep.subr.bf16.mxu0 %v383
    %2728 = vmatpush1.bf16.msra.mxu0 %v382
    %2729 = vmatprep.subr.bf16.mxu0 %v379
    %2730 = vmatpush1.bf16.msra.mxu0 %v378
    %2731 = vmatprep.subr.bf16.mxu0 %v375
    %2732 = vmatpush1.bf16.msra.mxu0 %v374
    %2733 = vmatprep.subr.bf16.mxu0 %v371
    %2734 = vmatpush1.bf16.msra.mxu0 %v370
    %2735 = vmatprep.subr.bf16.mxu0 0
    %2736 = vmatpush2.bf16.msra.mxu0 0
    %2737 = vmatprep.subr.bf16.mxu0 0
    %2738 = vmatpush2.bf16.msra.mxu0 0
    %2739 = vmatprep.subr.bf16.mxu0 0
    %2740 = vmatpush2.bf16.msra.mxu0 0
    %2741 = vmatprep.subr.bf16.mxu0 0
    %2742 = vmatpush2.bf16.msra.mxu0 0
    %2743 = vmatprep.subr.bf16.mxu0 0
    %2744 = vmatpush2.bf16.msra.mxu0 0
    %2745 = vmatprep.subr.bf16.mxu0 0
    %2746 = vmatpush2.bf16.msra.mxu0 0
    %2747 = vmatprep.subr.bf16.mxu0 0
    %2748 = vmatpush2.bf16.msra.mxu0 0
    %2749 = vmatprep.subr.bf16.mxu0 0
    %2750 = vmatpush2.bf16.msra.mxu0 0
    %2751 = vmatprep.mubr.bf16.mxu0 0
    %2752 = vmatmul.mubr.bf16.gmra.mxu0 %v2468
    %v2753 = vpop.f32.mrf.mxu0
    %v2754 = vadd.f32 0.0, %v2753
    %v2755 = vpop.f32.mrf.mxu0
    %v2756 = vadd.f32 0.0, %v2755
    %v2757 = vpop.f32.mrf.mxu0
    %v2758 = vadd.f32 0.0, %v2757
    %v2759 = vpop.f32.mrf.mxu0
    %v2760 = vadd.f32 0.0, %v2759
    %2761 = vdwg.mxu0
    %2762 = vmatprep.subr.bf16.mxu0 %v401
    %2763 = vmatpush1.bf16.msra.mxu0 %v400
    %2764 = vmatprep.subr.bf16.mxu0 %v397
    %2765 = vmatpush1.bf16.msra.mxu0 %v396
    %2766 = vmatprep.subr.bf16.mxu0 %v393
    %2767 = vmatpush1.bf16.msra.mxu0 %v392
    %2768 = vmatprep.subr.bf16.mxu0 %v389
    %2769 = vmatpush1.bf16.msra.mxu0 %v388
    %2770 = vmatprep.subr.bf16.mxu0 %v385
    %2771 = vmatpush1.bf16.msra.mxu0 %v384
    %2772 = vmatprep.subr.bf16.mxu0 %v381
    %2773 = vmatpush1.bf16.msra.mxu0 %v380
    %2774 = vmatprep.subr.bf16.mxu0 %v377
    %2775 = vmatpush1.bf16.msra.mxu0 %v376
    %2776 = vmatprep.subr.bf16.mxu0 %v373
    %2777 = vmatpush1.bf16.msra.mxu0 %v372
    %2778 = vmatprep.subr.bf16.mxu0 0
    %2779 = vmatpush2.bf16.msra.mxu0 0
    %2780 = vmatprep.subr.bf16.mxu0 0
    %2781 = vmatpush2.bf16.msra.mxu0 0
    %2782 = vmatprep.subr.bf16.mxu0 0
    %2783 = vmatpush2.bf16.msra.mxu0 0
    %2784 = vmatprep.subr.bf16.mxu0 0
    %2785 = vmatpush2.bf16.msra.mxu0 0
    %2786 = vmatprep.subr.bf16.mxu0 0
    %2787 = vmatpush2.bf16.msra.mxu0 0
    %2788 = vmatprep.subr.bf16.mxu0 0
    %2789 = vmatpush2.bf16.msra.mxu0 0
    %2790 = vmatprep.subr.bf16.mxu0 0
    %2791 = vmatpush2.bf16.msra.mxu0 0
    %2792 = vmatprep.subr.bf16.mxu0 0
    %2793 = vmatpush2.bf16.msra.mxu0 0
    %2794 = vmatprep.mubr.bf16.mxu0 0
    %2795 = vmatmul.mubr.bf16.gmra.mxu0 %v2468
    %v2796 = vpop.f32.mrf.mxu0
    %v2797 = vadd.f32 0.0, %v2796
    %v2798 = vpop.f32.mrf.mxu0
    %v2799 = vadd.f32 0.0, %v2798
    %v2800 = vpop.f32.mrf.mxu0
    %v2801 = vadd.f32 0.0, %v2800
    %v2802 = vpop.f32.mrf.mxu0
    %v2803 = vadd.f32 0.0, %v2802
    %2804 = vdwg.mxu0
    %v2805 = vadd.f32 %v2711, %v2754
    %v2806 = vadd.f32 %v2712, %v2756
    %v2807 = vadd.f32 %v2713, %v2797
    %v2808 = vadd.f32 %v2714, %v2799
    %v2809 = vadd.f32 %v2715, %v2758
    %v2810 = vadd.f32 %v2716, %v2760
    %v2811 = vadd.f32 %v2717, %v2801
    %v2812 = vadd.f32 %v2718, %v2803
    %v2813 = vxor.u32 %v2805, 2147483648
    %v2814 = vxor.u32 %v2806, 2147483648
    %v2815 = vxor.u32 %v2809, 2147483648
    %v2816 = vxor.u32 %v2810, 2147483648
    %v2817 = vmul.f32 %v2813, 1.442695
    %v2818 = vpow.pop %v2817
    %v2819 = vmul.f32 %v2814, 1.442695
    %v2820 = vpow.pop %v2819
    %v2821 = vmul.f32 %v2815, 1.442695
    %v2822 = vpow.pop %v2821
    %v2823 = vmul.f32 %v2816, 1.442695
    %v2824 = vpow.pop %v2823
    %v2825 = vadd.f32 %v2818, 1.0
    %v2826 = vadd.f32 %v2820, 1.0
    %v2827 = vadd.f32 %v2822, 1.0
    %v2828 = vadd.f32 %v2824, 1.0
    %v2829 = vrcp.pop %v2825
    %v2830 = vmul.f32 1.0, %v2829
    %v2831 = vrcp.pop %v2826
    %v2832 = vmul.f32 1.0, %v2831
    %v2833 = vrcp.pop %v2827
    %v2834 = vmul.f32 1.0, %v2833
    %v2835 = vrcp.pop %v2828
    %v2836 = vmul.f32 1.0, %v2835
    %v2837 = vtanh.pop %v2807
    %v2838 = vtanh.pop %v2811
    %v2839 = vxor.u32 %v2808, 2147483648
    %v2840 = vxor.u32 %v2812, 2147483648
    %v2841 = vmul.f32 %v2839, 1.442695
    %v2842 = vpow.pop %v2841
    %v2843 = vmul.f32 %v2840, 1.442695
    %v2844 = vpow.pop %v2843
    %v2845 = vadd.f32 %v2842, 1.0
    %v2846 = vadd.f32 %v2844, 1.0
    %v2847 = vrcp.pop %v2845
    %v2848 = vmul.f32 1.0, %v2847
    %v2849 = vrcp.pop %v2846
    %v2850 = vmul.f32 1.0, %v2849
    %v2851 = vmul.f32 %v2832, %v2462
    %v2852 = vmul.f32 %v2836, %v2463
    %v2853 = vmul.f32 %v2830, %v2837
    %v2854 = vmul.f32 %v2834, %v2838
    %v2855 = vadd.f32 %v2851, %v2853
    %v2856 = vadd.f32 %v2852, %v2854
    %v2857 = vtanh.pop %v2855
    %v2858 = vtanh.pop %v2856
    %v2859 = vmul.f32 %v2848, %v2857
    %v2860 = vmul.f32 %v2850, %v2858
    %v2861 = vpack.c.bf16 %v2860, %v2859
    %2862 = vmatprep.subr.bf16.mxu0 %v703
    %2863 = vmatpush1.bf16.msra.mxu0 %v702
    %2864 = vmatprep.subr.bf16.mxu0 %v699
    %2865 = vmatpush1.bf16.msra.mxu0 %v698
    %2866 = vmatprep.subr.bf16.mxu0 %v695
    %2867 = vmatpush1.bf16.msra.mxu0 %v694
    %2868 = vmatprep.subr.bf16.mxu0 %v691
    %2869 = vmatpush1.bf16.msra.mxu0 %v690
    %2870 = vmatprep.subr.bf16.mxu0 %v687
    %2871 = vmatpush1.bf16.msra.mxu0 %v686
    %2872 = vmatprep.subr.bf16.mxu0 %v683
    %2873 = vmatpush1.bf16.msra.mxu0 %v682
    %2874 = vmatprep.subr.bf16.mxu0 %v679
    %2875 = vmatpush1.bf16.msra.mxu0 %v678
    %2876 = vmatprep.subr.bf16.mxu0 %v675
    %2877 = vmatpush1.bf16.msra.mxu0 %v674
    %2878 = vmatprep.subr.bf16.mxu0 0
    %2879 = vmatpush2.bf16.msra.mxu0 0
    %2880 = vmatprep.subr.bf16.mxu0 0
    %2881 = vmatpush2.bf16.msra.mxu0 0
    %2882 = vmatprep.subr.bf16.mxu0 0
    %2883 = vmatpush2.bf16.msra.mxu0 0
    %2884 = vmatprep.subr.bf16.mxu0 0
    %2885 = vmatpush2.bf16.msra.mxu0 0
    %2886 = vmatprep.subr.bf16.mxu0 0
    %2887 = vmatpush2.bf16.msra.mxu0 0
    %2888 = vmatprep.subr.bf16.mxu0 0
    %2889 = vmatpush2.bf16.msra.mxu0 0
    %2890 = vmatprep.subr.bf16.mxu0 0
    %2891 = vmatpush2.bf16.msra.mxu0 0
    %2892 = vmatprep.subr.bf16.mxu0 0
    %2893 = vmatpush2.bf16.msra.mxu0 0
    %2894 = vmatprep.mubr.bf16.mxu0 0
    %2895 = vmatmul.mubr.bf16.gmra.mxu0 %v2697
    %v2896 = vpop.f32.mrf.mxu0
    %v2897 = vadd.f32 0.0, %v2896
    %v2898 = vpop.f32.mrf.mxu0
    %v2899 = vadd.f32 0.0, %v2898
    %v2900 = vpop.f32.mrf.mxu0
    %v2901 = vadd.f32 0.0, %v2900
    %v2902 = vpop.f32.mrf.mxu0
    %v2903 = vadd.f32 0.0, %v2902
    %2904 = vdwg.mxu0
    %2905 = vmatprep.subr.bf16.mxu0 %v705
    %2906 = vmatpush1.bf16.msra.mxu0 %v704
    %2907 = vmatprep.subr.bf16.mxu0 %v701
    %2908 = vmatpush1.bf16.msra.mxu0 %v700
    %2909 = vmatprep.subr.bf16.mxu0 %v697
    %2910 = vmatpush1.bf16.msra.mxu0 %v696
    %2911 = vmatprep.subr.bf16.mxu0 %v693
    %2912 = vmatpush1.bf16.msra.mxu0 %v692
    %2913 = vmatprep.subr.bf16.mxu0 %v689
    %2914 = vmatpush1.bf16.msra.mxu0 %v688
    %2915 = vmatprep.subr.bf16.mxu0 %v685
    %2916 = vmatpush1.bf16.msra.mxu0 %v684
    %2917 = vmatprep.subr.bf16.mxu0 %v681
    %2918 = vmatpush1.bf16.msra.mxu0 %v680
    %2919 = vmatprep.subr.bf16.mxu0 %v677
    %2920 = vmatpush1.bf16.msra.mxu0 %v676
    %2921 = vmatprep.subr.bf16.mxu0 0
    %2922 = vmatpush2.bf16.msra.mxu0 0
    %2923 = vmatprep.subr.bf16.mxu0 0
    %2924 = vmatpush2.bf16.msra.mxu0 0
    %2925 = vmatprep.subr.bf16.mxu0 0
    %2926 = vmatpush2.bf16.msra.mxu0 0
    %2927 = vmatprep.subr.bf16.mxu0 0
    %2928 = vmatpush2.bf16.msra.mxu0 0
    %2929 = vmatprep.subr.bf16.mxu0 0
    %2930 = vmatpush2.bf16.msra.mxu0 0
    %2931 = vmatprep.subr.bf16.mxu0 0
    %2932 = vmatpush2.bf16.msra.mxu0 0
    %2933 = vmatprep.subr.bf16.mxu0 0
    %2934 = vmatpush2.bf16.msra.mxu0 0
    %2935 = vmatprep.subr.bf16.mxu0 0
    %2936 = vmatpush2.bf16.msra.mxu0 0
    %2937 = vmatprep.mubr.bf16.mxu0 0
    %2938 = vmatmul.mubr.bf16.gmra.mxu0 %v2697
    %v2939 = vpop.f32.mrf.mxu0
    %v2940 = vadd.f32 0.0, %v2939
    %v2941 = vpop.f32.mrf.mxu0
    %v2942 = vadd.f32 0.0, %v2941
    %v2943 = vpop.f32.mrf.mxu0
    %v2944 = vadd.f32 0.0, %v2943
    %v2945 = vpop.f32.mrf.mxu0
    %v2946 = vadd.f32 0.0, %v2945
    %2947 = vdwg.mxu0
    %2948 = vmatprep.subr.bf16.mxu0 %v949
    %2949 = vmatpush1.bf16.msra.mxu0 %v948
    %2950 = vmatprep.subr.bf16.mxu0 %v945
    %2951 = vmatpush1.bf16.msra.mxu0 %v944
    %2952 = vmatprep.subr.bf16.mxu0 %v941
    %2953 = vmatpush1.bf16.msra.mxu0 %v940
    %2954 = vmatprep.subr.bf16.mxu0 %v937
    %2955 = vmatpush1.bf16.msra.mxu0 %v936
    %2956 = vmatprep.subr.bf16.mxu0 %v933
    %2957 = vmatpush1.bf16.msra.mxu0 %v932
    %2958 = vmatprep.subr.bf16.mxu0 %v929
    %2959 = vmatpush1.bf16.msra.mxu0 %v928
    %2960 = vmatprep.subr.bf16.mxu0 %v925
    %2961 = vmatpush1.bf16.msra.mxu0 %v924
    %2962 = vmatprep.subr.bf16.mxu0 %v921
    %2963 = vmatpush1.bf16.msra.mxu0 %v920
    %2964 = vmatprep.subr.bf16.mxu0 0
    %2965 = vmatpush2.bf16.msra.mxu0 0
    %2966 = vmatprep.subr.bf16.mxu0 0
    %2967 = vmatpush2.bf16.msra.mxu0 0
    %2968 = vmatprep.subr.bf16.mxu0 0
    %2969 = vmatpush2.bf16.msra.mxu0 0
    %2970 = vmatprep.subr.bf16.mxu0 0
    %2971 = vmatpush2.bf16.msra.mxu0 0
    %2972 = vmatprep.subr.bf16.mxu0 0
    %2973 = vmatpush2.bf16.msra.mxu0 0
    %2974 = vmatprep.subr.bf16.mxu0 0
    %2975 = vmatpush2.bf16.msra.mxu0 0
    %2976 = vmatprep.subr.bf16.mxu0 0
    %2977 = vmatpush2.bf16.msra.mxu0 0
    %2978 = vmatprep.subr.bf16.mxu0 0
    %2979 = vmatpush2.bf16.msra.mxu0 0
    %2980 = vmatprep.mubr.bf16.mxu0 0
    %2981 = vmatmul.mubr.bf16.gmra.mxu0 %v2861
    %v2982 = vpop.f32.mrf.mxu0
    %v2983 = vadd.f32 %v2897, %v2982
    %v2984 = vpop.f32.mrf.mxu0
    %v2985 = vadd.f32 %v2899, %v2984
    %v2986 = vpop.f32.mrf.mxu0
    %v2987 = vadd.f32 %v2901, %v2986
    %v2988 = vpop.f32.mrf.mxu0
    %v2989 = vadd.f32 %v2903, %v2988
    %2990 = vdwg.mxu0
    %2991 = vmatprep.subr.bf16.mxu0 %v951
    %2992 = vmatpush1.bf16.msra.mxu0 %v950
    %2993 = vmatprep.subr.bf16.mxu0 %v947
    %2994 = vmatpush1.bf16.msra.mxu0 %v946
    %2995 = vmatprep.subr.bf16.mxu0 %v943
    %2996 = vmatpush1.bf16.msra.mxu0 %v942
    %2997 = vmatprep.subr.bf16.mxu0 %v939
    %2998 = vmatpush1.bf16.msra.mxu0 %v938
    %2999 = vmatprep.subr.bf16.mxu0 %v935
    %3000 = vmatpush1.bf16.msra.mxu0 %v934
    %3001 = vmatprep.subr.bf16.mxu0 %v931
    %3002 = vmatpush1.bf16.msra.mxu0 %v930
    %3003 = vmatprep.subr.bf16.mxu0 %v927
    %3004 = vmatpush1.bf16.msra.mxu0 %v926
    %3005 = vmatprep.subr.bf16.mxu0 %v923
    %3006 = vmatpush1.bf16.msra.mxu0 %v922
    %3007 = vmatprep.subr.bf16.mxu0 0
    %3008 = vmatpush2.bf16.msra.mxu0 0
    %3009 = vmatprep.subr.bf16.mxu0 0
    %3010 = vmatpush2.bf16.msra.mxu0 0
    %3011 = vmatprep.subr.bf16.mxu0 0
    %3012 = vmatpush2.bf16.msra.mxu0 0
    %3013 = vmatprep.subr.bf16.mxu0 0
    %3014 = vmatpush2.bf16.msra.mxu0 0
    %3015 = vmatprep.subr.bf16.mxu0 0
    %3016 = vmatpush2.bf16.msra.mxu0 0
    %3017 = vmatprep.subr.bf16.mxu0 0
    %3018 = vmatpush2.bf16.msra.mxu0 0
    %3019 = vmatprep.subr.bf16.mxu0 0
    %3020 = vmatpush2.bf16.msra.mxu0 0
    %3021 = vmatprep.subr.bf16.mxu0 0
    %3022 = vmatpush2.bf16.msra.mxu0 0
    %3023 = vmatprep.mubr.bf16.mxu0 0
    %3024 = vmatmul.mubr.bf16.gmra.mxu0 %v2861
    %v3025 = vpop.f32.mrf.mxu0
    %v3026 = vadd.f32 %v2940, %v3025
    %v3027 = vpop.f32.mrf.mxu0
    %v3028 = vadd.f32 %v2942, %v3027
    %v3029 = vpop.f32.mrf.mxu0
    %v3030 = vadd.f32 %v2944, %v3029
    %v3031 = vpop.f32.mrf.mxu0
    %v3032 = vadd.f32 %v2946, %v3031
    %3033 = vdwg.mxu0
    %v3034 = vadd.f32 %v2983, %v235
    %v3035 = vadd.f32 %v2985, %v239
    %v3036 = vadd.f32 %v3026, %v243
    %v3037 = vadd.f32 %v3028, %v247
    %v3038 = vadd.f32 %v2987, %v235
    %v3039 = vadd.f32 %v2989, %v239
    %v3040 = vadd.f32 %v3030, %v243
    %v3041 = vadd.f32 %v3032, %v247
    %v3042 = vxor.u32 %v3034, 2147483648
    %v3043 = vxor.u32 %v3035, 2147483648
    %v3044 = vxor.u32 %v3038, 2147483648
    %v3045 = vxor.u32 %v3039, 2147483648
    %v3046 = vmul.f32 %v3042, 1.442695
    %v3047 = vpow.pop %v3046
    %v3048 = vmul.f32 %v3043, 1.442695
    %v3049 = vpow.pop %v3048
    %v3050 = vmul.f32 %v3044, 1.442695
    %v3051 = vpow.pop %v3050
    %v3052 = vmul.f32 %v3045, 1.442695
    %v3053 = vpow.pop %v3052
    %v3054 = vadd.f32 %v3047, 1.0
    %v3055 = vadd.f32 %v3049, 1.0
    %v3056 = vadd.f32 %v3051, 1.0
    %v3057 = vadd.f32 %v3053, 1.0
    %v3058 = vrcp.pop %v3054
    %v3059 = vmul.f32 1.0, %v3058
    %v3060 = vrcp.pop %v3055
    %v3061 = vmul.f32 1.0, %v3060
    %v3062 = vrcp.pop %v3056
    %v3063 = vmul.f32 1.0, %v3062
    %v3064 = vrcp.pop %v3057
    %v3065 = vmul.f32 1.0, %v3064
    %v3066 = vtanh.pop %v3036
    %v3067 = vtanh.pop %v3040
    %v3068 = vxor.u32 %v3037, 2147483648
    %v3069 = vxor.u32 %v3041, 2147483648
    %v3070 = vmul.f32 %v3068, 1.442695
    %v3071 = vpow.pop %v3070
    %v3072 = vmul.f32 %v3069, 1.442695
    %v3073 = vpow.pop %v3072
    %v3074 = vadd.f32 %v3071, 1.0
    %v3075 = vadd.f32 %v3073, 1.0
    %v3076 = vrcp.pop %v3074
    %v3077 = vmul.f32 1.0, %v3076
    %v3078 = vrcp.pop %v3075
    %v3079 = vmul.f32 1.0, %v3078
    %v3080 = vmul.f32 %v3061, %v2691
    %v3081 = vmul.f32 %v3065, %v2692
    %v3082 = vmul.f32 %v3059, %v3066
    %v3083 = vmul.f32 %v3063, %v3067
    %v3084 = vadd.f32 %v3080, %v3082
    %v3085 = vadd.f32 %v3081, %v3083
    %v3086 = vtanh.pop %v3084
    %v3087 = vtanh.pop %v3085
    %v3088 = vmul.f32 %v3077, %v3086
    %v3089 = vmul.f32 %v3079, %v3087
    %v3090 = vpack.c.bf16 %v3089, %v3088
    %v3092 = vunpack.c.l.b16 %v3090
    %v3093 = vunpack.c.h.b16 %v3090
    %v3094 = vpack.c.b16 %v3092, %v3092
    %v3095 = vpack.c.b16 %v3093, %v3093
    %s3098 = scalar_lea.vmem [#allocation15], 40
    %3099 = vst [vmem:[%s3098] sm:$0xf] %v3094
    %3100 = vst [vmem:[%s3098 + $0x4] sm:$0xf] %v3095
    %s3101 = smul.u32 12, 4
    %s3102 = smul.addr %s3101, 8
    %s3103 = scalar_lea.vmem [#allocation4], %s3102
    %v3104 = vld [vmem:[%s3103] sm:$0xff]
    %v3105 = vld [vmem:[%s3103 + $0x8] sm:$0xff]
    %v3106 = vld [vmem:[%s3103 + $0x10] sm:$0xff]
    %v3107 = vld [vmem:[%s3103 + $0x18] sm:$0xff]
    %v3108 = vld [vmem:[%s3103 + $0x20] sm:$0xff]
    %v3109 = vld [vmem:[%s3103 + $0x28] sm:$0xff]
    %v3110 = vld [vmem:[%s3103 + $0x30] sm:$0xff]
    %v3111 = vld [vmem:[%s3103 + $0x38] sm:$0xff]
    %3112 = vmatprep.subr.bf16.mxu0 %v399
    %3113 = vmatpush1.bf16.msra.mxu0 %v398
    %3114 = vmatprep.subr.bf16.mxu0 %v395
    %3115 = vmatpush1.bf16.msra.mxu0 %v394
    %3116 = vmatprep.subr.bf16.mxu0 %v391
    %3117 = vmatpush1.bf16.msra.mxu0 %v390
    %3118 = vmatprep.subr.bf16.mxu0 %v387
    %3119 = vmatpush1.bf16.msra.mxu0 %v386
    %3120 = vmatprep.subr.bf16.mxu0 %v383
    %3121 = vmatpush1.bf16.msra.mxu0 %v382
    %3122 = vmatprep.subr.bf16.mxu0 %v379
    %3123 = vmatpush1.bf16.msra.mxu0 %v378
    %3124 = vmatprep.subr.bf16.mxu0 %v375
    %3125 = vmatpush1.bf16.msra.mxu0 %v374
    %3126 = vmatprep.subr.bf16.mxu0 %v371
    %3127 = vmatpush1.bf16.msra.mxu0 %v370
    %3128 = vmatprep.subr.bf16.mxu0 0
    %3129 = vmatpush2.bf16.msra.mxu0 0
    %3130 = vmatprep.subr.bf16.mxu0 0
    %3131 = vmatpush2.bf16.msra.mxu0 0
    %3132 = vmatprep.subr.bf16.mxu0 0
    %3133 = vmatpush2.bf16.msra.mxu0 0
    %3134 = vmatprep.subr.bf16.mxu0 0
    %3135 = vmatpush2.bf16.msra.mxu0 0
    %3136 = vmatprep.subr.bf16.mxu0 0
    %3137 = vmatpush2.bf16.msra.mxu0 0
    %3138 = vmatprep.subr.bf16.mxu0 0
    %3139 = vmatpush2.bf16.msra.mxu0 0
    %3140 = vmatprep.subr.bf16.mxu0 0
    %3141 = vmatpush2.bf16.msra.mxu0 0
    %3142 = vmatprep.subr.bf16.mxu0 0
    %3143 = vmatpush2.bf16.msra.mxu0 0
    %3144 = vmatprep.mubr.bf16.mxu0 0
    %3145 = vmatmul.mubr.bf16.gmra.mxu0 %v2861
    %v3146 = vpop.f32.mrf.mxu0
    %v3147 = vadd.f32 0.0, %v3146
    %v3148 = vpop.f32.mrf.mxu0
    %v3149 = vadd.f32 0.0, %v3148
    %v3150 = vpop.f32.mrf.mxu0
    %v3151 = vadd.f32 0.0, %v3150
    %v3152 = vpop.f32.mrf.mxu0
    %v3153 = vadd.f32 0.0, %v3152
    %3154 = vdwg.mxu0
    %3155 = vmatprep.subr.bf16.mxu0 %v401
    %3156 = vmatpush1.bf16.msra.mxu0 %v400
    %3157 = vmatprep.subr.bf16.mxu0 %v397
    %3158 = vmatpush1.bf16.msra.mxu0 %v396
    %3159 = vmatprep.subr.bf16.mxu0 %v393
    %3160 = vmatpush1.bf16.msra.mxu0 %v392
    %3161 = vmatprep.subr.bf16.mxu0 %v389
    %3162 = vmatpush1.bf16.msra.mxu0 %v388
    %3163 = vmatprep.subr.bf16.mxu0 %v385
    %3164 = vmatpush1.bf16.msra.mxu0 %v384
    %3165 = vmatprep.subr.bf16.mxu0 %v381
    %3166 = vmatpush1.bf16.msra.mxu0 %v380
    %3167 = vmatprep.subr.bf16.mxu0 %v377
    %3168 = vmatpush1.bf16.msra.mxu0 %v376
    %3169 = vmatprep.subr.bf16.mxu0 %v373
    %3170 = vmatpush1.bf16.msra.mxu0 %v372
    %3171 = vmatprep.subr.bf16.mxu0 0
    %3172 = vmatpush2.bf16.msra.mxu0 0
    %3173 = vmatprep.subr.bf16.mxu0 0
    %3174 = vmatpush2.bf16.msra.mxu0 0
    %3175 = vmatprep.subr.bf16.mxu0 0
    %3176 = vmatpush2.bf16.msra.mxu0 0
    %3177 = vmatprep.subr.bf16.mxu0 0
    %3178 = vmatpush2.bf16.msra.mxu0 0
    %3179 = vmatprep.subr.bf16.mxu0 0
    %3180 = vmatpush2.bf16.msra.mxu0 0
    %3181 = vmatprep.subr.bf16.mxu0 0
    %3182 = vmatpush2.bf16.msra.mxu0 0
    %3183 = vmatprep.subr.bf16.mxu0 0
    %3184 = vmatpush2.bf16.msra.mxu0 0
    %3185 = vmatprep.subr.bf16.mxu0 0
    %3186 = vmatpush2.bf16.msra.mxu0 0
    %3187 = vmatprep.mubr.bf16.mxu0 0
    %3188 = vmatmul.mubr.bf16.gmra.mxu0 %v2861
    %v3189 = vpop.f32.mrf.mxu0
    %v3190 = vadd.f32 0.0, %v3189
    %v3191 = vpop.f32.mrf.mxu0
    %v3192 = vadd.f32 0.0, %v3191
    %v3193 = vpop.f32.mrf.mxu0
    %v3194 = vadd.f32 0.0, %v3193
    %v3195 = vpop.f32.mrf.mxu0
    %v3196 = vadd.f32 0.0, %v3195
    %3197 = vdwg.mxu0
    %v3198 = vadd.f32 %v3104, %v3147
    %v3199 = vadd.f32 %v3105, %v3149
    %v3200 = vadd.f32 %v3106, %v3190
    %v3201 = vadd.f32 %v3107, %v3192
    %v3202 = vadd.f32 %v3108, %v3151
    %v3203 = vadd.f32 %v3109, %v3153
    %v3204 = vadd.f32 %v3110, %v3194
    %v3205 = vadd.f32 %v3111, %v3196
    %v3206 = vxor.u32 %v3198, 2147483648
    %v3207 = vxor.u32 %v3199, 2147483648
    %v3208 = vxor.u32 %v3202, 2147483648
    %v3209 = vxor.u32 %v3203, 2147483648
    %v3210 = vmul.f32 %v3206, 1.442695
    %v3211 = vpow.pop %v3210
    %v3212 = vmul.f32 %v3207, 1.442695
    %v3213 = vpow.pop %v3212
    %v3214 = vmul.f32 %v3208, 1.442695
    %v3215 = vpow.pop %v3214
    %v3216 = vmul.f32 %v3209, 1.442695
    %v3217 = vpow.pop %v3216
    %v3218 = vadd.f32 %v3211, 1.0
    %v3219 = vadd.f32 %v3213, 1.0
    %v3220 = vadd.f32 %v3215, 1.0
    %v3221 = vadd.f32 %v3217, 1.0
    %v3222 = vrcp.pop %v3218
    %v3223 = vmul.f32 1.0, %v3222
    %v3224 = vrcp.pop %v3219
    %v3225 = vmul.f32 1.0, %v3224
    %v3226 = vrcp.pop %v3220
    %v3227 = vmul.f32 1.0, %v3226
    %v3228 = vrcp.pop %v3221
    %v3229 = vmul.f32 1.0, %v3228
    %v3230 = vtanh.pop %v3200
    %v3231 = vtanh.pop %v3204
    %v3232 = vxor.u32 %v3201, 2147483648
    %v3233 = vxor.u32 %v3205, 2147483648
    %v3234 = vmul.f32 %v3232, 1.442695
    %v3235 = vpow.pop %v3234
    %v3236 = vmul.f32 %v3233, 1.442695
    %v3237 = vpow.pop %v3236
    %v3238 = vadd.f32 %v3235, 1.0
    %v3239 = vadd.f32 %v3237, 1.0
    %v3240 = vrcp.pop %v3238
    %v3241 = vmul.f32 1.0, %v3240
    %v3242 = vrcp.pop %v3239
    %v3243 = vmul.f32 1.0, %v3242
    %v3244 = vmul.f32 %v3225, %v2855
    %v3245 = vmul.f32 %v3229, %v2856
    %v3246 = vmul.f32 %v3223, %v3230
    %v3247 = vmul.f32 %v3227, %v3231
    %v3248 = vadd.f32 %v3244, %v3246
    %v3249 = vadd.f32 %v3245, %v3247
    %v3250 = vtanh.pop %v3248
    %v3251 = vtanh.pop %v3249
    %v3252 = vmul.f32 %v3241, %v3250
    %v3253 = vmul.f32 %v3243, %v3251
    %v3254 = vpack.c.bf16 %v3253, %v3252
    %3255 = vmatprep.subr.bf16.mxu0 %v703
    %3256 = vmatpush1.bf16.msra.mxu0 %v702
    %3257 = vmatprep.subr.bf16.mxu0 %v699
    %3258 = vmatpush1.bf16.msra.mxu0 %v698
    %3259 = vmatprep.subr.bf16.mxu0 %v695
    %3260 = vmatpush1.bf16.msra.mxu0 %v694
    %3261 = vmatprep.subr.bf16.mxu0 %v691
    %3262 = vmatpush1.bf16.msra.mxu0 %v690
    %3263 = vmatprep.subr.bf16.mxu0 %v687
    %3264 = vmatpush1.bf16.msra.mxu0 %v686
    %3265 = vmatprep.subr.bf16.mxu0 %v683
    %3266 = vmatpush1.bf16.msra.mxu0 %v682
    %3267 = vmatprep.subr.bf16.mxu0 %v679
    %3268 = vmatpush1.bf16.msra.mxu0 %v678
    %3269 = vmatprep.subr.bf16.mxu0 %v675
    %3270 = vmatpush1.bf16.msra.mxu0 %v674
    %3271 = vmatprep.subr.bf16.mxu0 0
    %3272 = vmatpush2.bf16.msra.mxu0 0
    %3273 = vmatprep.subr.bf16.mxu0 0
    %3274 = vmatpush2.bf16.msra.mxu0 0
    %3275 = vmatprep.subr.bf16.mxu0 0
    %3276 = vmatpush2.bf16.msra.mxu0 0
    %3277 = vmatprep.subr.bf16.mxu0 0
    %3278 = vmatpush2.bf16.msra.mxu0 0
    %3279 = vmatprep.subr.bf16.mxu0 0
    %3280 = vmatpush2.bf16.msra.mxu0 0
    %3281 = vmatprep.subr.bf16.mxu0 0
    %3282 = vmatpush2.bf16.msra.mxu0 0
    %3283 = vmatprep.subr.bf16.mxu0 0
    %3284 = vmatpush2.bf16.msra.mxu0 0
    %3285 = vmatprep.subr.bf16.mxu0 0
    %3286 = vmatpush2.bf16.msra.mxu0 0
    %3287 = vmatprep.mubr.bf16.mxu0 0
    %3288 = vmatmul.mubr.bf16.gmra.mxu0 %v3090
    %v3289 = vpop.f32.mrf.mxu0
    %v3290 = vadd.f32 0.0, %v3289
    %v3291 = vpop.f32.mrf.mxu0
    %v3292 = vadd.f32 0.0, %v3291
    %v3293 = vpop.f32.mrf.mxu0
    %v3294 = vadd.f32 0.0, %v3293
    %v3295 = vpop.f32.mrf.mxu0
    %v3296 = vadd.f32 0.0, %v3295
    %3297 = vdwg.mxu0
    %3298 = vmatprep.subr.bf16.mxu0 %v705
    %3299 = vmatpush1.bf16.msra.mxu0 %v704
    %3300 = vmatprep.subr.bf16.mxu0 %v701
    %3301 = vmatpush1.bf16.msra.mxu0 %v700
    %3302 = vmatprep.subr.bf16.mxu0 %v697
    %3303 = vmatpush1.bf16.msra.mxu0 %v696
    %3304 = vmatprep.subr.bf16.mxu0 %v693
    %3305 = vmatpush1.bf16.msra.mxu0 %v692
    %3306 = vmatprep.subr.bf16.mxu0 %v689
    %3307 = vmatpush1.bf16.msra.mxu0 %v688
    %3308 = vmatprep.subr.bf16.mxu0 %v685
    %3309 = vmatpush1.bf16.msra.mxu0 %v684
    %3310 = vmatprep.subr.bf16.mxu0 %v681
    %3311 = vmatpush1.bf16.msra.mxu0 %v680
    %3312 = vmatprep.subr.bf16.mxu0 %v677
    %3313 = vmatpush1.bf16.msra.mxu0 %v676
    %3314 = vmatprep.subr.bf16.mxu0 0
    %3315 = vmatpush2.bf16.msra.mxu0 0
    %3316 = vmatprep.subr.bf16.mxu0 0
    %3317 = vmatpush2.bf16.msra.mxu0 0
    %3318 = vmatprep.subr.bf16.mxu0 0
    %3319 = vmatpush2.bf16.msra.mxu0 0
    %3320 = vmatprep.subr.bf16.mxu0 0
    %3321 = vmatpush2.bf16.msra.mxu0 0
    %3322 = vmatprep.subr.bf16.mxu0 0
    %3323 = vmatpush2.bf16.msra.mxu0 0
    %3324 = vmatprep.subr.bf16.mxu0 0
    %3325 = vmatpush2.bf16.msra.mxu0 0
    %3326 = vmatprep.subr.bf16.mxu0 0
    %3327 = vmatpush2.bf16.msra.mxu0 0
    %3328 = vmatprep.subr.bf16.mxu0 0
    %3329 = vmatpush2.bf16.msra.mxu0 0
    %3330 = vmatprep.mubr.bf16.mxu0 0
    %3331 = vmatmul.mubr.bf16.gmra.mxu0 %v3090
    %v3332 = vpop.f32.mrf.mxu0
    %v3333 = vadd.f32 0.0, %v3332
    %v3334 = vpop.f32.mrf.mxu0
    %v3335 = vadd.f32 0.0, %v3334
    %v3336 = vpop.f32.mrf.mxu0
    %v3337 = vadd.f32 0.0, %v3336
    %v3338 = vpop.f32.mrf.mxu0
    %v3339 = vadd.f32 0.0, %v3338
    %3340 = vdwg.mxu0
    %3341 = vmatprep.subr.bf16.mxu0 %v949
    %3342 = vmatpush1.bf16.msra.mxu0 %v948
    %3343 = vmatprep.subr.bf16.mxu0 %v945
    %3344 = vmatpush1.bf16.msra.mxu0 %v944
    %3345 = vmatprep.subr.bf16.mxu0 %v941
    %3346 = vmatpush1.bf16.msra.mxu0 %v940
    %3347 = vmatprep.subr.bf16.mxu0 %v937
    %3348 = vmatpush1.bf16.msra.mxu0 %v936
    %3349 = vmatprep.subr.bf16.mxu0 %v933
    %3350 = vmatpush1.bf16.msra.mxu0 %v932
    %3351 = vmatprep.subr.bf16.mxu0 %v929
    %3352 = vmatpush1.bf16.msra.mxu0 %v928
    %3353 = vmatprep.subr.bf16.mxu0 %v925
    %3354 = vmatpush1.bf16.msra.mxu0 %v924
    %3355 = vmatprep.subr.bf16.mxu0 %v921
    %3356 = vmatpush1.bf16.msra.mxu0 %v920
    %3357 = vmatprep.subr.bf16.mxu0 0
    %3358 = vmatpush2.bf16.msra.mxu0 0
    %3359 = vmatprep.subr.bf16.mxu0 0
    %3360 = vmatpush2.bf16.msra.mxu0 0
    %3361 = vmatprep.subr.bf16.mxu0 0
    %3362 = vmatpush2.bf16.msra.mxu0 0
    %3363 = vmatprep.subr.bf16.mxu0 0
    %3364 = vmatpush2.bf16.msra.mxu0 0
    %3365 = vmatprep.subr.bf16.mxu0 0
    %3366 = vmatpush2.bf16.msra.mxu0 0
    %3367 = vmatprep.subr.bf16.mxu0 0
    %3368 = vmatpush2.bf16.msra.mxu0 0
    %3369 = vmatprep.subr.bf16.mxu0 0
    %3370 = vmatpush2.bf16.msra.mxu0 0
    %3371 = vmatprep.subr.bf16.mxu0 0
    %3372 = vmatpush2.bf16.msra.mxu0 0
    %3373 = vmatprep.mubr.bf16.mxu0 0
    %3374 = vmatmul.mubr.bf16.gmra.mxu0 %v3254
    %v3375 = vpop.f32.mrf.mxu0
    %v3376 = vadd.f32 %v3290, %v3375
    %v3377 = vpop.f32.mrf.mxu0
    %v3378 = vadd.f32 %v3292, %v3377
    %v3379 = vpop.f32.mrf.mxu0
    %v3380 = vadd.f32 %v3294, %v3379
    %v3381 = vpop.f32.mrf.mxu0
    %v3382 = vadd.f32 %v3296, %v3381
    %3383 = vdwg.mxu0
    %3384 = vmatprep.subr.bf16.mxu0 %v951
    %3385 = vmatpush1.bf16.msra.mxu0 %v950
    %3386 = vmatprep.subr.bf16.mxu0 %v947
    %3387 = vmatpush1.bf16.msra.mxu0 %v946
    %3388 = vmatprep.subr.bf16.mxu0 %v943
    %3389 = vmatpush1.bf16.msra.mxu0 %v942
    %3390 = vmatprep.subr.bf16.mxu0 %v939
    %3391 = vmatpush1.bf16.msra.mxu0 %v938
    %3392 = vmatprep.subr.bf16.mxu0 %v935
    %3393 = vmatpush1.bf16.msra.mxu0 %v934
    %3394 = vmatprep.subr.bf16.mxu0 %v931
    %3395 = vmatpush1.bf16.msra.mxu0 %v930
    %3396 = vmatprep.subr.bf16.mxu0 %v927
    %3397 = vmatpush1.bf16.msra.mxu0 %v926
    %3398 = vmatprep.subr.bf16.mxu0 %v923
    %3399 = vmatpush1.bf16.msra.mxu0 %v922
    %3400 = vmatprep.subr.bf16.mxu0 0
    %3401 = vmatpush2.bf16.msra.mxu0 0
    %3402 = vmatprep.subr.bf16.mxu0 0
    %3403 = vmatpush2.bf16.msra.mxu0 0
    %3404 = vmatprep.subr.bf16.mxu0 0
    %3405 = vmatpush2.bf16.msra.mxu0 0
    %3406 = vmatprep.subr.bf16.mxu0 0
    %3407 = vmatpush2.bf16.msra.mxu0 0
    %3408 = vmatprep.subr.bf16.mxu0 0
    %3409 = vmatpush2.bf16.msra.mxu0 0
    %3410 = vmatprep.subr.bf16.mxu0 0
    %3411 = vmatpush2.bf16.msra.mxu0 0
    %3412 = vmatprep.subr.bf16.mxu0 0
    %3413 = vmatpush2.bf16.msra.mxu0 0
    %3414 = vmatprep.subr.bf16.mxu0 0
    %3415 = vmatpush2.bf16.msra.mxu0 0
    %3416 = vmatprep.mubr.bf16.mxu0 0
    %3417 = vmatmul.mubr.bf16.gmra.mxu0 %v3254
    %v3418 = vpop.f32.mrf.mxu0
    %v3419 = vadd.f32 %v3333, %v3418
    %v3420 = vpop.f32.mrf.mxu0
    %v3421 = vadd.f32 %v3335, %v3420
    %v3422 = vpop.f32.mrf.mxu0
    %v3423 = vadd.f32 %v3337, %v3422
    %v3424 = vpop.f32.mrf.mxu0
    %v3425 = vadd.f32 %v3339, %v3424
    %3426 = vdwg.mxu0
    %v3427 = vadd.f32 %v3376, %v235
    %v3428 = vadd.f32 %v3378, %v239
    %v3429 = vadd.f32 %v3419, %v243
    %v3430 = vadd.f32 %v3421, %v247
    %v3431 = vadd.f32 %v3380, %v235
    %v3432 = vadd.f32 %v3382, %v239
    %v3433 = vadd.f32 %v3423, %v243
    %v3434 = vadd.f32 %v3425, %v247
    %v3435 = vxor.u32 %v3427, 2147483648
    %v3436 = vxor.u32 %v3428, 2147483648
    %v3437 = vxor.u32 %v3431, 2147483648
    %v3438 = vxor.u32 %v3432, 2147483648
    %v3439 = vmul.f32 %v3435, 1.442695
    %v3440 = vpow.pop %v3439
    %v3441 = vmul.f32 %v3436, 1.442695
    %v3442 = vpow.pop %v3441
    %v3443 = vmul.f32 %v3437, 1.442695
    %v3444 = vpow.pop %v3443
    %v3445 = vmul.f32 %v3438, 1.442695
    %v3446 = vpow.pop %v3445
    %v3447 = vadd.f32 %v3440, 1.0
    %v3448 = vadd.f32 %v3442, 1.0
    %v3449 = vadd.f32 %v3444, 1.0
    %v3450 = vadd.f32 %v3446, 1.0
    %v3451 = vrcp.pop %v3447
    %v3452 = vmul.f32 1.0, %v3451
    %v3453 = vrcp.pop %v3448
    %v3454 = vmul.f32 1.0, %v3453
    %v3455 = vrcp.pop %v3449
    %v3456 = vmul.f32 1.0, %v3455
    %v3457 = vrcp.pop %v3450
    %v3458 = vmul.f32 1.0, %v3457
    %v3459 = vtanh.pop %v3429
    %v3460 = vtanh.pop %v3433
    %v3461 = vxor.u32 %v3430, 2147483648
    %v3462 = vxor.u32 %v3434, 2147483648
    %v3463 = vmul.f32 %v3461, 1.442695
    %v3464 = vpow.pop %v3463
    %v3465 = vmul.f32 %v3462, 1.442695
    %v3466 = vpow.pop %v3465
    %v3467 = vadd.f32 %v3464, 1.0
    %v3468 = vadd.f32 %v3466, 1.0
    %v3469 = vrcp.pop %v3467
    %v3470 = vmul.f32 1.0, %v3469
    %v3471 = vrcp.pop %v3468
    %v3472 = vmul.f32 1.0, %v3471
    %v3473 = vmul.f32 %v3454, %v3084
    %v3474 = vmul.f32 %v3458, %v3085
    %v3475 = vmul.f32 %v3452, %v3459
    %v3476 = vmul.f32 %v3456, %v3460
    %v3477 = vadd.f32 %v3473, %v3475
    %v3478 = vadd.f32 %v3474, %v3476
    %v3479 = vtanh.pop %v3477
    %v3480 = vtanh.pop %v3478
    %v3481 = vmul.f32 %v3470, %v3479
    %v3482 = vmul.f32 %v3472, %v3480
    %v3483 = vpack.c.bf16 %v3482, %v3481
    %v3485 = vunpack.c.l.b16 %v3483
    %v3486 = vunpack.c.h.b16 %v3483
    %v3487 = vpack.c.b16 %v3485, %v3485
    %v3488 = vpack.c.b16 %v3486, %v3486
    %s3491 = scalar_lea.vmem [#allocation15], 48
    %3492 = vst [vmem:[%s3491] sm:$0xf] %v3487
    %3493 = vst [vmem:[%s3491 + $0x4] sm:$0xf] %v3488
    %s3494 = smul.u32 14, 4
    %s3495 = smul.addr %s3494, 8
    %s3496 = scalar_lea.vmem [#allocation4], %s3495
    %v3497 = vld [vmem:[%s3496] sm:$0xff]
    %v3498 = vld [vmem:[%s3496 + $0x8] sm:$0xff]
    %v3499 = vld [vmem:[%s3496 + $0x10] sm:$0xff]
    %v3500 = vld [vmem:[%s3496 + $0x18] sm:$0xff]
    %v3501 = vld [vmem:[%s3496 + $0x20] sm:$0xff]
    %v3502 = vld [vmem:[%s3496 + $0x28] sm:$0xff]
    %v3503 = vld [vmem:[%s3496 + $0x30] sm:$0xff]
    %v3504 = vld [vmem:[%s3496 + $0x38] sm:$0xff]
    %3505 = vmatprep.subr.bf16.mxu0 %v399
    %3506 = vmatpush1.bf16.msra.mxu0 %v398
    %3507 = vmatprep.subr.bf16.mxu0 %v395
    %3508 = vmatpush1.bf16.msra.mxu0 %v394
    %3509 = vmatprep.subr.bf16.mxu0 %v391
    %3510 = vmatpush1.bf16.msra.mxu0 %v390
    %3511 = vmatprep.subr.bf16.mxu0 %v387
    %3512 = vmatpush1.bf16.msra.mxu0 %v386
    %3513 = vmatprep.subr.bf16.mxu0 %v383
    %3514 = vmatpush1.bf16.msra.mxu0 %v382
    %3515 = vmatprep.subr.bf16.mxu0 %v379
    %3516 = vmatpush1.bf16.msra.mxu0 %v378
    %3517 = vmatprep.subr.bf16.mxu0 %v375
    %3518 = vmatpush1.bf16.msra.mxu0 %v374
    %3519 = vmatprep.subr.bf16.mxu0 %v371
    %3520 = vmatpush1.bf16.msra.mxu0 %v370
    %3521 = vmatprep.subr.bf16.mxu0 0
    %3522 = vmatpush2.bf16.msra.mxu0 0
    %3523 = vmatprep.subr.bf16.mxu0 0
    %3524 = vmatpush2.bf16.msra.mxu0 0
    %3525 = vmatprep.subr.bf16.mxu0 0
    %3526 = vmatpush2.bf16.msra.mxu0 0
    %3527 = vmatprep.subr.bf16.mxu0 0
    %3528 = vmatpush2.bf16.msra.mxu0 0
    %3529 = vmatprep.subr.bf16.mxu0 0
    %3530 = vmatpush2.bf16.msra.mxu0 0
    %3531 = vmatprep.subr.bf16.mxu0 0
    %3532 = vmatpush2.bf16.msra.mxu0 0
    %3533 = vmatprep.subr.bf16.mxu0 0
    %3534 = vmatpush2.bf16.msra.mxu0 0
    %3535 = vmatprep.subr.bf16.mxu0 0
    %3536 = vmatpush2.bf16.msra.mxu0 0
    %3537 = vmatprep.mubr.bf16.mxu0 0
    %3538 = vmatmul.mubr.bf16.gmra.mxu0 %v3254
    %v3539 = vpop.f32.mrf.mxu0
    %v3540 = vadd.f32 0.0, %v3539
    %v3541 = vpop.f32.mrf.mxu0
    %v3542 = vadd.f32 0.0, %v3541
    %v3543 = vpop.f32.mrf.mxu0
    %v3544 = vadd.f32 0.0, %v3543
    %v3545 = vpop.f32.mrf.mxu0
    %v3546 = vadd.f32 0.0, %v3545
    %3547 = vdwg.mxu0
    %3548 = vmatprep.subr.bf16.mxu0 %v401
    %3549 = vmatpush1.bf16.msra.mxu0 %v400
    %3550 = vmatprep.subr.bf16.mxu0 %v397
    %3551 = vmatpush1.bf16.msra.mxu0 %v396
    %3552 = vmatprep.subr.bf16.mxu0 %v393
    %3553 = vmatpush1.bf16.msra.mxu0 %v392
    %3554 = vmatprep.subr.bf16.mxu0 %v389
    %3555 = vmatpush1.bf16.msra.mxu0 %v388
    %3556 = vmatprep.subr.bf16.mxu0 %v385
    %3557 = vmatpush1.bf16.msra.mxu0 %v384
    %3558 = vmatprep.subr.bf16.mxu0 %v381
    %3559 = vmatpush1.bf16.msra.mxu0 %v380
    %3560 = vmatprep.subr.bf16.mxu0 %v377
    %3561 = vmatpush1.bf16.msra.mxu0 %v376
    %3562 = vmatprep.subr.bf16.mxu0 %v373
    %3563 = vmatpush1.bf16.msra.mxu0 %v372
    %3564 = vmatprep.subr.bf16.mxu0 0
    %3565 = vmatpush2.bf16.msra.mxu0 0
    %3566 = vmatprep.subr.bf16.mxu0 0
    %3567 = vmatpush2.bf16.msra.mxu0 0
    %3568 = vmatprep.subr.bf16.mxu0 0
    %3569 = vmatpush2.bf16.msra.mxu0 0
    %3570 = vmatprep.subr.bf16.mxu0 0
    %3571 = vmatpush2.bf16.msra.mxu0 0
    %3572 = vmatprep.subr.bf16.mxu0 0
    %3573 = vmatpush2.bf16.msra.mxu0 0
    %3574 = vmatprep.subr.bf16.mxu0 0
    %3575 = vmatpush2.bf16.msra.mxu0 0
    %3576 = vmatprep.subr.bf16.mxu0 0
    %3577 = vmatpush2.bf16.msra.mxu0 0
    %3578 = vmatprep.subr.bf16.mxu0 0
    %3579 = vmatpush2.bf16.msra.mxu0 0
    %3580 = vmatprep.mubr.bf16.mxu0 0
    %3581 = vmatmul.mubr.bf16.gmra.mxu0 %v3254
    %v3582 = vpop.f32.mrf.mxu0
    %v3583 = vadd.f32 0.0, %v3582
    %v3584 = vpop.f32.mrf.mxu0
    %v3585 = vadd.f32 0.0, %v3584
    %v3586 = vpop.f32.mrf.mxu0
    %v3587 = vadd.f32 0.0, %v3586
    %v3588 = vpop.f32.mrf.mxu0
    %v3589 = vadd.f32 0.0, %v3588
    %3590 = vdwg.mxu0
    %v3591 = vadd.f32 %v3497, %v3540
    %v3592 = vadd.f32 %v3498, %v3542
    %v3593 = vadd.f32 %v3499, %v3583
    %v3594 = vadd.f32 %v3500, %v3585
    %v3595 = vadd.f32 %v3501, %v3544
    %v3596 = vadd.f32 %v3502, %v3546
    %v3597 = vadd.f32 %v3503, %v3587
    %v3598 = vadd.f32 %v3504, %v3589
    %v3599 = vxor.u32 %v3591, 2147483648
    %v3600 = vxor.u32 %v3592, 2147483648
    %v3601 = vxor.u32 %v3595, 2147483648
    %v3602 = vxor.u32 %v3596, 2147483648
    %v3603 = vmul.f32 %v3599, 1.442695
    %v3604 = vpow.pop %v3603
    %v3605 = vmul.f32 %v3600, 1.442695
    %v3606 = vpow.pop %v3605
    %v3607 = vmul.f32 %v3601, 1.442695
    %v3608 = vpow.pop %v3607
    %v3609 = vmul.f32 %v3602, 1.442695
    %v3610 = vpow.pop %v3609
    %v3611 = vadd.f32 %v3604, 1.0
    %v3612 = vadd.f32 %v3606, 1.0
    %v3613 = vadd.f32 %v3608, 1.0
    %v3614 = vadd.f32 %v3610, 1.0
    %v3615 = vrcp.pop %v3611
    %v3616 = vmul.f32 1.0, %v3615
    %v3617 = vrcp.pop %v3612
    %v3618 = vmul.f32 1.0, %v3617
    %v3619 = vrcp.pop %v3613
    %v3620 = vmul.f32 1.0, %v3619
    %v3621 = vrcp.pop %v3614
    %v3622 = vmul.f32 1.0, %v3621
    %v3623 = vtanh.pop %v3593
    %v3624 = vtanh.pop %v3597
    %v3625 = vxor.u32 %v3594, 2147483648
    %v3626 = vxor.u32 %v3598, 2147483648
    %v3627 = vmul.f32 %v3625, 1.442695
    %v3628 = vpow.pop %v3627
    %v3629 = vmul.f32 %v3626, 1.442695
    %v3630 = vpow.pop %v3629
    %v3631 = vadd.f32 %v3628, 1.0
    %v3632 = vadd.f32 %v3630, 1.0
    %v3633 = vrcp.pop %v3631
    %v3634 = vmul.f32 1.0, %v3633
    %v3635 = vrcp.pop %v3632
    %v3636 = vmul.f32 1.0, %v3635
    %v3637 = vmul.f32 %v3618, %v3248
    %v3638 = vmul.f32 %v3622, %v3249
    %v3639 = vmul.f32 %v3616, %v3623
    %v3640 = vmul.f32 %v3620, %v3624
    %v3641 = vadd.f32 %v3637, %v3639
    %v3642 = vadd.f32 %v3638, %v3640
    %v3643 = vtanh.pop %v3641
    %v3644 = vtanh.pop %v3642
    %v3645 = vmul.f32 %v3634, %v3643
    %v3646 = vmul.f32 %v3636, %v3644
    %v3647 = vpack.c.bf16 %v3646, %v3645
    %3648 = vmatprep.subr.bf16.mxu0 %v703
    %3649 = vmatpush1.bf16.msra.mxu0 %v702
    %3650 = vmatprep.subr.bf16.mxu0 %v699
    %3651 = vmatpush1.bf16.msra.mxu0 %v698
    %3652 = vmatprep.subr.bf16.mxu0 %v695
    %3653 = vmatpush1.bf16.msra.mxu0 %v694
    %3654 = vmatprep.subr.bf16.mxu0 %v691
    %3655 = vmatpush1.bf16.msra.mxu0 %v690
    %3656 = vmatprep.subr.bf16.mxu0 %v687
    %3657 = vmatpush1.bf16.msra.mxu0 %v686
    %3658 = vmatprep.subr.bf16.mxu0 %v683
    %3659 = vmatpush1.bf16.msra.mxu0 %v682
    %3660 = vmatprep.subr.bf16.mxu0 %v679
    %3661 = vmatpush1.bf16.msra.mxu0 %v678
    %3662 = vmatprep.subr.bf16.mxu0 %v675
    %3663 = vmatpush1.bf16.msra.mxu0 %v674
    %3664 = vmatprep.subr.bf16.mxu0 0
    %3665 = vmatpush2.bf16.msra.mxu0 0
    %3666 = vmatprep.subr.bf16.mxu0 0
    %3667 = vmatpush2.bf16.msra.mxu0 0
    %3668 = vmatprep.subr.bf16.mxu0 0
    %3669 = vmatpush2.bf16.msra.mxu0 0
    %3670 = vmatprep.subr.bf16.mxu0 0
    %3671 = vmatpush2.bf16.msra.mxu0 0
    %3672 = vmatprep.subr.bf16.mxu0 0
    %3673 = vmatpush2.bf16.msra.mxu0 0
    %3674 = vmatprep.subr.bf16.mxu0 0
    %3675 = vmatpush2.bf16.msra.mxu0 0
    %3676 = vmatprep.subr.bf16.mxu0 0
    %3677 = vmatpush2.bf16.msra.mxu0 0
    %3678 = vmatprep.subr.bf16.mxu0 0
    %3679 = vmatpush2.bf16.msra.mxu0 0
    %3680 = vmatprep.mubr.bf16.mxu0 0
    %3681 = vmatmul.mubr.bf16.gmra.mxu0 %v3483
    %v3682 = vpop.f32.mrf.mxu0
    %v3683 = vadd.f32 0.0, %v3682
    %v3684 = vpop.f32.mrf.mxu0
    %v3685 = vadd.f32 0.0, %v3684
    %v3686 = vpop.f32.mrf.mxu0
    %v3687 = vadd.f32 0.0, %v3686
    %v3688 = vpop.f32.mrf.mxu0
    %v3689 = vadd.f32 0.0, %v3688
    %3690 = vdwg.mxu0
    %3691 = vmatprep.subr.bf16.mxu0 %v705
    %3692 = vmatpush1.bf16.msra.mxu0 %v704
    %3693 = vmatprep.subr.bf16.mxu0 %v701
    %3694 = vmatpush1.bf16.msra.mxu0 %v700
    %3695 = vmatprep.subr.bf16.mxu0 %v697
    %3696 = vmatpush1.bf16.msra.mxu0 %v696
    %3697 = vmatprep.subr.bf16.mxu0 %v693
    %3698 = vmatpush1.bf16.msra.mxu0 %v692
    %3699 = vmatprep.subr.bf16.mxu0 %v689
    %3700 = vmatpush1.bf16.msra.mxu0 %v688
    %3701 = vmatprep.subr.bf16.mxu0 %v685
    %3702 = vmatpush1.bf16.msra.mxu0 %v684
    %3703 = vmatprep.subr.bf16.mxu0 %v681
    %3704 = vmatpush1.bf16.msra.mxu0 %v680
    %3705 = vmatprep.subr.bf16.mxu0 %v677
    %3706 = vmatpush1.bf16.msra.mxu0 %v676
    %3707 = vmatprep.subr.bf16.mxu0 0
    %3708 = vmatpush2.bf16.msra.mxu0 0
    %3709 = vmatprep.subr.bf16.mxu0 0
    %3710 = vmatpush2.bf16.msra.mxu0 0
    %3711 = vmatprep.subr.bf16.mxu0 0
    %3712 = vmatpush2.bf16.msra.mxu0 0
    %3713 = vmatprep.subr.bf16.mxu0 0
    %3714 = vmatpush2.bf16.msra.mxu0 0
    %3715 = vmatprep.subr.bf16.mxu0 0
    %3716 = vmatpush2.bf16.msra.mxu0 0
    %3717 = vmatprep.subr.bf16.mxu0 0
    %3718 = vmatpush2.bf16.msra.mxu0 0
    %3719 = vmatprep.subr.bf16.mxu0 0
    %3720 = vmatpush2.bf16.msra.mxu0 0
    %3721 = vmatprep.subr.bf16.mxu0 0
    %3722 = vmatpush2.bf16.msra.mxu0 0
    %3723 = vmatprep.mubr.bf16.mxu0 0
    %3724 = vmatmul.mubr.bf16.gmra.mxu0 %v3483
    %v3725 = vpop.f32.mrf.mxu0
    %v3726 = vadd.f32 0.0, %v3725
    %v3727 = vpop.f32.mrf.mxu0
    %v3728 = vadd.f32 0.0, %v3727
    %v3729 = vpop.f32.mrf.mxu0
    %v3730 = vadd.f32 0.0, %v3729
    %v3731 = vpop.f32.mrf.mxu0
    %v3732 = vadd.f32 0.0, %v3731
    %3733 = vdwg.mxu0
    %3734 = vmatprep.subr.bf16.mxu0 %v949
    %3735 = vmatpush1.bf16.msra.mxu0 %v948
    %3736 = vmatprep.subr.bf16.mxu0 %v945
    %3737 = vmatpush1.bf16.msra.mxu0 %v944
    %3738 = vmatprep.subr.bf16.mxu0 %v941
    %3739 = vmatpush1.bf16.msra.mxu0 %v940
    %3740 = vmatprep.subr.bf16.mxu0 %v937
    %3741 = vmatpush1.bf16.msra.mxu0 %v936
    %3742 = vmatprep.subr.bf16.mxu0 %v933
    %3743 = vmatpush1.bf16.msra.mxu0 %v932
    %3744 = vmatprep.subr.bf16.mxu0 %v929
    %3745 = vmatpush1.bf16.msra.mxu0 %v928
    %3746 = vmatprep.subr.bf16.mxu0 %v925
    %3747 = vmatpush1.bf16.msra.mxu0 %v924
    %3748 = vmatprep.subr.bf16.mxu0 %v921
    %3749 = vmatpush1.bf16.msra.mxu0 %v920
    %3750 = vmatprep.subr.bf16.mxu0 0
    %3751 = vmatpush2.bf16.msra.mxu0 0
    %3752 = vmatprep.subr.bf16.mxu0 0
    %3753 = vmatpush2.bf16.msra.mxu0 0
    %3754 = vmatprep.subr.bf16.mxu0 0
    %3755 = vmatpush2.bf16.msra.mxu0 0
    %3756 = vmatprep.subr.bf16.mxu0 0
    %3757 = vmatpush2.bf16.msra.mxu0 0
    %3758 = vmatprep.subr.bf16.mxu0 0
    %3759 = vmatpush2.bf16.msra.mxu0 0
    %3760 = vmatprep.subr.bf16.mxu0 0
    %3761 = vmatpush2.bf16.msra.mxu0 0
    %3762 = vmatprep.subr.bf16.mxu0 0
    %3763 = vmatpush2.bf16.msra.mxu0 0
    %3764 = vmatprep.subr.bf16.mxu0 0
    %3765 = vmatpush2.bf16.msra.mxu0 0
    %3766 = vmatprep.mubr.bf16.mxu0 0
    %3767 = vmatmul.mubr.bf16.gmra.mxu0 %v3647
    %v3768 = vpop.f32.mrf.mxu0
    %v3769 = vadd.f32 %v3683, %v3768
    %v3770 = vpop.f32.mrf.mxu0
    %v3771 = vadd.f32 %v3685, %v3770
    %v3772 = vpop.f32.mrf.mxu0
    %v3773 = vadd.f32 %v3687, %v3772
    %v3774 = vpop.f32.mrf.mxu0
    %v3775 = vadd.f32 %v3689, %v3774
    %3776 = vdwg.mxu0
    %3777 = vmatprep.subr.bf16.mxu0 %v951
    %3778 = vmatpush1.bf16.msra.mxu0 %v950
    %3779 = vmatprep.subr.bf16.mxu0 %v947
    %3780 = vmatpush1.bf16.msra.mxu0 %v946
    %3781 = vmatprep.subr.bf16.mxu0 %v943
    %3782 = vmatpush1.bf16.msra.mxu0 %v942
    %3783 = vmatprep.subr.bf16.mxu0 %v939
    %3784 = vmatpush1.bf16.msra.mxu0 %v938
    %3785 = vmatprep.subr.bf16.mxu0 %v935
    %3786 = vmatpush1.bf16.msra.mxu0 %v934
    %3787 = vmatprep.subr.bf16.mxu0 %v931
    %3788 = vmatpush1.bf16.msra.mxu0 %v930
    %3789 = vmatprep.subr.bf16.mxu0 %v927
    %3790 = vmatpush1.bf16.msra.mxu0 %v926
    %3791 = vmatprep.subr.bf16.mxu0 %v923
    %3792 = vmatpush1.bf16.msra.mxu0 %v922
    %3793 = vmatprep.subr.bf16.mxu0 0
    %3794 = vmatpush2.bf16.msra.mxu0 0
    %3795 = vmatprep.subr.bf16.mxu0 0
    %3796 = vmatpush2.bf16.msra.mxu0 0
    %3797 = vmatprep.subr.bf16.mxu0 0
    %3798 = vmatpush2.bf16.msra.mxu0 0
    %3799 = vmatprep.subr.bf16.mxu0 0
    %3800 = vmatpush2.bf16.msra.mxu0 0
    %3801 = vmatprep.subr.bf16.mxu0 0
    %3802 = vmatpush2.bf16.msra.mxu0 0
    %3803 = vmatprep.subr.bf16.mxu0 0
    %3804 = vmatpush2.bf16.msra.mxu0 0
    %3805 = vmatprep.subr.bf16.mxu0 0
    %3806 = vmatpush2.bf16.msra.mxu0 0
    %3807 = vmatprep.subr.bf16.mxu0 0
    %3808 = vmatpush2.bf16.msra.mxu0 0
    %3809 = vmatprep.mubr.bf16.mxu0 0
    %3810 = vmatmul.mubr.bf16.gmra.mxu0 %v3647
    %v3811 = vpop.f32.mrf.mxu0
    %v3812 = vadd.f32 %v3726, %v3811
    %v3813 = vpop.f32.mrf.mxu0
    %v3814 = vadd.f32 %v3728, %v3813
    %v3815 = vpop.f32.mrf.mxu0
    %v3816 = vadd.f32 %v3730, %v3815
    %v3817 = vpop.f32.mrf.mxu0
    %v3818 = vadd.f32 %v3732, %v3817
    %3819 = vdwg.mxu0
    %v3820 = vadd.f32 %v3769, %v235
    %v3821 = vadd.f32 %v3771, %v239
    %v3822 = vadd.f32 %v3812, %v243
    %v3823 = vadd.f32 %v3814, %v247
    %v3824 = vadd.f32 %v3773, %v235
    %v3825 = vadd.f32 %v3775, %v239
    %v3826 = vadd.f32 %v3816, %v243
    %v3827 = vadd.f32 %v3818, %v247
    %v3828 = vxor.u32 %v3820, 2147483648
    %v3829 = vxor.u32 %v3821, 2147483648
    %v3830 = vxor.u32 %v3824, 2147483648
    %v3831 = vxor.u32 %v3825, 2147483648
    %v3832 = vmul.f32 %v3828, 1.442695
    %v3833 = vpow.pop %v3832
    %v3834 = vmul.f32 %v3829, 1.442695
    %v3835 = vpow.pop %v3834
    %v3836 = vmul.f32 %v3830, 1.442695
    %v3837 = vpow.pop %v3836
    %v3838 = vmul.f32 %v3831, 1.442695
    %v3839 = vpow.pop %v3838
    %v3840 = vadd.f32 %v3833, 1.0
    %v3841 = vadd.f32 %v3835, 1.0
    %v3842 = vadd.f32 %v3837, 1.0
    %v3843 = vadd.f32 %v3839, 1.0
    %v3844 = vrcp.pop %v3840
    %v3845 = vmul.f32 1.0, %v3844
    %v3846 = vrcp.pop %v3841
    %v3847 = vmul.f32 1.0, %v3846
    %v3848 = vrcp.pop %v3842
    %v3849 = vmul.f32 1.0, %v3848
    %v3850 = vrcp.pop %v3843
    %v3851 = vmul.f32 1.0, %v3850
    %v3852 = vtanh.pop %v3822
    %v3853 = vtanh.pop %v3826
    %v3854 = vxor.u32 %v3823, 2147483648
    %v3855 = vxor.u32 %v3827, 2147483648
    %v3856 = vmul.f32 %v3854, 1.442695
    %v3857 = vpow.pop %v3856
    %v3858 = vmul.f32 %v3855, 1.442695
    %v3859 = vpow.pop %v3858
    %v3860 = vadd.f32 %v3857, 1.0
    %v3861 = vadd.f32 %v3859, 1.0
    %v3862 = vrcp.pop %v3860
    %v3863 = vmul.f32 1.0, %v3862
    %v3864 = vrcp.pop %v3861
    %v3865 = vmul.f32 1.0, %v3864
    %v3866 = vmul.f32 %v3847, %v3477
    %v3867 = vmul.f32 %v3851, %v3478
    %v3868 = vmul.f32 %v3845, %v3852
    %v3869 = vmul.f32 %v3849, %v3853
    %v3870 = vadd.f32 %v3866, %v3868
    %v3871 = vadd.f32 %v3867, %v3869
    %v3872 = vtanh.pop %v3870
    %v3873 = vtanh.pop %v3871
    %v3874 = vmul.f32 %v3863, %v3872
    %v3875 = vmul.f32 %v3865, %v3873
    %v3876 = vpack.c.bf16 %v3875, %v3874
    %v3878 = vunpack.c.l.b16 %v3876
    %v3879 = vunpack.c.h.b16 %v3876
    %v3880 = vpack.c.b16 %v3878, %v3878
    %v3881 = vpack.c.b16 %v3879, %v3879
    %s3884 = scalar_lea.vmem [#allocation15], 56
    %3885 = vst [vmem:[%s3884] sm:$0xf] %v3880
    %3886 = vst [vmem:[%s3884 + $0x4] sm:$0xf] %v3881
    %3887 = vst [vmem:[#allocation2] sm:$0xff] %v3645
    %3888 = vst [vmem:[#allocation2 + $0x8] sm:$0xff] %v3646
    %3889 = vst [vmem:[%s256] sm:$0xff] %v3874
    %3890 = vst [vmem:[%s256 + $0x8] sm:$0xff] %v3875
    %3891 = vst [vmem:[#allocation3] sm:$0xff] %v3641
    %3892 = vst [vmem:[#allocation3 + $0x8] sm:$0xff] %v3642
    %3893 = vst [vmem:[%s259] sm:$0xff] %v3870
    %3894 = vst [vmem:[%s259 + $0x8] sm:$0xff] %v3871
    // Predicated region
    $region58: #{tpu_custom_call.1} parent=1 // pred_check
      %p3895 = pneg %p114
    $region59: #{tpu_custom_call.1} parent=1 // pred_check_branch
      %3897 = sbr.rel (%p3895) target = $region61
    $region60: #{tpu_custom_call.1} parent=1 // pred_region
      %3898 = vst [vmem:[#allocation16] sm:$0xff] %v3645
      %3899 = vst [vmem:[#allocation16 + $0x8] sm:$0xff] %v3646
      %s3900 = scalar_lea.vmem [#allocation16], 16
      %3901 = vst [vmem:[%s3900] sm:$0xff] %v3874
      %3902 = vst [vmem:[%s3900 + $0x8] sm:$0xff] %v3875
      %3903 = vst [vmem:[#allocation18] sm:$0xff] %v3641
      %3904 = vst [vmem:[#allocation18 + $0x8] sm:$0xff] %v3642
      %s3905 = scalar_lea.vmem [#allocation18], 16
      %3906 = vst [vmem:[%s3905] sm:$0xff] %v3870
      %3907 = vst [vmem:[%s3905 + $0x8] sm:$0xff] %v3871
    $region61: #{tpu_custom_call.1} parent=1 // pred_fallthru
      _
    // Predicated region
    $region62: #{tpu_custom_call.1} parent=1 // pred_check
      _
    $region63: #{tpu_custom_call.1} parent=1 // pred_check_branch
      %3909 = sbr.rel (0) target = $region65
    $region64: #{tpu_custom_call.1} parent=1 // pred_region
      %s3911 = ssub.s32 1024, 1024
      %3912 = vsyncadd [#allocation6], %s3911
      %s3913 = sshll.u32 [#allocation15], 4
      %s3914 = int_to_ptr.vmem [resolvable:$true] %s3913
      %3919 = dma.vmem_to_hbm [thread:$0]  %s3914, 1024, %s7, [#allocation6], 64, 64, 4
    $region65: #{tpu_custom_call.1} parent=1 // pred_fallthru
      _
    // Predicated region
    $region66: #{tpu_custom_call.1} parent=1 // pred_check
      _
    $region67: #{tpu_custom_call.1} parent=1 // pred_check_branch
      %3921 = sbr.rel (0) target = $region69
    $region68: #{tpu_custom_call.1} parent=1 // pred_region
      %s3923 = ssub.s32 512, 512
      %3924 = vsyncadd [#allocation17], %s3923
      %s3925 = sshll.u32 [#allocation16], 4
      %s3926 = int_to_ptr.vmem [resolvable:$true] %s3925
      %3931 = dma.vmem_to_hbm [thread:$0]  %s3926, 512, %s8, [#allocation17], 128, 128, 8
    $region69: #{tpu_custom_call.1} parent=1 // pred_fallthru
      _
    // Predicated region
    $region70: #{tpu_custom_call.1} parent=1 // pred_check
      _
    $region71: #{tpu_custom_call.1} parent=1 // pred_check_branch
      %3933 = sbr.rel (0) target = $region73
    $region72: #{tpu_custom_call.1} parent=1 // pred_region
      %s3935 = ssub.s32 512, 512
      %3936 = vsyncadd [#allocation17], %s3935
      %s3937 = sshll.u32 [#allocation18], 4
      %s3938 = int_to_ptr.vmem [resolvable:$true] %s3937
      %3943 = dma.vmem_to_hbm [thread:$0]  %s3938, 512, %s9, [#allocation17], 128, 128, 8
    $region73: #{tpu_custom_call.1} parent=1 // pred_fallthru
      _
    // Predicated region
    $region74: #{tpu_custom_call.1} parent=1 // pred_check
      _
    $region75: #{tpu_custom_call.1} parent=1 // pred_check_branch
      %3945 = sbr.rel (0) target = $region77
    $region76: #{tpu_custom_call.1} parent=1 // pred_region
      %3946 = dma.done [#allocation6], 1024
    $region77: #{tpu_custom_call.1} parent=1 // pred_fallthru
      _
    // Predicated region
    $region78: #{tpu_custom_call.1} parent=1 // pred_check
      _
    $region79: #{tpu_custom_call.1} parent=1 // pred_check_branch
      %3948 = sbr.rel (0) target = $region81
    $region80: #{tpu_custom_call.1} parent=1 // pred_region
      %3949 = dma.done [#allocation17], 512
    $region81: #{tpu_custom_call.1} parent=1 // pred_fallthru
      _
    // Predicated region
    $region82: #{tpu_custom_call.1} parent=1 // pred_check
      _
    $region83: #{tpu_custom_call.1} parent=1 // pred_check_branch
      %3951 = sbr.rel (0) target = $region85
    $region84: #{tpu_custom_call.1} parent=1 // pred_region
      %3952 = dma.done [#allocation17], 512
    $region85: #{tpu_custom_call.1} parent=1 // pred_fallthru
      _
    %3953 = vsyncpa [#allocation5], 1
    %3954 = vsyncpa [#allocation8], 1
    %3955 = vsyncpa [#allocation11], 1
    %3956 = vsyncpa [#allocation14], 1
    %3957 = vsyncpa [#allocation6], 1
    %3958 = vsyncpa [#allocation17], 1

</llo_original>
